<compile_context>
chip_gen: v7x
topology: tpu7x:2x2x1
jax: 0.10.0
libtpu: 0.0.40
codegen_flags: <defaults>
</compile_context>

<pallas_src>
import jax
import jax.numpy as jnp
from jax.experimental import pallas as pl
from jax.experimental.pallas import tpu as pltpu

IN_DIM = 512
HID_DIM = 512
OUT_DIM = 10
OUT_PAD = 128  # lane-dense padded output width (one full vreg lane tile)


def _round_up(x, m):
    return ((x + m - 1) // m) * m


def _mlp_kernel(h_ref, w1_ref, b1_ref, w2_ref, b2_ref, w3_ref, b3_ref, o_ref):
    cdt = w1_ref.dtype                                   # compute dtype (f32 or bf16)
    x = h_ref[...]                                       # (TB, 512), already in cdt
    h1 = jnp.dot(x, w1_ref[...], preferred_element_type=jnp.float32)
    h1 = jnp.maximum(h1 + b1_ref[...], 0.0)              # bias broadcast (1,N)->(TB,N)
    h2 = jnp.dot(h1.astype(cdt), w2_ref[...], preferred_element_type=jnp.float32)
    h2 = jnp.maximum(h2 + b2_ref[...], 0.0)
    c = jnp.dot(h2.astype(cdt), w3_ref[...], preferred_element_type=jnp.float32)
    o_ref[...] = (c + b3_ref[...]).astype(o_ref.dtype)   # (TB, 128) lane-dense store


def label_predictor(h, params, *, tile_b=None, weight_dtype=jnp.bfloat16):
    """Forward pass of vgg16_512_2_LabelPredictor.

    h: (B, 512) float32
    params: dict with w1 (512,512), b1 (1,512), w2 (512,512), b2 (1,512),
            w3 (512,10), b3 (1,10)   (all float32; stored (in, out) so y = x@W + b)
    returns: (B, 10) float32
    """
    B, D = h.shape
    assert D == IN_DIM

    # --- batch tiling: cap at 256 rows, multiple of 8 (sublane). ---
    if tile_b is None:
        tile_b = min(_round_up(B, 8), 256)
    tile_b = max(8, _round_up(tile_b, 8))
    B_pad = _round_up(B, tile_b)
    grid = (B_pad // tile_b,)

    h_pad = h if B_pad == B else jnp.pad(h, ((0, B_pad - B), (0, 0)))
    h_pad = h_pad.astype(weight_dtype)     # halve input HBM bytes on the bf16 path

    # --- weights in compute dtype; biases stay f32; layer 3 padded to 128 lanes. ---
    w1 = params["w1"].astype(weight_dtype)
    w2 = params["w2"].astype(weight_dtype)
    w3 = jnp.zeros((HID_DIM, OUT_PAD), weight_dtype).at[:, :OUT_DIM].set(
        params["w3"].astype(weight_dtype))
    b1 = params["b1"].astype(jnp.float32)
    b2 = params["b2"].astype(jnp.float32)
    b3 = jnp.zeros((1, OUT_PAD), jnp.float32).at[:, :OUT_DIM].set(
        params["b3"].astype(jnp.float32))

    w_itemsize = jnp.dtype(weight_dtype).itemsize
    weight_bytes = (w1.size + w2.size + w3.size) * w_itemsize \
                   + (b1.size + b2.size + b3.size) * 4
    cost = pl.CostEstimate(
        flops=2 * B_pad * (IN_DIM * HID_DIM + HID_DIM * HID_DIM + HID_DIM * OUT_PAD),
        transcendentals=0,
        bytes_accessed=weight_bytes + B_pad * IN_DIM * w_itemsize + B_pad * OUT_PAD * 4,
    )

    full = lambda i: (0, 0)  # weights/biases: same (whole) block every grid step

    def _call(single_buffer_weights):
        def wspec(shape):
            if single_buffer_weights:
                # Constant block -> never re-fetched; one buffer is enough.
                return pl.BlockSpec(shape, full, pipeline_mode=pl.Buffered(1))
            return pl.BlockSpec(shape, full)

        in_specs = [
            pl.BlockSpec((tile_b, IN_DIM), lambda i: (i, 0)),   # h tile (pipelined)
            wspec((IN_DIM, HID_DIM)),                           # w1
            wspec((1, HID_DIM)),                                # b1
            wspec((HID_DIM, HID_DIM)),                          # w2
            wspec((1, HID_DIM)),                                # b2
            wspec((HID_DIM, OUT_PAD)),                          # w3 (padded)
            wspec((1, OUT_PAD)),                                # b3 (padded)
        ]
        out_specs = pl.BlockSpec((tile_b, OUT_PAD), lambda i: (i, 0))

        return pl.pallas_call(
            _mlp_kernel,
            out_shape=jax.ShapeDtypeStruct((B_pad, OUT_PAD), jnp.float32),
            grid=grid,
            in_specs=in_specs,
            out_specs=out_specs,
            compiler_params=pltpu.CompilerParams(
                dimension_semantics=("parallel",),      # batch steps are independent
                vmem_limit_bytes=28 * 1024 * 1024,      # explicit budget; safe on v5e/v6e/v7x
            ),
            cost_estimate=cost,
        )(h_pad, w1, b1, w2, b2, w3, b3)

    try:
        out_pad = _call(True)
    except Exception:
        # pl.Buffered(1) not supported by this JAX/Mosaic version: fall back to
        # default double-buffered weight blocks (costs ~1-2 MiB extra VMEM).
        out_pad = _call(False)

    return out_pad[:B, :OUT_DIM]


def init_params(key):
    """Deterministic init mimicking PyTorch nn.Linear default:
    U(-1/sqrt(fan_in), 1/sqrt(fan_in)) for both weight and bias."""
    ks = jax.random.split(key, 6)

    def linear(kw, kb, fan_in, fan_out):
        bound = 1.0 / jnp.sqrt(float(fan_in))
        w = jax.random.uniform(kw, (fan_in, fan_out), jnp.float32, -bound, bound)
        b = jax.random.uniform(kb, (1, fan_out), jnp.float32, -bound, bound)
        return w, b

    w1, b1 = linear(ks[0], ks[1], IN_DIM, HID_DIM)
    w2, b2 = linear(ks[2], ks[3], HID_DIM, HID_DIM)
    w3, b3 = linear(ks[4], ks[5], HID_DIM, OUT_DIM)
    return dict(w1=w1, b1=b1, w2=w2, b2=b2, w3=w3, b3=b3)


def reference_forward(h, p):
    h1 = jnp.maximum(h @ p["w1"] + p["b1"], 0.0)
    h2 = jnp.maximum(h1 @ p["w2"] + p["b2"], 0.0)
    return h2 @ p["w3"] + p["b3"]


if __name__ == "__main__":
    key = jax.random.PRNGKey(0)
    k_params, k_x = jax.random.split(key)

    params = init_params(k_params)
    B = 8  # small batch; feature dim 512 is fixed by the module definition
    h = jax.random.normal(k_x, (B, IN_DIM), jnp.float32)
    ref = reference_forward(h, params)

    # 1) Exact-semantics path (f32 weights) must match the f32 reference tightly.
    out_f32 = jax.block_until_ready(label_predictor(h, params, weight_dtype=jnp.float32))
    assert out_f32.shape == (B, OUT_DIM)
    assert jnp.allclose(out_f32, ref, atol=1e-4, rtol=1e-4), "f32 path mismatch"

    # 2) Default fast path (bf16 weights/activations, f32 accumulation) stays close.
    out_bf16 = jax.block_until_ready(label_predictor(h, params))
    assert out_bf16.shape == (B, OUT_DIM)
    assert jnp.allclose(out_bf16, ref, atol=5e-2, rtol=5e-2), "bf16 path mismatch"

    # 3) Multi-step grid + ragged batch (exercises padding / remainder handling).
    B2 = 20
    h2 = jax.random.normal(jax.random.PRNGKey(1), (B2, IN_DIM), jnp.float32)
    out2 = jax.block_until_ready(label_predictor(h2, params, tile_b=16))
    ref2 = reference_forward(h2, params)
    assert out2.shape == (B2, OUT_DIM)
    assert jnp.allclose(out2, ref2, atol=5e-2, rtol=5e-2), "ragged-batch mismatch"

    print("KERNEL_OK")
</pallas_src>

<mosaic_0001>
module attributes {stable_mosaic.version = 11 : i64} {
  func.func @_mlp_kernel(%arg0: i32, %arg1: memref<8x512xf32, #tpu.memory_space<vmem>>, %arg2: memref<512x512xf32, #tpu.memory_space<vmem>>, %arg3: memref<1x512xf32, #tpu.memory_space<vmem>>, %arg4: memref<512x512xf32, #tpu.memory_space<vmem>>, %arg5: memref<1x512xf32, #tpu.memory_space<vmem>>, %arg6: memref<512x128xf32, #tpu.memory_space<vmem>>, %arg7: memref<1x128xf32, #tpu.memory_space<vmem>>, %arg8: memref<8x128xf32, #tpu.memory_space<vmem>>) attributes {dimension_semantics = [#tpu.dimension_semantics<parallel>], iteration_bounds = array<i64: 1>, scalar_prefetch = 0 : i64, scratch_operands = 0 : i64, tpu.core_type = #tpu.core_type<tc>, window_params = [{transform_indices = @transform_0, window_bounds = array<i64: 8, 512>}, {pipeline_mode = #tpu.pipeline_mode<synchronous>, transform_indices = @transform_1, window_bounds = array<i64: 512, 512>}, {pipeline_mode = #tpu.pipeline_mode<synchronous>, transform_indices = @transform_2, window_bounds = array<i64: 1, 512>}, {pipeline_mode = #tpu.pipeline_mode<synchronous>, transform_indices = @transform_3, window_bounds = array<i64: 512, 512>}, {pipeline_mode = #tpu.pipeline_mode<synchronous>, transform_indices = @transform_4, window_bounds = array<i64: 1, 512>}, {pipeline_mode = #tpu.pipeline_mode<synchronous>, transform_indices = @transform_5, window_bounds = array<i64: 512, 128>}, {pipeline_mode = #tpu.pipeline_mode<synchronous>, transform_indices = @transform_6, window_bounds = array<i64: 1, 128>}, {transform_indices = @transform_7, window_bounds = array<i64: 8, 128>}]} {
    %c0 = arith.constant 0 : index
    %c0_0 = arith.constant 0 : index
    %0 = vector.load %arg1[%c0, %c0_0] : memref<8x512xf32, #tpu.memory_space<vmem>>, vector<8x512xf32>
    %c0_1 = arith.constant 0 : index
    %c0_2 = arith.constant 0 : index
    %1 = vector.load %arg2[%c0_1, %c0_2] : memref<512x512xf32, #tpu.memory_space<vmem>>, vector<512x512xf32>
    %cst = arith.constant dense<0.000000e+00> : vector<8x512xf32>
    %2 = tpu.matmul %0, %1, %cst {dimension_numbers = #tpu.dot_dimension_numbers<[1], [0], [0], [1], [0, 0, 1, 1], [], []>} : vector<8x512xf32>, vector<512x512xf32>, vector<8x512xf32> -> vector<8x512xf32>
    %c0_3 = arith.constant 0 : index
    %c0_4 = arith.constant 0 : index
    %3 = vector.load %arg3[%c0_3, %c0_4] : memref<1x512xf32, #tpu.memory_space<vmem>>, vector<1x512xf32>
    %4 = vector.broadcast %3 : vector<1x512xf32> to vector<8x512xf32>
    %5 = arith.addf %2, %4 : vector<8x512xf32>
    %cst_5 = arith.constant 0.000000e+00 : f32
    %6 = vector.broadcast %cst_5 : f32 to vector<8x512xf32>
    %7 = arith.maximumf %5, %6 : vector<8x512xf32>
    %c0_6 = arith.constant 0 : index
    %c0_7 = arith.constant 0 : index
    %8 = vector.load %arg4[%c0_6, %c0_7] : memref<512x512xf32, #tpu.memory_space<vmem>>, vector<512x512xf32>
    %cst_8 = arith.constant dense<0.000000e+00> : vector<8x512xf32>
    %9 = tpu.matmul %7, %8, %cst_8 {dimension_numbers = #tpu.dot_dimension_numbers<[1], [0], [0], [1], [0, 0, 1, 1], [], []>} : vector<8x512xf32>, vector<512x512xf32>, vector<8x512xf32> -> vector<8x512xf32>
    %c0_9 = arith.constant 0 : index
    %c0_10 = arith.constant 0 : index
    %10 = vector.load %arg5[%c0_9, %c0_10] : memref<1x512xf32, #tpu.memory_space<vmem>>, vector<1x512xf32>
    %11 = vector.broadcast %10 : vector<1x512xf32> to vector<8x512xf32>
    %12 = arith.addf %9, %11 : vector<8x512xf32>
    %cst_11 = arith.constant 0.000000e+00 : f32
    %13 = vector.broadcast %cst_11 : f32 to vector<8x512xf32>
    %14 = arith.maximumf %12, %13 : vector<8x512xf32>
    %c0_12 = arith.constant 0 : index
    %c0_13 = arith.constant 0 : index
    %15 = vector.load %arg6[%c0_12, %c0_13] : memref<512x128xf32, #tpu.memory_space<vmem>>, vector<512x128xf32>
    %cst_14 = arith.constant dense<0.000000e+00> : vector<8x128xf32>
    %16 = tpu.matmul %14, %15, %cst_14 {dimension_numbers = #tpu.dot_dimension_numbers<[1], [0], [0], [1], [0, 0, 1, 1], [], []>} : vector<8x512xf32>, vector<512x128xf32>, vector<8x128xf32> -> vector<8x128xf32>
    %c0_15 = arith.constant 0 : index
    %c0_16 = arith.constant 0 : index
    %17 = vector.load %arg7[%c0_15, %c0_16] : memref<1x128xf32, #tpu.memory_space<vmem>>, vector<1x128xf32>
    %18 = vector.broadcast %17 : vector<1x128xf32> to vector<8x128xf32>
    %19 = arith.addf %16, %18 : vector<8x128xf32>
    %c0_17 = arith.constant 0 : index
    %c0_18 = arith.constant 0 : index
    %20 = vector.load %arg8[%c0_17, %c0_18] : memref<8x128xf32, #tpu.memory_space<vmem>>, vector<8x128xf32>
    tpu.vector_store %arg8[%c0_17, %c0_18], %19 {strides = array<i32>} : memref<8x128xf32, #tpu.memory_space<vmem>>, vector<8x128xf32>,
    return
  }
  func.func @transform_0(%arg0: i32) -> (i32, i32) {
    %c0_i32 = arith.constant 0 : i32
    %c0_i32_0 = arith.constant 0 : i32
    return %arg0, %c0_i32 : i32, i32
  }
  func.func @transform_1(%arg0: i32) -> (i32, i32) {
    %c0_i32 = arith.constant 0 : i32
    %c0_i32_0 = arith.constant 0 : i32
    %c0_i32_1 = arith.constant 0 : i32
    return %c0_i32, %c0_i32_0 : i32, i32
  }
  func.func @transform_2(%arg0: i32) -> (i32, i32) {
    %c0_i32 = arith.constant 0 : i32
    %c0_i32_0 = arith.constant 0 : i32
    %c0_i32_1 = arith.constant 0 : i32
    return %c0_i32, %c0_i32_0 : i32, i32
  }
  func.func @transform_3(%arg0: i32) -> (i32, i32) {
    %c0_i32 = arith.constant 0 : i32
    %c0_i32_0 = arith.constant 0 : i32
    %c0_i32_1 = arith.constant 0 : i32
    return %c0_i32, %c0_i32_0 : i32, i32
  }
  func.func @transform_4(%arg0: i32) -> (i32, i32) {
    %c0_i32 = arith.constant 0 : i32
    %c0_i32_0 = arith.constant 0 : i32
    %c0_i32_1 = arith.constant 0 : i32
    return %c0_i32, %c0_i32_0 : i32, i32
  }
  func.func @transform_5(%arg0: i32) -> (i32, i32) {
    %c0_i32 = arith.constant 0 : i32
    %c0_i32_0 = arith.constant 0 : i32
    %c0_i32_1 = arith.constant 0 : i32
    return %c0_i32, %c0_i32_0 : i32, i32
  }
  func.func @transform_6(%arg0: i32) -> (i32, i32) {
    %c0_i32 = arith.constant 0 : i32
    %c0_i32_0 = arith.constant 0 : i32
    %c0_i32_1 = arith.constant 0 : i32
    return %c0_i32, %c0_i32_0 : i32, i32
  }
  func.func @transform_7(%arg0: i32) -> (i32, i32) {
    %c0_i32 = arith.constant 0 : i32
    %c0_i32_0 = arith.constant 0 : i32
    return %arg0, %c0_i32 : i32, i32
  }
}

module attributes {stable_mosaic.version = 11 : i64} {
  func.func @_mlp_kernel(%arg0: i32, %arg1: memref<8x512xf32, #tpu.memory_space<vmem>>, %arg2: memref<512x512xf32, #tpu.memory_space<vmem>>, %arg3: memref<1x512xf32, #tpu.memory_space<vmem>>, %arg4: memref<512x512xf32, #tpu.memory_space<vmem>>, %arg5: memref<1x512xf32, #tpu.memory_space<vmem>>, %arg6: memref<512x128xf32, #tpu.memory_space<vmem>>, %arg7: memref<1x128xf32, #tpu.memory_space<vmem>>, %arg8: memref<8x128xf32, #tpu.memory_space<vmem>>) attributes {dimension_semantics = [#tpu.dimension_semantics<parallel>], iteration_bounds = array<i64: 1>, scalar_prefetch = 0 : i64, scratch_operands = 0 : i64, tpu.core_type = #tpu.core_type<tc>, window_params = [{transform_indices = @transform_0, window_bounds = array<i64: 8, 512>}, {pipeline_mode = #tpu.pipeline_mode<synchronous>, transform_indices = @transform_1, window_bounds = array<i64: 512, 512>}, {pipeline_mode = #tpu.pipeline_mode<synchronous>, transform_indices = @transform_2, window_bounds = array<i64: 1, 512>}, {pipeline_mode = #tpu.pipeline_mode<synchronous>, transform_indices = @transform_3, window_bounds = array<i64: 512, 512>}, {pipeline_mode = #tpu.pipeline_mode<synchronous>, transform_indices = @transform_4, window_bounds = array<i64: 1, 512>}, {pipeline_mode = #tpu.pipeline_mode<synchronous>, transform_indices = @transform_5, window_bounds = array<i64: 512, 128>}, {pipeline_mode = #tpu.pipeline_mode<synchronous>, transform_indices = @transform_6, window_bounds = array<i64: 1, 128>}, {transform_indices = @transform_7, window_bounds = array<i64: 8, 128>}]} {
    %c0 = arith.constant 0 : index
    %c0_0 = arith.constant 0 : index
    %0 = vector.load %arg1[%c0, %c0_0] : memref<8x512xf32, #tpu.memory_space<vmem>>, vector<8x512xf32>
    %c0_1 = arith.constant 0 : index
    %c0_2 = arith.constant 0 : index
    %1 = vector.load %arg2[%c0_1, %c0_2] : memref<512x512xf32, #tpu.memory_space<vmem>>, vector<512x512xf32>
    %cst = arith.constant dense<0.000000e+00> : vector<8x512xf32>
    %2 = tpu.matmul %0, %1, %cst {dimension_numbers = #tpu.dot_dimension_numbers<[1], [0], [0], [1], [0, 0, 1, 1], [], []>} : vector<8x512xf32>, vector<512x512xf32>, vector<8x512xf32> -> vector<8x512xf32>
    %c0_3 = arith.constant 0 : index
    %c0_4 = arith.constant 0 : index
    %3 = vector.load %arg3[%c0_3, %c0_4] : memref<1x512xf32, #tpu.memory_space<vmem>>, vector<1x512xf32>
    %4 = vector.broadcast %3 : vector<1x512xf32> to vector<8x512xf32>
    %5 = arith.addf %2, %4 : vector<8x512xf32>
    %cst_5 = arith.constant 0.000000e+00 : f32
    %6 = vector.broadcast %cst_5 : f32 to vector<8x512xf32>
    %7 = arith.maximumf %5, %6 : vector<8x512xf32>
    %c0_6 = arith.constant 0 : index
    %c0_7 = arith.constant 0 : index
    %8 = vector.load %arg4[%c0_6, %c0_7] : memref<512x512xf32, #tpu.memory_space<vmem>>, vector<512x512xf32>
    %cst_8 = arith.constant dense<0.000000e+00> : vector<8x512xf32>
    %9 = tpu.matmul %7, %8, %cst_8 {dimension_numbers = #tpu.dot_dimension_numbers<[1], [0], [0], [1], [0, 0, 1, 1], [], []>} : vector<8x512xf32>, vector<512x512xf32>, vector<8x512xf32> -> vector<8x512xf32>
    %c0_9 = arith.constant 0 : index
    %c0_10 = arith.constant 0 : index
    %10 = vector.load %arg5[%c0_9, %c0_10] : memref<1x512xf32, #tpu.memory_space<vmem>>, vector<1x512xf32>
    %11 = vector.broadcast %10 : vector<1x512xf32> to vector<8x512xf32>
    %12 = arith.addf %9, %11 : vector<8x512xf32>
    %cst_11 = arith.constant 0.000000e+00 : f32
    %13 = vector.broadcast %cst_11 : f32 to vector<8x512xf32>
    %14 = arith.maximumf %12, %13 : vector<8x512xf32>
    %c0_12 = arith.constant 0 : index
    %c0_13 = arith.constant 0 : index
    %15 = vector.load %arg6[%c0_12, %c0_13] : memref<512x128xf32, #tpu.memory_space<vmem>>, vector<512x128xf32>
    %cst_14 = arith.constant dense<0.000000e+00> : vector<8x128xf32>
    %16 = tpu.matmul %14, %15, %cst_14 {dimension_numbers = #tpu.dot_dimension_numbers<[1], [0], [0], [1], [0, 0, 1, 1], [], []>} : vector<8x512xf32>, vector<512x128xf32>, vector<8x128xf32> -> vector<8x128xf32>
    %c0_15 = arith.constant 0 : index
    %c0_16 = arith.constant 0 : index
    %17 = vector.load %arg7[%c0_15, %c0_16] : memref<1x128xf32, #tpu.memory_space<vmem>>, vector<1x128xf32>
    %18 = vector.broadcast %17 : vector<1x128xf32> to vector<8x128xf32>
    %19 = arith.addf %16, %18 : vector<8x128xf32>
    %c0_17 = arith.constant 0 : index
    %c0_18 = arith.constant 0 : index
    %20 = vector.load %arg8[%c0_17, %c0_18] : memref<8x128xf32, #tpu.memory_space<vmem>>, vector<8x128xf32>
    tpu.vector_store %arg8[%c0_17, %c0_18], %19 {strides = array<i32>} : memref<8x128xf32, #tpu.memory_space<vmem>>, vector<8x128xf32>,
    return
  }
  func.func @transform_0(%arg0: i32) -> (i32, i32) {
    %c0_i32 = arith.constant 0 : i32
    %c0_i32_0 = arith.constant 0 : i32
    return %arg0, %c0_i32 : i32, i32
  }
  func.func @transform_1(%arg0: i32) -> (i32, i32) {
    %c0_i32 = arith.constant 0 : i32
    %c0_i32_0 = arith.constant 0 : i32
    %c0_i32_1 = arith.constant 0 : i32
    return %c0_i32, %c0_i32_0 : i32, i32
  }
  func.func @transform_2(%arg0: i32) -> (i32, i32) {
    %c0_i32 = arith.constant 0 : i32
    %c0_i32_0 = arith.constant 0 : i32
    %c0_i32_1 = arith.constant 0 : i32
    return %c0_i32, %c0_i32_0 : i32, i32
  }
  func.func @transform_3(%arg0: i32) -> (i32, i32) {
    %c0_i32 = arith.constant 0 : i32
    %c0_i32_0 = arith.constant 0 : i32
    %c0_i32_1 = arith.constant 0 : i32
    return %c0_i32, %c0_i32_0 : i32, i32
  }
  func.func @transform_4(%arg0: i32) -> (i32, i32) {
    %c0_i32 = arith.constant 0 : i32
    %c0_i32_0 = arith.constant 0 : i32
    %c0_i32_1 = arith.constant 0 : i32
    return %c0_i32, %c0_i32_0 : i32, i32
  }
  func.func @transform_5(%arg0: i32) -> (i32, i32) {
    %c0_i32 = arith.constant 0 : i32
    %c0_i32_0 = arith.constant 0 : i32
    %c0_i32_1 = arith.constant 0 : i32
    return %c0_i32, %c0_i32_0 : i32, i32
  }
  func.func @transform_6(%arg0: i32) -> (i32, i32) {
    %c0_i32 = arith.constant 0 : i32
    %c0_i32_0 = arith.constant 0 : i32
    %c0_i32_1 = arith.constant 0 : i32
    return %c0_i32, %c0_i32_0 : i32, i32
  }
  func.func @transform_7(%arg0: i32) -> (i32, i32) {
    %c0_i32 = arith.constant 0 : i32
    %c0_i32_0 = arith.constant 0 : i32
    return %arg0, %c0_i32 : i32, i32
  }
}

</mosaic_0001>

<llo_original>
// kernel: tpu_custom_call.1
$region0: #{tpu_custom_call.1}
  #allocation0 [shape = 'u32[]', space=smem, size = 0x4, offset = 0x4, fixed_abs, tag = 'smem constant byte address 0x4 - core index']
  #allocation1 [shape = 'u32[144,128]{1,0:T(1,128)}', space=vmem, size = 0x12000, scoped, tag = 'internal scratch']
  %s0 = inlined_call_operand.hbm [shape: f32[8,512], index: 0, kind: input, shape index: {}]
  %s1 = inlined_call_operand.hbm [shape: f32[512,512], index: 1, kind: input, shape index: {}]
  %s2 = inlined_call_operand.vmem [shape: f32[1,512], index: 2, kind: input, shape index: {}]
  %s3 = inlined_call_operand.hbm [shape: f32[512,512], index: 3, kind: input, shape index: {}]
  %s4 = inlined_call_operand.vmem [shape: f32[1,512], index: 4, kind: input, shape index: {}]
  %s5 = inlined_call_operand.hbm [shape: f32[512,128], index: 5, kind: input, shape index: {}]
  %s6 = inlined_call_operand.vmem [shape: f32[1,128], index: 6, kind: input, shape index: {}]
  %s7 = inlined_call_operand.hbm [shape: f32[8,128], index: 7, kind: output, shape index: {}]
  %s8 = sld [smem:[#allocation0]]
  $region54: #{tpu_custom_call.1} parent=0
    _
  %s10 = ssub.s32 1, %s8
  %s11 = scalar_select 0, %s10, %s8
  $region1: #{tpu_custom_call.1} parent=0
    #allocation2 [shape = 'u8[16384]{0}', space=vmem, size = 0x4000, scoped, tag = 'input window, operand 0, single buffered']
    #allocation3 [shape = 's32[1]{0}', space=sflag, size = 0x4, scoped, tag = 'scoped memory for tpu_custom_call.1']
    #allocation4 [shape = 's32[1]{0}', space=sflag, size = 0x4, scoped, tag = 'scoped memory for tpu_custom_call.1']
    #allocation5 [shape = 'u8[1048576]{0}', space=vmem, size = 0x100000, scoped, tag = 'input window, operand 1, single buffered']
    #allocation6 [shape = 's32[1]{0}', space=sflag, size = 0x4, scoped, tag = 'scoped memory for tpu_custom_call.1']
    #allocation7 [shape = 'u8[1048576]{0}', space=vmem, size = 0x100000, scoped, tag = 'input window, operand 3, single buffered']
    #allocation8 [shape = 'u8[262144]{0}', space=vmem, size = 0x40000, scoped, tag = 'input window, operand 5, single buffered']
    #allocation9 [shape = 's32[1]{0}', space=sflag, size = 0x4, scoped, tag = 'scoped memory for tpu_custom_call.1']
    #allocation10 [shape = 'u8[4096]{0}', space=vmem, size = 0x1000, scoped, tag = 'output window, operand 0, single buffered']
    %12 = vsyncpa [#allocation3], 0
    %13 = vsyncpa [#allocation6], 0
    %14 = vsyncpa [#allocation9], 0
    %15 = vsyncpa [#allocation4], 0
    // Predicated region
    $region2: #{tpu_custom_call.1} parent=1 // pred_check
      _
    $region3: #{tpu_custom_call.1} parent=1 // pred_check_branch
      %17 = sbr.rel (0) target = $region5
    $region4: #{tpu_custom_call.1} parent=1 // pred_region
      %s19 = ssub.s32 512, 512
      %20 = vsyncadd [#allocation3], %s19
      %s22 = sshll.u32 [#allocation2], 4
      %s23 = int_to_ptr.vmem [resolvable:$true] %s22
      %25 = dma.hbm_to_vmem [thread:$0]  %s0, 512, %s23, [#allocation3]
    $region5: #{tpu_custom_call.1} parent=1 // pred_fallthru
      _
    // Predicated region
    $region6: #{tpu_custom_call.1} parent=1 // pred_check
      _
    $region7: #{tpu_custom_call.1} parent=1 // pred_check_branch
      %27 = sbr.rel (0) target = $region9
    $region8: #{tpu_custom_call.1} parent=1 // pred_region
      %s29 = ssub.s32 32768, 32768
      %30 = vsyncadd [#allocation6], %s29
      %s31 = sshll.u32 [#allocation5], 4
      %s32 = int_to_ptr.vmem [resolvable:$true] %s31
      %37 = dma.hbm_to_vmem [thread:$0]  %s1, 32768, %s32, [#allocation6], 512, 512, 32
    $region9: #{tpu_custom_call.1} parent=1 // pred_fallthru
      _
    // Predicated region
    $region10: #{tpu_custom_call.1} parent=1 // pred_check
      _
    $region11: #{tpu_custom_call.1} parent=1 // pred_check_branch
      %39 = sbr.rel (0) target = $region13
    $region12: #{tpu_custom_call.1} parent=1 // pred_region
      _
    $region13: #{tpu_custom_call.1} parent=1 // pred_fallthru
      _
    // Predicated region
    $region14: #{tpu_custom_call.1} parent=1 // pred_check
      _
    $region15: #{tpu_custom_call.1} parent=1 // pred_check_branch
      %41 = sbr.rel (0) target = $region17
    $region16: #{tpu_custom_call.1} parent=1 // pred_region
      %s43 = ssub.s32 32768, 32768
      %44 = vsyncadd [#allocation6], %s43
      %s45 = sshll.u32 [#allocation7], 4
      %s46 = int_to_ptr.vmem [resolvable:$true] %s45
      %51 = dma.hbm_to_vmem [thread:$0]  %s3, 32768, %s46, [#allocation6], 512, 512, 32
    $region17: #{tpu_custom_call.1} parent=1 // pred_fallthru
      _
    // Predicated region
    $region18: #{tpu_custom_call.1} parent=1 // pred_check
      _
    $region19: #{tpu_custom_call.1} parent=1 // pred_check_branch
      %53 = sbr.rel (0) target = $region21
    $region20: #{tpu_custom_call.1} parent=1 // pred_region
      _
    $region21: #{tpu_custom_call.1} parent=1 // pred_fallthru
      _
    // Predicated region
    $region22: #{tpu_custom_call.1} parent=1 // pred_check
      _
    $region23: #{tpu_custom_call.1} parent=1 // pred_check_branch
      %55 = sbr.rel (0) target = $region25
    $region24: #{tpu_custom_call.1} parent=1 // pred_region
      %s57 = ssub.s32 8192, 8192
      %58 = vsyncadd [#allocation9], %s57
      %s59 = sshll.u32 [#allocation8], 4
      %s60 = int_to_ptr.vmem [resolvable:$true] %s59
      %65 = dma.hbm_to_vmem [thread:$0]  %s5, 8192, %s60, [#allocation9], 128, 128, 8
    $region25: #{tpu_custom_call.1} parent=1 // pred_fallthru
      _
    // Predicated region
    $region26: #{tpu_custom_call.1} parent=1 // pred_check
      _
    $region27: #{tpu_custom_call.1} parent=1 // pred_check_branch
      %67 = sbr.rel (0) target = $region29
    $region28: #{tpu_custom_call.1} parent=1 // pred_region
      _
    $region29: #{tpu_custom_call.1} parent=1 // pred_fallthru
      _
    // Predicated region
    $region30: #{tpu_custom_call.1} parent=1 // pred_check
      _
    $region31: #{tpu_custom_call.1} parent=1 // pred_check_branch
      %69 = sbr.rel (0) target = $region33
    $region32: #{tpu_custom_call.1} parent=1 // pred_region
      %70 = dma.done [#allocation3], 512
    $region33: #{tpu_custom_call.1} parent=1 // pred_fallthru
      _
    // Predicated region
    $region34: #{tpu_custom_call.1} parent=1 // pred_check
      _
    $region35: #{tpu_custom_call.1} parent=1 // pred_check_branch
      %72 = sbr.rel (0) target = $region37
    $region36: #{tpu_custom_call.1} parent=1 // pred_region
      %73 = dma.done [#allocation6], 32768
    $region37: #{tpu_custom_call.1} parent=1 // pred_fallthru
      _
    // Predicated region
    $region38: #{tpu_custom_call.1} parent=1 // pred_check
      _
    $region39: #{tpu_custom_call.1} parent=1 // pred_check_branch
      %75 = sbr.rel (0) target = $region41
    $region40: #{tpu_custom_call.1} parent=1 // pred_region
      %76 = dma.done [#allocation6], 32768
    $region41: #{tpu_custom_call.1} parent=1 // pred_fallthru
      _
    // Predicated region
    $region42: #{tpu_custom_call.1} parent=1 // pred_check
      _
    $region43: #{tpu_custom_call.1} parent=1 // pred_check_branch
      %78 = sbr.rel (0) target = $region45
    $region44: #{tpu_custom_call.1} parent=1 // pred_region
      %79 = dma.done [#allocation9], 8192
    $region45: #{tpu_custom_call.1} parent=1 // pred_fallthru
      _
    %v80 = vld [vmem:[#allocation2] sm:$0xff]
    %v81 = vld [vmem:[#allocation2 + $0x8] sm:$0xff]
    %v82 = vld [vmem:[#allocation2 + $0x10] sm:$0xff]
    %v83 = vld [vmem:[#allocation2 + $0x18] sm:$0xff]
    %v84 = vld [vmem:[#allocation5] sm:$0xff]
    %v85 = vld [vmem:[#allocation5 + $0x8] sm:$0xff]
    %v86 = vld [vmem:[#allocation5 + $0x10] sm:$0xff]
    %v87 = vld [vmem:[#allocation5 + $0x18] sm:$0xff]
    %v88 = vld [vmem:[#allocation5 + $0x20] sm:$0xff]
    %v89 = vld [vmem:[#allocation5 + $0x28] sm:$0xff]
    %v90 = vld [vmem:[#allocation5 + $0x30] sm:$0xff]
    %v91 = vld [vmem:[#allocation5 + $0x38] sm:$0xff]
    %v92 = vld [vmem:[#allocation5 + $0x40] sm:$0xff]
    %v93 = vld [vmem:[#allocation5 + $0x48] sm:$0xff]
    %v94 = vld [vmem:[#allocation5 + $0x50] sm:$0xff]
    %v95 = vld [vmem:[#allocation5 + $0x58] sm:$0xff]
    %v96 = vld [vmem:[#allocation5 + $0x60] sm:$0xff]
    %v97 = vld [vmem:[#allocation5 + $0x68] sm:$0xff]
    %v98 = vld [vmem:[#allocation5 + $0x70] sm:$0xff]
    %v99 = vld [vmem:[#allocation5 + $0x78] sm:$0xff]
    %v100 = vld [vmem:[#allocation5 + $0x80] sm:$0xff]
    %v101 = vld [vmem:[#allocation5 + $0x88] sm:$0xff]
    %v102 = vld [vmem:[#allocation5 + $0x90] sm:$0xff]
    %v103 = vld [vmem:[#allocation5 + $0x98] sm:$0xff]
    %v104 = vld [vmem:[#allocation5 + $0xa0] sm:$0xff]
    %v105 = vld [vmem:[#allocation5 + $0xa8] sm:$0xff]
    %v106 = vld [vmem:[#allocation5 + $0xb0] sm:$0xff]
    %v107 = vld [vmem:[#allocation5 + $0xb8] sm:$0xff]
    %v108 = vld [vmem:[#allocation5 + $0xc0] sm:$0xff]
    %v109 = vld [vmem:[#allocation5 + $0xc8] sm:$0xff]
    %v110 = vld [vmem:[#allocation5 + $0xd0] sm:$0xff]
    %v111 = vld [vmem:[#allocation5 + $0xd8] sm:$0xff]
    %v112 = vld [vmem:[#allocation5 + $0xe0] sm:$0xff]
    %v113 = vld [vmem:[#allocation5 + $0xe8] sm:$0xff]
    %v114 = vld [vmem:[#allocation5 + $0xf0] sm:$0xff]
    %v115 = vld [vmem:[#allocation5 + $0xf8] sm:$0xff]
    %v116 = vld [vmem:[#allocation5 + $0x100] sm:$0xff]
    %v117 = vld [vmem:[#allocation5 + $0x108] sm:$0xff]
    %v118 = vld [vmem:[#allocation5 + $0x110] sm:$0xff]
    %v119 = vld [vmem:[#allocation5 + $0x118] sm:$0xff]
    %v120 = vld [vmem:[#allocation5 + $0x120] sm:$0xff]
    %v121 = vld [vmem:[#allocation5 + $0x128] sm:$0xff]
    %v122 = vld [vmem:[#allocation5 + $0x130] sm:$0xff]
    %v123 = vld [vmem:[#allocation5 + $0x138] sm:$0xff]
    %v124 = vld [vmem:[#allocation5 + $0x140] sm:$0xff]
    %v125 = vld [vmem:[#allocation5 + $0x148] sm:$0xff]
    %v126 = vld [vmem:[#allocation5 + $0x150] sm:$0xff]
    %v127 = vld [vmem:[#allocation5 + $0x158] sm:$0xff]
    %v128 = vld [vmem:[#allocation5 + $0x160] sm:$0xff]
    %v129 = vld [vmem:[#allocation5 + $0x168] sm:$0xff]
    %v130 = vld [vmem:[#allocation5 + $0x170] sm:$0xff]
    %v131 = vld [vmem:[#allocation5 + $0x178] sm:$0xff]
    %v132 = vld [vmem:[#allocation5 + $0x180] sm:$0xff]
    %v133 = vld [vmem:[#allocation5 + $0x188] sm:$0xff]
    %v134 = vld [vmem:[#allocation5 + $0x190] sm:$0xff]
    %v135 = vld [vmem:[#allocation5 + $0x198] sm:$0xff]
    %v136 = vld [vmem:[#allocation5 + $0x1a0] sm:$0xff]
    %v137 = vld [vmem:[#allocation5 + $0x1a8] sm:$0xff]
    %v138 = vld [vmem:[#allocation5 + $0x1b0] sm:$0xff]
    %v139 = vld [vmem:[#allocation5 + $0x1b8] sm:$0xff]
    %v140 = vld [vmem:[#allocation5 + $0x1c0] sm:$0xff]
    %v141 = vld [vmem:[#allocation5 + $0x1c8] sm:$0xff]
    %v142 = vld [vmem:[#allocation5 + $0x1d0] sm:$0xff]
    %v143 = vld [vmem:[#allocation5 + $0x1d8] sm:$0xff]
    %v144 = vld [vmem:[#allocation5 + $0x1e0] sm:$0xff]
    %v145 = vld [vmem:[#allocation5 + $0x1e8] sm:$0xff]
    %v146 = vld [vmem:[#allocation5 + $0x1f0] sm:$0xff]
    %v147 = vld [vmem:[#allocation5 + $0x1f8] sm:$0xff]
    %v148 = vld [vmem:[#allocation5 + $0x200] sm:$0xff]
    %v149 = vld [vmem:[#allocation5 + $0x208] sm:$0xff]
    %v150 = vld [vmem:[#allocation5 + $0x210] sm:$0xff]
    %v151 = vld [vmem:[#allocation5 + $0x218] sm:$0xff]
    %v152 = vld [vmem:[#allocation5 + $0x220] sm:$0xff]
    %v153 = vld [vmem:[#allocation5 + $0x228] sm:$0xff]
    %v154 = vld [vmem:[#allocation5 + $0x230] sm:$0xff]
    %v155 = vld [vmem:[#allocation5 + $0x238] sm:$0xff]
    %v156 = vld [vmem:[#allocation5 + $0x240] sm:$0xff]
    %v157 = vld [vmem:[#allocation5 + $0x248] sm:$0xff]
    %v158 = vld [vmem:[#allocation5 + $0x250] sm:$0xff]
    %v159 = vld [vmem:[#allocation5 + $0x258] sm:$0xff]
    %v160 = vld [vmem:[#allocation5 + $0x260] sm:$0xff]
    %v161 = vld [vmem:[#allocation5 + $0x268] sm:$0xff]
    %v162 = vld [vmem:[#allocation5 + $0x270] sm:$0xff]
    %v163 = vld [vmem:[#allocation5 + $0x278] sm:$0xff]
    %v164 = vld [vmem:[#allocation5 + $0x280] sm:$0xff]
    %v165 = vld [vmem:[#allocation5 + $0x288] sm:$0xff]
    %v166 = vld [vmem:[#allocation5 + $0x290] sm:$0xff]
    %v167 = vld [vmem:[#allocation5 + $0x298] sm:$0xff]
    %v168 = vld [vmem:[#allocation5 + $0x2a0] sm:$0xff]
    %v169 = vld [vmem:[#allocation5 + $0x2a8] sm:$0xff]
    %v170 = vld [vmem:[#allocation5 + $0x2b0] sm:$0xff]
    %v171 = vld [vmem:[#allocation5 + $0x2b8] sm:$0xff]
    %v172 = vld [vmem:[#allocation5 + $0x2c0] sm:$0xff]
    %v173 = vld [vmem:[#allocation5 + $0x2c8] sm:$0xff]
    %v174 = vld [vmem:[#allocation5 + $0x2d0] sm:$0xff]
    %v175 = vld [vmem:[#allocation5 + $0x2d8] sm:$0xff]
    %v176 = vld [vmem:[#allocation5 + $0x2e0] sm:$0xff]
    %v177 = vld [vmem:[#allocation5 + $0x2e8] sm:$0xff]
    %v178 = vld [vmem:[#allocation5 + $0x2f0] sm:$0xff]
    %v179 = vld [vmem:[#allocation5 + $0x2f8] sm:$0xff]
    %v180 = vld [vmem:[#allocation5 + $0x300] sm:$0xff]
    %v181 = vld [vmem:[#allocation5 + $0x308] sm:$0xff]
    %v182 = vld [vmem:[#allocation5 + $0x310] sm:$0xff]
    %v183 = vld [vmem:[#allocation5 + $0x318] sm:$0xff]
    %v184 = vld [vmem:[#allocation5 + $0x320] sm:$0xff]
    %v185 = vld [vmem:[#allocation5 + $0x328] sm:$0xff]
    %v186 = vld [vmem:[#allocation5 + $0x330] sm:$0xff]
    %v187 = vld [vmem:[#allocation5 + $0x338] sm:$0xff]
    %v188 = vld [vmem:[#allocation5 + $0x340] sm:$0xff]
    %v189 = vld [vmem:[#allocation5 + $0x348] sm:$0xff]
    %v190 = vld [vmem:[#allocation5 + $0x350] sm:$0xff]
    %v191 = vld [vmem:[#allocation5 + $0x358] sm:$0xff]
    %v192 = vld [vmem:[#allocation5 + $0x360] sm:$0xff]
    %v193 = vld [vmem:[#allocation5 + $0x368] sm:$0xff]
    %v194 = vld [vmem:[#allocation5 + $0x370] sm:$0xff]
    %v195 = vld [vmem:[#allocation5 + $0x378] sm:$0xff]
    %v196 = vld [vmem:[#allocation5 + $0x380] sm:$0xff]
    %v197 = vld [vmem:[#allocation5 + $0x388] sm:$0xff]
    %v198 = vld [vmem:[#allocation5 + $0x390] sm:$0xff]
    %v199 = vld [vmem:[#allocation5 + $0x398] sm:$0xff]
    %v200 = vld [vmem:[#allocation5 + $0x3a0] sm:$0xff]
    %v201 = vld [vmem:[#allocation5 + $0x3a8] sm:$0xff]
    %v202 = vld [vmem:[#allocation5 + $0x3b0] sm:$0xff]
    %v203 = vld [vmem:[#allocation5 + $0x3b8] sm:$0xff]
    %v204 = vld [vmem:[#allocation5 + $0x3c0] sm:$0xff]
    %v205 = vld [vmem:[#allocation5 + $0x3c8] sm:$0xff]
    %v206 = vld [vmem:[#allocation5 + $0x3d0] sm:$0xff]
    %v207 = vld [vmem:[#allocation5 + $0x3d8] sm:$0xff]
    %v208 = vld [vmem:[#allocation5 + $0x3e0] sm:$0xff]
    %v209 = vld [vmem:[#allocation5 + $0x3e8] sm:$0xff]
    %v210 = vld [vmem:[#allocation5 + $0x3f0] sm:$0xff]
    %v211 = vld [vmem:[#allocation5 + $0x3f8] sm:$0xff]
    %v212 = vld [vmem:[#allocation5 + $0x400] sm:$0xff]
    %v213 = vld [vmem:[#allocation5 + $0x408] sm:$0xff]
    %v214 = vld [vmem:[#allocation5 + $0x410] sm:$0xff]
    %v215 = vld [vmem:[#allocation5 + $0x418] sm:$0xff]
    %v216 = vld [vmem:[#allocation5 + $0x420] sm:$0xff]
    %v217 = vld [vmem:[#allocation5 + $0x428] sm:$0xff]
    %v218 = vld [vmem:[#allocation5 + $0x430] sm:$0xff]
    %v219 = vld [vmem:[#allocation5 + $0x438] sm:$0xff]
    %v220 = vld [vmem:[#allocation5 + $0x440] sm:$0xff]
    %v221 = vld [vmem:[#allocation5 + $0x448] sm:$0xff]
    %v222 = vld [vmem:[#allocation5 + $0x450] sm:$0xff]
    %v223 = vld [vmem:[#allocation5 + $0x458] sm:$0xff]
    %v224 = vld [vmem:[#allocation5 + $0x460] sm:$0xff]
    %v225 = vld [vmem:[#allocation5 + $0x468] sm:$0xff]
    %v226 = vld [vmem:[#allocation5 + $0x470] sm:$0xff]
    %v227 = vld [vmem:[#allocation5 + $0x478] sm:$0xff]
    %v228 = vld [vmem:[#allocation5 + $0x480] sm:$0xff]
    %v229 = vld [vmem:[#allocation5 + $0x488] sm:$0xff]
    %v230 = vld [vmem:[#allocation5 + $0x490] sm:$0xff]
    %v231 = vld [vmem:[#allocation5 + $0x498] sm:$0xff]
    %v232 = vld [vmem:[#allocation5 + $0x4a0] sm:$0xff]
    %v233 = vld [vmem:[#allocation5 + $0x4a8] sm:$0xff]
    %v234 = vld [vmem:[#allocation5 + $0x4b0] sm:$0xff]
    %v235 = vld [vmem:[#allocation5 + $0x4b8] sm:$0xff]
    %v236 = vld [vmem:[#allocation5 + $0x4c0] sm:$0xff]
    %v237 = vld [vmem:[#allocation5 + $0x4c8] sm:$0xff]
    %v238 = vld [vmem:[#allocation5 + $0x4d0] sm:$0xff]
    %v239 = vld [vmem:[#allocation5 + $0x4d8] sm:$0xff]
    %v240 = vld [vmem:[#allocation5 + $0x4e0] sm:$0xff]
    %v241 = vld [vmem:[#allocation5 + $0x4e8] sm:$0xff]
    %v242 = vld [vmem:[#allocation5 + $0x4f0] sm:$0xff]
    %v243 = vld [vmem:[#allocation5 + $0x4f8] sm:$0xff]
    %v244 = vld [vmem:[#allocation5 + $0x500] sm:$0xff]
    %v245 = vld [vmem:[#allocation5 + $0x508] sm:$0xff]
    %v246 = vld [vmem:[#allocation5 + $0x510] sm:$0xff]
    %v247 = vld [vmem:[#allocation5 + $0x518] sm:$0xff]
    %v248 = vld [vmem:[#allocation5 + $0x520] sm:$0xff]
    %v249 = vld [vmem:[#allocation5 + $0x528] sm:$0xff]
    %v250 = vld [vmem:[#allocation5 + $0x530] sm:$0xff]
    %v251 = vld [vmem:[#allocation5 + $0x538] sm:$0xff]
    %v252 = vld [vmem:[#allocation5 + $0x540] sm:$0xff]
    %v253 = vld [vmem:[#allocation5 + $0x548] sm:$0xff]
    %v254 = vld [vmem:[#allocation5 + $0x550] sm:$0xff]
    %v255 = vld [vmem:[#allocation5 + $0x558] sm:$0xff]
    %v256 = vld [vmem:[#allocation5 + $0x560] sm:$0xff]
    %v257 = vld [vmem:[#allocation5 + $0x568] sm:$0xff]
    %v258 = vld [vmem:[#allocation5 + $0x570] sm:$0xff]
    %v259 = vld [vmem:[#allocation5 + $0x578] sm:$0xff]
    %v260 = vld [vmem:[#allocation5 + $0x580] sm:$0xff]
    %v261 = vld [vmem:[#allocation5 + $0x588] sm:$0xff]
    %v262 = vld [vmem:[#allocation5 + $0x590] sm:$0xff]
    %v263 = vld [vmem:[#allocation5 + $0x598] sm:$0xff]
    %v264 = vld [vmem:[#allocation5 + $0x5a0] sm:$0xff]
    %v265 = vld [vmem:[#allocation5 + $0x5a8] sm:$0xff]
    %v266 = vld [vmem:[#allocation5 + $0x5b0] sm:$0xff]
    %v267 = vld [vmem:[#allocation5 + $0x5b8] sm:$0xff]
    %v268 = vld [vmem:[#allocation5 + $0x5c0] sm:$0xff]
    %v269 = vld [vmem:[#allocation5 + $0x5c8] sm:$0xff]
    %v270 = vld [vmem:[#allocation5 + $0x5d0] sm:$0xff]
    %v271 = vld [vmem:[#allocation5 + $0x5d8] sm:$0xff]
    %v272 = vld [vmem:[#allocation5 + $0x5e0] sm:$0xff]
    %v273 = vld [vmem:[#allocation5 + $0x5e8] sm:$0xff]
    %v274 = vld [vmem:[#allocation5 + $0x5f0] sm:$0xff]
    %v275 = vld [vmem:[#allocation5 + $0x5f8] sm:$0xff]
    %v276 = vld [vmem:[#allocation5 + $0x600] sm:$0xff]
    %v277 = vld [vmem:[#allocation5 + $0x608] sm:$0xff]
    %v278 = vld [vmem:[#allocation5 + $0x610] sm:$0xff]
    %v279 = vld [vmem:[#allocation5 + $0x618] sm:$0xff]
    %v280 = vld [vmem:[#allocation5 + $0x620] sm:$0xff]
    %v281 = vld [vmem:[#allocation5 + $0x628] sm:$0xff]
    %v282 = vld [vmem:[#allocation5 + $0x630] sm:$0xff]
    %v283 = vld [vmem:[#allocation5 + $0x638] sm:$0xff]
    %v284 = vld [vmem:[#allocation5 + $0x640] sm:$0xff]
    %v285 = vld [vmem:[#allocation5 + $0x648] sm:$0xff]
    %v286 = vld [vmem:[#allocation5 + $0x650] sm:$0xff]
    %v287 = vld [vmem:[#allocation5 + $0x658] sm:$0xff]
    %v288 = vld [vmem:[#allocation5 + $0x660] sm:$0xff]
    %v289 = vld [vmem:[#allocation5 + $0x668] sm:$0xff]
    %v290 = vld [vmem:[#allocation5 + $0x670] sm:$0xff]
    %v291 = vld [vmem:[#allocation5 + $0x678] sm:$0xff]
    %v292 = vld [vmem:[#allocation5 + $0x680] sm:$0xff]
    %v293 = vld [vmem:[#allocation5 + $0x688] sm:$0xff]
    %v294 = vld [vmem:[#allocation5 + $0x690] sm:$0xff]
    %v295 = vld [vmem:[#allocation5 + $0x698] sm:$0xff]
    %v296 = vld [vmem:[#allocation5 + $0x6a0] sm:$0xff]
    %v297 = vld [vmem:[#allocation5 + $0x6a8] sm:$0xff]
    %v298 = vld [vmem:[#allocation5 + $0x6b0] sm:$0xff]
    %v299 = vld [vmem:[#allocation5 + $0x6b8] sm:$0xff]
    %v300 = vld [vmem:[#allocation5 + $0x6c0] sm:$0xff]
    %v301 = vld [vmem:[#allocation5 + $0x6c8] sm:$0xff]
    %v302 = vld [vmem:[#allocation5 + $0x6d0] sm:$0xff]
    %v303 = vld [vmem:[#allocation5 + $0x6d8] sm:$0xff]
    %v304 = vld [vmem:[#allocation5 + $0x6e0] sm:$0xff]
    %v305 = vld [vmem:[#allocation5 + $0x6e8] sm:$0xff]
    %v306 = vld [vmem:[#allocation5 + $0x6f0] sm:$0xff]
    %v307 = vld [vmem:[#allocation5 + $0x6f8] sm:$0xff]
    %v308 = vld [vmem:[#allocation5 + $0x700] sm:$0xff]
    %v309 = vld [vmem:[#allocation5 + $0x708] sm:$0xff]
    %v310 = vld [vmem:[#allocation5 + $0x710] sm:$0xff]
    %v311 = vld [vmem:[#allocation5 + $0x718] sm:$0xff]
    %v312 = vld [vmem:[#allocation5 + $0x720] sm:$0xff]
    %v313 = vld [vmem:[#allocation5 + $0x728] sm:$0xff]
    %v314 = vld [vmem:[#allocation5 + $0x730] sm:$0xff]
    %v315 = vld [vmem:[#allocation5 + $0x738] sm:$0xff]
    %v316 = vld [vmem:[#allocation5 + $0x740] sm:$0xff]
    %v317 = vld [vmem:[#allocation5 + $0x748] sm:$0xff]
    %v318 = vld [vmem:[#allocation5 + $0x750] sm:$0xff]
    %v319 = vld [vmem:[#allocation5 + $0x758] sm:$0xff]
    %v320 = vld [vmem:[#allocation5 + $0x760] sm:$0xff]
    %v321 = vld [vmem:[#allocation5 + $0x768] sm:$0xff]
    %v322 = vld [vmem:[#allocation5 + $0x770] sm:$0xff]
    %v323 = vld [vmem:[#allocation5 + $0x778] sm:$0xff]
    %v324 = vld [vmem:[#allocation5 + $0x780] sm:$0xff]
    %v325 = vld [vmem:[#allocation5 + $0x788] sm:$0xff]
    %v326 = vld [vmem:[#allocation5 + $0x790] sm:$0xff]
    %v327 = vld [vmem:[#allocation5 + $0x798] sm:$0xff]
    %v328 = vld [vmem:[#allocation5 + $0x7a0] sm:$0xff]
    %v329 = vld [vmem:[#allocation5 + $0x7a8] sm:$0xff]
    %v330 = vld [vmem:[#allocation5 + $0x7b0] sm:$0xff]
    %v331 = vld [vmem:[#allocation5 + $0x7b8] sm:$0xff]
    %v332 = vld [vmem:[#allocation5 + $0x7c0] sm:$0xff]
    %v333 = vld [vmem:[#allocation5 + $0x7c8] sm:$0xff]
    %v334 = vld [vmem:[#allocation5 + $0x7d0] sm:$0xff]
    %v335 = vld [vmem:[#allocation5 + $0x7d8] sm:$0xff]
    %v336 = vld [vmem:[#allocation5 + $0x7e0] sm:$0xff]
    %v337 = vld [vmem:[#allocation5 + $0x7e8] sm:$0xff]
    %v338 = vld [vmem:[#allocation5 + $0x7f0] sm:$0xff]
    %v339 = vld [vmem:[#allocation5 + $0x7f8] sm:$0xff]
    %v340 = vld [vmem:[%s2] sm:$0xf]
    %v342 = vlaneseq
    %v343 = vshrl.u32 %v342, 7
    %v344 = vsub.s32 0, %v343
    %v345 = vrot.slane %v340, %v344
    %v346 = vlaneseq
    %v347 = vshrl.u32 %v346, 7
    %v348 = vsub.s32 1, %v347
    %v349 = vrot.slane %v340, %v348
    %v350 = vlaneseq
    %v351 = vshrl.u32 %v350, 7
    %v352 = vsub.s32 2, %v351
    %v353 = vrot.slane %v340, %v352
    %v354 = vlaneseq
    %v355 = vshrl.u32 %v354, 7
    %v356 = vsub.s32 3, %v355
    %v357 = vrot.slane %v340, %v356
    %362 = vmatprep.subr.mxu0 %v85
    %363 = vmatpush1.msra.mxu0 %v84
    %364 = vmatprep.subr.mxu0 %v89
    %365 = vmatpush1.msra.mxu0 %v88
    %366 = vmatprep.subr.mxu0 %v93
    %367 = vmatpush1.msra.mxu0 %v92
    %368 = vmatprep.subr.mxu0 %v97
    %369 = vmatpush1.msra.mxu0 %v96
    %370 = vmatprep.subr.mxu0 %v101
    %371 = vmatpush1.msra.mxu0 %v100
    %372 = vmatprep.subr.mxu0 %v105
    %373 = vmatpush1.msra.mxu0 %v104
    %374 = vmatprep.subr.mxu0 %v109
    %375 = vmatpush1.msra.mxu0 %v108
    %376 = vmatprep.subr.mxu0 %v113
    %377 = vmatpush1.msra.mxu0 %v112
    %378 = vmatprep.subr.mxu0 %v117
    %379 = vmatpush1.msra.mxu0 %v116
    %380 = vmatprep.subr.mxu0 %v121
    %381 = vmatpush1.msra.mxu0 %v120
    %382 = vmatprep.subr.mxu0 %v125
    %383 = vmatpush1.msra.mxu0 %v124
    %384 = vmatprep.subr.mxu0 %v129
    %385 = vmatpush1.msra.mxu0 %v128
    %386 = vmatprep.subr.mxu0 %v133
    %387 = vmatpush1.msra.mxu0 %v132
    %388 = vmatprep.subr.mxu0 %v137
    %389 = vmatpush1.msra.mxu0 %v136
    %390 = vmatprep.subr.mxu0 %v141
    %391 = vmatpush1.msra.mxu0 %v140
    %392 = vmatprep.subr.mxu0 %v145
    %393 = vmatpush1.msra.mxu0 %v144
    %394 = vmatprep.subr.mxu0 %v149
    %395 = vmatpush1.msra.mxu0 %v148
    %396 = vmatprep.subr.mxu0 %v153
    %397 = vmatpush1.msra.mxu0 %v152
    %398 = vmatprep.subr.mxu0 %v157
    %399 = vmatpush1.msra.mxu0 %v156
    %400 = vmatprep.subr.mxu0 %v161
    %401 = vmatpush1.msra.mxu0 %v160
    %402 = vmatprep.subr.mxu0 %v165
    %403 = vmatpush1.msra.mxu0 %v164
    %404 = vmatprep.subr.mxu0 %v169
    %405 = vmatpush1.msra.mxu0 %v168
    %406 = vmatprep.subr.mxu0 %v173
    %407 = vmatpush1.msra.mxu0 %v172
    %408 = vmatprep.subr.mxu0 %v177
    %409 = vmatpush1.msra.mxu0 %v176
    %410 = vmatprep.subr.mxu0 %v181
    %411 = vmatpush1.msra.mxu0 %v180
    %412 = vmatprep.subr.mxu0 %v185
    %413 = vmatpush1.msra.mxu0 %v184
    %414 = vmatprep.subr.mxu0 %v189
    %415 = vmatpush1.msra.mxu0 %v188
    %416 = vmatprep.subr.mxu0 %v193
    %417 = vmatpush1.msra.mxu0 %v192
    %418 = vmatprep.subr.mxu0 %v197
    %419 = vmatpush1.msra.mxu0 %v196
    %420 = vmatprep.subr.mxu0 %v201
    %421 = vmatpush1.msra.mxu0 %v200
    %422 = vmatprep.subr.mxu0 %v205
    %423 = vmatpush1.msra.mxu0 %v204
    %424 = vmatprep.subr.mxu0 %v209
    %425 = vmatpush1.msra.mxu0 %v208
    %426 = vmatprep.mubr.f32.mxu0 %v81
    %427 = vmatmul.mubr.f32.gmra.mrb[0].mxu0 %v80
    %v428 = vpop.f32.mrb[0].mxu0
    %v429 = vadd.f32 %v345, %v428
    %v430 = vpop.f32.mrb[0].mxu0
    %v431 = vadd.f32 %v349, %v430
    %432 = vdwg.mxu0
    %433 = vmatprep.subr.mxu0 %v213
    %434 = vmatpush1.msra.mxu0 %v212
    %435 = vmatprep.subr.mxu0 %v217
    %436 = vmatpush1.msra.mxu0 %v216
    %437 = vmatprep.subr.mxu0 %v221
    %438 = vmatpush1.msra.mxu0 %v220
    %439 = vmatprep.subr.mxu0 %v225
    %440 = vmatpush1.msra.mxu0 %v224
    %441 = vmatprep.subr.mxu0 %v229
    %442 = vmatpush1.msra.mxu0 %v228
    %443 = vmatprep.subr.mxu0 %v233
    %444 = vmatpush1.msra.mxu0 %v232
    %445 = vmatprep.subr.mxu0 %v237
    %446 = vmatpush1.msra.mxu0 %v236
    %447 = vmatprep.subr.mxu0 %v241
    %448 = vmatpush1.msra.mxu0 %v240
    %449 = vmatprep.subr.mxu0 %v245
    %450 = vmatpush1.msra.mxu0 %v244
    %451 = vmatprep.subr.mxu0 %v249
    %452 = vmatpush1.msra.mxu0 %v248
    %453 = vmatprep.subr.mxu0 %v253
    %454 = vmatpush1.msra.mxu0 %v252
    %455 = vmatprep.subr.mxu0 %v257
    %456 = vmatpush1.msra.mxu0 %v256
    %457 = vmatprep.subr.mxu0 %v261
    %458 = vmatpush1.msra.mxu0 %v260
    %459 = vmatprep.subr.mxu0 %v265
    %460 = vmatpush1.msra.mxu0 %v264
    %461 = vmatprep.subr.mxu0 %v269
    %462 = vmatpush1.msra.mxu0 %v268
    %463 = vmatprep.subr.mxu0 %v273
    %464 = vmatpush1.msra.mxu0 %v272
    %465 = vmatprep.subr.mxu0 %v277
    %466 = vmatpush1.msra.mxu0 %v276
    %467 = vmatprep.subr.mxu0 %v281
    %468 = vmatpush1.msra.mxu0 %v280
    %469 = vmatprep.subr.mxu0 %v285
    %470 = vmatpush1.msra.mxu0 %v284
    %471 = vmatprep.subr.mxu0 %v289
    %472 = vmatpush1.msra.mxu0 %v288
    %473 = vmatprep.subr.mxu0 %v293
    %474 = vmatpush1.msra.mxu0 %v292
    %475 = vmatprep.subr.mxu0 %v297
    %476 = vmatpush1.msra.mxu0 %v296
    %477 = vmatprep.subr.mxu0 %v301
    %478 = vmatpush1.msra.mxu0 %v300
    %479 = vmatprep.subr.mxu0 %v305
    %480 = vmatpush1.msra.mxu0 %v304
    %481 = vmatprep.subr.mxu0 %v309
    %482 = vmatpush1.msra.mxu0 %v308
    %483 = vmatprep.subr.mxu0 %v313
    %484 = vmatpush1.msra.mxu0 %v312
    %485 = vmatprep.subr.mxu0 %v317
    %486 = vmatpush1.msra.mxu0 %v316
    %487 = vmatprep.subr.mxu0 %v321
    %488 = vmatpush1.msra.mxu0 %v320
    %489 = vmatprep.subr.mxu0 %v325
    %490 = vmatpush1.msra.mxu0 %v324
    %491 = vmatprep.subr.mxu0 %v329
    %492 = vmatpush1.msra.mxu0 %v328
    %493 = vmatprep.subr.mxu0 %v333
    %494 = vmatpush1.msra.mxu0 %v332
    %495 = vmatprep.subr.mxu0 %v337
    %496 = vmatpush1.msra.mxu0 %v336
    %497 = vmatprep.mubr.f32.mxu0 %v83
    %498 = vmatmul.mubr.f32.gmra.mrb[0].mxu0 %v82
    %v499 = vpop.f32.mrb[0].mxu0
    %v500 = vadd.f32 %v429, %v499
    %v501 = vpop.f32.mrb[0].mxu0
    %v502 = vadd.f32 %v431, %v501
    %503 = vdwg.mxu0
    %504 = vmatprep.subr.mxu0 %v87
    %505 = vmatpush1.msra.mxu0 %v86
    %506 = vmatprep.subr.mxu0 %v91
    %507 = vmatpush1.msra.mxu0 %v90
    %508 = vmatprep.subr.mxu0 %v95
    %509 = vmatpush1.msra.mxu0 %v94
    %510 = vmatprep.subr.mxu0 %v99
    %511 = vmatpush1.msra.mxu0 %v98
    %512 = vmatprep.subr.mxu0 %v103
    %513 = vmatpush1.msra.mxu0 %v102
    %514 = vmatprep.subr.mxu0 %v107
    %515 = vmatpush1.msra.mxu0 %v106
    %516 = vmatprep.subr.mxu0 %v111
    %517 = vmatpush1.msra.mxu0 %v110
    %518 = vmatprep.subr.mxu0 %v115
    %519 = vmatpush1.msra.mxu0 %v114
    %520 = vmatprep.subr.mxu0 %v119
    %521 = vmatpush1.msra.mxu0 %v118
    %522 = vmatprep.subr.mxu0 %v123
    %523 = vmatpush1.msra.mxu0 %v122
    %524 = vmatprep.subr.mxu0 %v127
    %525 = vmatpush1.msra.mxu0 %v126
    %526 = vmatprep.subr.mxu0 %v131
    %527 = vmatpush1.msra.mxu0 %v130
    %528 = vmatprep.subr.mxu0 %v135
    %529 = vmatpush1.msra.mxu0 %v134
    %530 = vmatprep.subr.mxu0 %v139
    %531 = vmatpush1.msra.mxu0 %v138
    %532 = vmatprep.subr.mxu0 %v143
    %533 = vmatpush1.msra.mxu0 %v142
    %534 = vmatprep.subr.mxu0 %v147
    %535 = vmatpush1.msra.mxu0 %v146
    %536 = vmatprep.subr.mxu0 %v151
    %537 = vmatpush1.msra.mxu0 %v150
    %538 = vmatprep.subr.mxu0 %v155
    %539 = vmatpush1.msra.mxu0 %v154
    %540 = vmatprep.subr.mxu0 %v159
    %541 = vmatpush1.msra.mxu0 %v158
    %542 = vmatprep.subr.mxu0 %v163
    %543 = vmatpush1.msra.mxu0 %v162
    %544 = vmatprep.subr.mxu0 %v167
    %545 = vmatpush1.msra.mxu0 %v166
    %546 = vmatprep.subr.mxu0 %v171
    %547 = vmatpush1.msra.mxu0 %v170
    %548 = vmatprep.subr.mxu0 %v175
    %549 = vmatpush1.msra.mxu0 %v174
    %550 = vmatprep.subr.mxu0 %v179
    %551 = vmatpush1.msra.mxu0 %v178
    %552 = vmatprep.subr.mxu0 %v183
    %553 = vmatpush1.msra.mxu0 %v182
    %554 = vmatprep.subr.mxu0 %v187
    %555 = vmatpush1.msra.mxu0 %v186
    %556 = vmatprep.subr.mxu0 %v191
    %557 = vmatpush1.msra.mxu0 %v190
    %558 = vmatprep.subr.mxu0 %v195
    %559 = vmatpush1.msra.mxu0 %v194
    %560 = vmatprep.subr.mxu0 %v199
    %561 = vmatpush1.msra.mxu0 %v198
    %562 = vmatprep.subr.mxu0 %v203
    %563 = vmatpush1.msra.mxu0 %v202
    %564 = vmatprep.subr.mxu0 %v207
    %565 = vmatpush1.msra.mxu0 %v206
    %566 = vmatprep.subr.mxu0 %v211
    %567 = vmatpush1.msra.mxu0 %v210
    %568 = vmatprep.mubr.f32.mxu0 %v81
    %569 = vmatmul.mubr.f32.gmra.mrb[0].mxu0 %v80
    %v570 = vpop.f32.mrb[0].mxu0
    %v571 = vadd.f32 %v353, %v570
    %v572 = vpop.f32.mrb[0].mxu0
    %v573 = vadd.f32 %v357, %v572
    %574 = vdwg.mxu0
    %575 = vmatprep.subr.mxu0 %v215
    %576 = vmatpush1.msra.mxu0 %v214
    %577 = vmatprep.subr.mxu0 %v219
    %578 = vmatpush1.msra.mxu0 %v218
    %579 = vmatprep.subr.mxu0 %v223
    %580 = vmatpush1.msra.mxu0 %v222
    %581 = vmatprep.subr.mxu0 %v227
    %582 = vmatpush1.msra.mxu0 %v226
    %583 = vmatprep.subr.mxu0 %v231
    %584 = vmatpush1.msra.mxu0 %v230
    %585 = vmatprep.subr.mxu0 %v235
    %586 = vmatpush1.msra.mxu0 %v234
    %587 = vmatprep.subr.mxu0 %v239
    %588 = vmatpush1.msra.mxu0 %v238
    %589 = vmatprep.subr.mxu0 %v243
    %590 = vmatpush1.msra.mxu0 %v242
    %591 = vmatprep.subr.mxu0 %v247
    %592 = vmatpush1.msra.mxu0 %v246
    %593 = vmatprep.subr.mxu0 %v251
    %594 = vmatpush1.msra.mxu0 %v250
    %595 = vmatprep.subr.mxu0 %v255
    %596 = vmatpush1.msra.mxu0 %v254
    %597 = vmatprep.subr.mxu0 %v259
    %598 = vmatpush1.msra.mxu0 %v258
    %599 = vmatprep.subr.mxu0 %v263
    %600 = vmatpush1.msra.mxu0 %v262
    %601 = vmatprep.subr.mxu0 %v267
    %602 = vmatpush1.msra.mxu0 %v266
    %603 = vmatprep.subr.mxu0 %v271
    %604 = vmatpush1.msra.mxu0 %v270
    %605 = vmatprep.subr.mxu0 %v275
    %606 = vmatpush1.msra.mxu0 %v274
    %607 = vmatprep.subr.mxu0 %v279
    %608 = vmatpush1.msra.mxu0 %v278
    %609 = vmatprep.subr.mxu0 %v283
    %610 = vmatpush1.msra.mxu0 %v282
    %611 = vmatprep.subr.mxu0 %v287
    %612 = vmatpush1.msra.mxu0 %v286
    %613 = vmatprep.subr.mxu0 %v291
    %614 = vmatpush1.msra.mxu0 %v290
    %615 = vmatprep.subr.mxu0 %v295
    %616 = vmatpush1.msra.mxu0 %v294
    %617 = vmatprep.subr.mxu0 %v299
    %618 = vmatpush1.msra.mxu0 %v298
    %619 = vmatprep.subr.mxu0 %v303
    %620 = vmatpush1.msra.mxu0 %v302
    %621 = vmatprep.subr.mxu0 %v307
    %622 = vmatpush1.msra.mxu0 %v306
    %623 = vmatprep.subr.mxu0 %v311
    %624 = vmatpush1.msra.mxu0 %v310
    %625 = vmatprep.subr.mxu0 %v315
    %626 = vmatpush1.msra.mxu0 %v314
    %627 = vmatprep.subr.mxu0 %v319
    %628 = vmatpush1.msra.mxu0 %v318
    %629 = vmatprep.subr.mxu0 %v323
    %630 = vmatpush1.msra.mxu0 %v322
    %631 = vmatprep.subr.mxu0 %v327
    %632 = vmatpush1.msra.mxu0 %v326
    %633 = vmatprep.subr.mxu0 %v331
    %634 = vmatpush1.msra.mxu0 %v330
    %635 = vmatprep.subr.mxu0 %v335
    %636 = vmatpush1.msra.mxu0 %v334
    %637 = vmatprep.subr.mxu0 %v339
    %638 = vmatpush1.msra.mxu0 %v338
    %639 = vmatprep.mubr.f32.mxu0 %v83
    %640 = vmatmul.mubr.f32.gmra.mrb[0].mxu0 %v82
    %v641 = vpop.f32.mrb[0].mxu0
    %v642 = vadd.f32 %v571, %v641
    %v643 = vpop.f32.mrb[0].mxu0
    %v644 = vadd.f32 %v573, %v643
    %645 = vdwg.mxu0
    %v646 = vmax.f32 %v500, 0.0
    %v647 = vmax.f32 %v502, 0.0
    %v648 = vmax.f32 %v642, 0.0
    %v649 = vmax.f32 %v644, 0.0
    %v650 = vld [vmem:[#allocation7] sm:$0xff]
    %v651 = vld [vmem:[#allocation7 + $0x8] sm:$0xff]
    %v652 = vld [vmem:[#allocation7 + $0x10] sm:$0xff]
    %v653 = vld [vmem:[#allocation7 + $0x18] sm:$0xff]
    %v654 = vld [vmem:[#allocation7 + $0x20] sm:$0xff]
    %v655 = vld [vmem:[#allocation7 + $0x28] sm:$0xff]
    %v656 = vld [vmem:[#allocation7 + $0x30] sm:$0xff]
    %v657 = vld [vmem:[#allocation7 + $0x38] sm:$0xff]
    %v658 = vld [vmem:[#allocation7 + $0x40] sm:$0xff]
    %v659 = vld [vmem:[#allocation7 + $0x48] sm:$0xff]
    %v660 = vld [vmem:[#allocation7 + $0x50] sm:$0xff]
    %v661 = vld [vmem:[#allocation7 + $0x58] sm:$0xff]
    %v662 = vld [vmem:[#allocation7 + $0x60] sm:$0xff]
    %v663 = vld [vmem:[#allocation7 + $0x68] sm:$0xff]
    %v664 = vld [vmem:[#allocation7 + $0x70] sm:$0xff]
    %v665 = vld [vmem:[#allocation7 + $0x78] sm:$0xff]
    %v666 = vld [vmem:[#allocation7 + $0x80] sm:$0xff]
    %v667 = vld [vmem:[#allocation7 + $0x88] sm:$0xff]
    %v668 = vld [vmem:[#allocation7 + $0x90] sm:$0xff]
    %v669 = vld [vmem:[#allocation7 + $0x98] sm:$0xff]
    %v670 = vld [vmem:[#allocation7 + $0xa0] sm:$0xff]
    %v671 = vld [vmem:[#allocation7 + $0xa8] sm:$0xff]
    %v672 = vld [vmem:[#allocation7 + $0xb0] sm:$0xff]
    %v673 = vld [vmem:[#allocation7 + $0xb8] sm:$0xff]
    %v674 = vld [vmem:[#allocation7 + $0xc0] sm:$0xff]
    %v675 = vld [vmem:[#allocation7 + $0xc8] sm:$0xff]
    %v676 = vld [vmem:[#allocation7 + $0xd0] sm:$0xff]
    %v677 = vld [vmem:[#allocation7 + $0xd8] sm:$0xff]
    %v678 = vld [vmem:[#allocation7 + $0xe0] sm:$0xff]
    %v679 = vld [vmem:[#allocation7 + $0xe8] sm:$0xff]
    %v680 = vld [vmem:[#allocation7 + $0xf0] sm:$0xff]
    %v681 = vld [vmem:[#allocation7 + $0xf8] sm:$0xff]
    %v682 = vld [vmem:[#allocation7 + $0x100] sm:$0xff]
    %v683 = vld [vmem:[#allocation7 + $0x108] sm:$0xff]
    %v684 = vld [vmem:[#allocation7 + $0x110] sm:$0xff]
    %v685 = vld [vmem:[#allocation7 + $0x118] sm:$0xff]
    %v686 = vld [vmem:[#allocation7 + $0x120] sm:$0xff]
    %v687 = vld [vmem:[#allocation7 + $0x128] sm:$0xff]
    %v688 = vld [vmem:[#allocation7 + $0x130] sm:$0xff]
    %v689 = vld [vmem:[#allocation7 + $0x138] sm:$0xff]
    %v690 = vld [vmem:[#allocation7 + $0x140] sm:$0xff]
    %v691 = vld [vmem:[#allocation7 + $0x148] sm:$0xff]
    %v692 = vld [vmem:[#allocation7 + $0x150] sm:$0xff]
    %v693 = vld [vmem:[#allocation7 + $0x158] sm:$0xff]
    %v694 = vld [vmem:[#allocation7 + $0x160] sm:$0xff]
    %v695 = vld [vmem:[#allocation7 + $0x168] sm:$0xff]
    %v696 = vld [vmem:[#allocation7 + $0x170] sm:$0xff]
    %v697 = vld [vmem:[#allocation7 + $0x178] sm:$0xff]
    %v698 = vld [vmem:[#allocation7 + $0x180] sm:$0xff]
    %v699 = vld [vmem:[#allocation7 + $0x188] sm:$0xff]
    %v700 = vld [vmem:[#allocation7 + $0x190] sm:$0xff]
    %v701 = vld [vmem:[#allocation7 + $0x198] sm:$0xff]
    %v702 = vld [vmem:[#allocation7 + $0x1a0] sm:$0xff]
    %v703 = vld [vmem:[#allocation7 + $0x1a8] sm:$0xff]
    %v704 = vld [vmem:[#allocation7 + $0x1b0] sm:$0xff]
    %v705 = vld [vmem:[#allocation7 + $0x1b8] sm:$0xff]
    %v706 = vld [vmem:[#allocation7 + $0x1c0] sm:$0xff]
    %v707 = vld [vmem:[#allocation7 + $0x1c8] sm:$0xff]
    %v708 = vld [vmem:[#allocation7 + $0x1d0] sm:$0xff]
    %v709 = vld [vmem:[#allocation7 + $0x1d8] sm:$0xff]
    %v710 = vld [vmem:[#allocation7 + $0x1e0] sm:$0xff]
    %v711 = vld [vmem:[#allocation7 + $0x1e8] sm:$0xff]
    %v712 = vld [vmem:[#allocation7 + $0x1f0] sm:$0xff]
    %v713 = vld [vmem:[#allocation7 + $0x1f8] sm:$0xff]
    %v714 = vld [vmem:[#allocation7 + $0x200] sm:$0xff]
    %v715 = vld [vmem:[#allocation7 + $0x208] sm:$0xff]
    %v716 = vld [vmem:[#allocation7 + $0x210] sm:$0xff]
    %v717 = vld [vmem:[#allocation7 + $0x218] sm:$0xff]
    %v718 = vld [vmem:[#allocation7 + $0x220] sm:$0xff]
    %v719 = vld [vmem:[#allocation7 + $0x228] sm:$0xff]
    %v720 = vld [vmem:[#allocation7 + $0x230] sm:$0xff]
    %v721 = vld [vmem:[#allocation7 + $0x238] sm:$0xff]
    %v722 = vld [vmem:[#allocation7 + $0x240] sm:$0xff]
    %v723 = vld [vmem:[#allocation7 + $0x248] sm:$0xff]
    %v724 = vld [vmem:[#allocation7 + $0x250] sm:$0xff]
    %v725 = vld [vmem:[#allocation7 + $0x258] sm:$0xff]
    %v726 = vld [vmem:[#allocation7 + $0x260] sm:$0xff]
    %v727 = vld [vmem:[#allocation7 + $0x268] sm:$0xff]
    %v728 = vld [vmem:[#allocation7 + $0x270] sm:$0xff]
    %v729 = vld [vmem:[#allocation7 + $0x278] sm:$0xff]
    %v730 = vld [vmem:[#allocation7 + $0x280] sm:$0xff]
    %v731 = vld [vmem:[#allocation7 + $0x288] sm:$0xff]
    %v732 = vld [vmem:[#allocation7 + $0x290] sm:$0xff]
    %v733 = vld [vmem:[#allocation7 + $0x298] sm:$0xff]
    %v734 = vld [vmem:[#allocation7 + $0x2a0] sm:$0xff]
    %v735 = vld [vmem:[#allocation7 + $0x2a8] sm:$0xff]
    %v736 = vld [vmem:[#allocation7 + $0x2b0] sm:$0xff]
    %v737 = vld [vmem:[#allocation7 + $0x2b8] sm:$0xff]
    %v738 = vld [vmem:[#allocation7 + $0x2c0] sm:$0xff]
    %v739 = vld [vmem:[#allocation7 + $0x2c8] sm:$0xff]
    %v740 = vld [vmem:[#allocation7 + $0x2d0] sm:$0xff]
    %v741 = vld [vmem:[#allocation7 + $0x2d8] sm:$0xff]
    %v742 = vld [vmem:[#allocation7 + $0x2e0] sm:$0xff]
    %v743 = vld [vmem:[#allocation7 + $0x2e8] sm:$0xff]
    %v744 = vld [vmem:[#allocation7 + $0x2f0] sm:$0xff]
    %v745 = vld [vmem:[#allocation7 + $0x2f8] sm:$0xff]
    %v746 = vld [vmem:[#allocation7 + $0x300] sm:$0xff]
    %v747 = vld [vmem:[#allocation7 + $0x308] sm:$0xff]
    %v748 = vld [vmem:[#allocation7 + $0x310] sm:$0xff]
    %v749 = vld [vmem:[#allocation7 + $0x318] sm:$0xff]
    %v750 = vld [vmem:[#allocation7 + $0x320] sm:$0xff]
    %v751 = vld [vmem:[#allocation7 + $0x328] sm:$0xff]
    %v752 = vld [vmem:[#allocation7 + $0x330] sm:$0xff]
    %v753 = vld [vmem:[#allocation7 + $0x338] sm:$0xff]
    %v754 = vld [vmem:[#allocation7 + $0x340] sm:$0xff]
    %v755 = vld [vmem:[#allocation7 + $0x348] sm:$0xff]
    %v756 = vld [vmem:[#allocation7 + $0x350] sm:$0xff]
    %v757 = vld [vmem:[#allocation7 + $0x358] sm:$0xff]
    %v758 = vld [vmem:[#allocation7 + $0x360] sm:$0xff]
    %v759 = vld [vmem:[#allocation7 + $0x368] sm:$0xff]
    %v760 = vld [vmem:[#allocation7 + $0x370] sm:$0xff]
    %v761 = vld [vmem:[#allocation7 + $0x378] sm:$0xff]
    %v762 = vld [vmem:[#allocation7 + $0x380] sm:$0xff]
    %v763 = vld [vmem:[#allocation7 + $0x388] sm:$0xff]
    %v764 = vld [vmem:[#allocation7 + $0x390] sm:$0xff]
    %v765 = vld [vmem:[#allocation7 + $0x398] sm:$0xff]
    %v766 = vld [vmem:[#allocation7 + $0x3a0] sm:$0xff]
    %v767 = vld [vmem:[#allocation7 + $0x3a8] sm:$0xff]
    %v768 = vld [vmem:[#allocation7 + $0x3b0] sm:$0xff]
    %v769 = vld [vmem:[#allocation7 + $0x3b8] sm:$0xff]
    %v770 = vld [vmem:[#allocation7 + $0x3c0] sm:$0xff]
    %v771 = vld [vmem:[#allocation7 + $0x3c8] sm:$0xff]
    %v772 = vld [vmem:[#allocation7 + $0x3d0] sm:$0xff]
    %v773 = vld [vmem:[#allocation7 + $0x3d8] sm:$0xff]
    %v774 = vld [vmem:[#allocation7 + $0x3e0] sm:$0xff]
    %v775 = vld [vmem:[#allocation7 + $0x3e8] sm:$0xff]
    %v776 = vld [vmem:[#allocation7 + $0x3f0] sm:$0xff]
    %v777 = vld [vmem:[#allocation7 + $0x3f8] sm:$0xff]
    %v778 = vld [vmem:[#allocation7 + $0x400] sm:$0xff]
    %v779 = vld [vmem:[#allocation7 + $0x408] sm:$0xff]
    %v780 = vld [vmem:[#allocation7 + $0x410] sm:$0xff]
    %v781 = vld [vmem:[#allocation7 + $0x418] sm:$0xff]
    %v782 = vld [vmem:[#allocation7 + $0x420] sm:$0xff]
    %v783 = vld [vmem:[#allocation7 + $0x428] sm:$0xff]
    %v784 = vld [vmem:[#allocation7 + $0x430] sm:$0xff]
    %v785 = vld [vmem:[#allocation7 + $0x438] sm:$0xff]
    %v786 = vld [vmem:[#allocation7 + $0x440] sm:$0xff]
    %v787 = vld [vmem:[#allocation7 + $0x448] sm:$0xff]
    %v788 = vld [vmem:[#allocation7 + $0x450] sm:$0xff]
    %v789 = vld [vmem:[#allocation7 + $0x458] sm:$0xff]
    %v790 = vld [vmem:[#allocation7 + $0x460] sm:$0xff]
    %v791 = vld [vmem:[#allocation7 + $0x468] sm:$0xff]
    %v792 = vld [vmem:[#allocation7 + $0x470] sm:$0xff]
    %v793 = vld [vmem:[#allocation7 + $0x478] sm:$0xff]
    %v794 = vld [vmem:[#allocation7 + $0x480] sm:$0xff]
    %v795 = vld [vmem:[#allocation7 + $0x488] sm:$0xff]
    %v796 = vld [vmem:[#allocation7 + $0x490] sm:$0xff]
    %v797 = vld [vmem:[#allocation7 + $0x498] sm:$0xff]
    %v798 = vld [vmem:[#allocation7 + $0x4a0] sm:$0xff]
    %v799 = vld [vmem:[#allocation7 + $0x4a8] sm:$0xff]
    %v800 = vld [vmem:[#allocation7 + $0x4b0] sm:$0xff]
    %v801 = vld [vmem:[#allocation7 + $0x4b8] sm:$0xff]
    %v802 = vld [vmem:[#allocation7 + $0x4c0] sm:$0xff]
    %v803 = vld [vmem:[#allocation7 + $0x4c8] sm:$0xff]
    %v804 = vld [vmem:[#allocation7 + $0x4d0] sm:$0xff]
    %v805 = vld [vmem:[#allocation7 + $0x4d8] sm:$0xff]
    %v806 = vld [vmem:[#allocation7 + $0x4e0] sm:$0xff]
    %v807 = vld [vmem:[#allocation7 + $0x4e8] sm:$0xff]
    %v808 = vld [vmem:[#allocation7 + $0x4f0] sm:$0xff]
    %v809 = vld [vmem:[#allocation7 + $0x4f8] sm:$0xff]
    %v810 = vld [vmem:[#allocation7 + $0x500] sm:$0xff]
    %v811 = vld [vmem:[#allocation7 + $0x508] sm:$0xff]
    %v812 = vld [vmem:[#allocation7 + $0x510] sm:$0xff]
    %v813 = vld [vmem:[#allocation7 + $0x518] sm:$0xff]
    %v814 = vld [vmem:[#allocation7 + $0x520] sm:$0xff]
    %v815 = vld [vmem:[#allocation7 + $0x528] sm:$0xff]
    %v816 = vld [vmem:[#allocation7 + $0x530] sm:$0xff]
    %v817 = vld [vmem:[#allocation7 + $0x538] sm:$0xff]
    %v818 = vld [vmem:[#allocation7 + $0x540] sm:$0xff]
    %v819 = vld [vmem:[#allocation7 + $0x548] sm:$0xff]
    %v820 = vld [vmem:[#allocation7 + $0x550] sm:$0xff]
    %v821 = vld [vmem:[#allocation7 + $0x558] sm:$0xff]
    %v822 = vld [vmem:[#allocation7 + $0x560] sm:$0xff]
    %v823 = vld [vmem:[#allocation7 + $0x568] sm:$0xff]
    %v824 = vld [vmem:[#allocation7 + $0x570] sm:$0xff]
    %v825 = vld [vmem:[#allocation7 + $0x578] sm:$0xff]
    %v826 = vld [vmem:[#allocation7 + $0x580] sm:$0xff]
    %v827 = vld [vmem:[#allocation7 + $0x588] sm:$0xff]
    %v828 = vld [vmem:[#allocation7 + $0x590] sm:$0xff]
    %v829 = vld [vmem:[#allocation7 + $0x598] sm:$0xff]
    %v830 = vld [vmem:[#allocation7 + $0x5a0] sm:$0xff]
    %v831 = vld [vmem:[#allocation7 + $0x5a8] sm:$0xff]
    %v832 = vld [vmem:[#allocation7 + $0x5b0] sm:$0xff]
    %v833 = vld [vmem:[#allocation7 + $0x5b8] sm:$0xff]
    %v834 = vld [vmem:[#allocation7 + $0x5c0] sm:$0xff]
    %v835 = vld [vmem:[#allocation7 + $0x5c8] sm:$0xff]
    %v836 = vld [vmem:[#allocation7 + $0x5d0] sm:$0xff]
    %v837 = vld [vmem:[#allocation7 + $0x5d8] sm:$0xff]
    %v838 = vld [vmem:[#allocation7 + $0x5e0] sm:$0xff]
    %v839 = vld [vmem:[#allocation7 + $0x5e8] sm:$0xff]
    %v840 = vld [vmem:[#allocation7 + $0x5f0] sm:$0xff]
    %v841 = vld [vmem:[#allocation7 + $0x5f8] sm:$0xff]
    %v842 = vld [vmem:[#allocation7 + $0x600] sm:$0xff]
    %v843 = vld [vmem:[#allocation7 + $0x608] sm:$0xff]
    %v844 = vld [vmem:[#allocation7 + $0x610] sm:$0xff]
    %v845 = vld [vmem:[#allocation7 + $0x618] sm:$0xff]
    %v846 = vld [vmem:[#allocation7 + $0x620] sm:$0xff]
    %v847 = vld [vmem:[#allocation7 + $0x628] sm:$0xff]
    %v848 = vld [vmem:[#allocation7 + $0x630] sm:$0xff]
    %v849 = vld [vmem:[#allocation7 + $0x638] sm:$0xff]
    %v850 = vld [vmem:[#allocation7 + $0x640] sm:$0xff]
    %v851 = vld [vmem:[#allocation7 + $0x648] sm:$0xff]
    %v852 = vld [vmem:[#allocation7 + $0x650] sm:$0xff]
    %v853 = vld [vmem:[#allocation7 + $0x658] sm:$0xff]
    %v854 = vld [vmem:[#allocation7 + $0x660] sm:$0xff]
    %v855 = vld [vmem:[#allocation7 + $0x668] sm:$0xff]
    %v856 = vld [vmem:[#allocation7 + $0x670] sm:$0xff]
    %v857 = vld [vmem:[#allocation7 + $0x678] sm:$0xff]
    %v858 = vld [vmem:[#allocation7 + $0x680] sm:$0xff]
    %v859 = vld [vmem:[#allocation7 + $0x688] sm:$0xff]
    %v860 = vld [vmem:[#allocation7 + $0x690] sm:$0xff]
    %v861 = vld [vmem:[#allocation7 + $0x698] sm:$0xff]
    %v862 = vld [vmem:[#allocation7 + $0x6a0] sm:$0xff]
    %v863 = vld [vmem:[#allocation7 + $0x6a8] sm:$0xff]
    %v864 = vld [vmem:[#allocation7 + $0x6b0] sm:$0xff]
    %v865 = vld [vmem:[#allocation7 + $0x6b8] sm:$0xff]
    %v866 = vld [vmem:[#allocation7 + $0x6c0] sm:$0xff]
    %v867 = vld [vmem:[#allocation7 + $0x6c8] sm:$0xff]
    %v868 = vld [vmem:[#allocation7 + $0x6d0] sm:$0xff]
    %v869 = vld [vmem:[#allocation7 + $0x6d8] sm:$0xff]
    %v870 = vld [vmem:[#allocation7 + $0x6e0] sm:$0xff]
    %v871 = vld [vmem:[#allocation7 + $0x6e8] sm:$0xff]
    %v872 = vld [vmem:[#allocation7 + $0x6f0] sm:$0xff]
    %v873 = vld [vmem:[#allocation7 + $0x6f8] sm:$0xff]
    %v874 = vld [vmem:[#allocation7 + $0x700] sm:$0xff]
    %v875 = vld [vmem:[#allocation7 + $0x708] sm:$0xff]
    %v876 = vld [vmem:[#allocation7 + $0x710] sm:$0xff]
    %v877 = vld [vmem:[#allocation7 + $0x718] sm:$0xff]
    %v878 = vld [vmem:[#allocation7 + $0x720] sm:$0xff]
    %v879 = vld [vmem:[#allocation7 + $0x728] sm:$0xff]
    %v880 = vld [vmem:[#allocation7 + $0x730] sm:$0xff]
    %v881 = vld [vmem:[#allocation7 + $0x738] sm:$0xff]
    %v882 = vld [vmem:[#allocation7 + $0x740] sm:$0xff]
    %v883 = vld [vmem:[#allocation7 + $0x748] sm:$0xff]
    %v884 = vld [vmem:[#allocation7 + $0x750] sm:$0xff]
    %v885 = vld [vmem:[#allocation7 + $0x758] sm:$0xff]
    %v886 = vld [vmem:[#allocation7 + $0x760] sm:$0xff]
    %v887 = vld [vmem:[#allocation7 + $0x768] sm:$0xff]
    %v888 = vld [vmem:[#allocation7 + $0x770] sm:$0xff]
    %v889 = vld [vmem:[#allocation7 + $0x778] sm:$0xff]
    %v890 = vld [vmem:[#allocation7 + $0x780] sm:$0xff]
    %v891 = vld [vmem:[#allocation7 + $0x788] sm:$0xff]
    %v892 = vld [vmem:[#allocation7 + $0x790] sm:$0xff]
    %v893 = vld [vmem:[#allocation7 + $0x798] sm:$0xff]
    %v894 = vld [vmem:[#allocation7 + $0x7a0] sm:$0xff]
    %v895 = vld [vmem:[#allocation7 + $0x7a8] sm:$0xff]
    %v896 = vld [vmem:[#allocation7 + $0x7b0] sm:$0xff]
    %v897 = vld [vmem:[#allocation7 + $0x7b8] sm:$0xff]
    %v898 = vld [vmem:[#allocation7 + $0x7c0] sm:$0xff]
    %v899 = vld [vmem:[#allocation7 + $0x7c8] sm:$0xff]
    %v900 = vld [vmem:[#allocation7 + $0x7d0] sm:$0xff]
    %v901 = vld [vmem:[#allocation7 + $0x7d8] sm:$0xff]
    %v902 = vld [vmem:[#allocation7 + $0x7e0] sm:$0xff]
    %v903 = vld [vmem:[#allocation7 + $0x7e8] sm:$0xff]
    %v904 = vld [vmem:[#allocation7 + $0x7f0] sm:$0xff]
    %v905 = vld [vmem:[#allocation7 + $0x7f8] sm:$0xff]
    %v906 = vld [vmem:[%s4] sm:$0xf]
    %v908 = vlaneseq
    %v909 = vshrl.u32 %v908, 7
    %v910 = vsub.s32 0, %v909
    %v911 = vrot.slane %v906, %v910
    %v912 = vlaneseq
    %v913 = vshrl.u32 %v912, 7
    %v914 = vsub.s32 1, %v913
    %v915 = vrot.slane %v906, %v914
    %v916 = vlaneseq
    %v917 = vshrl.u32 %v916, 7
    %v918 = vsub.s32 2, %v917
    %v919 = vrot.slane %v906, %v918
    %v920 = vlaneseq
    %v921 = vshrl.u32 %v920, 7
    %v922 = vsub.s32 3, %v921
    %v923 = vrot.slane %v906, %v922
    %928 = vmatprep.subr.mxu0 %v651
    %929 = vmatpush1.msra.mxu0 %v650
    %930 = vmatprep.subr.mxu0 %v655
    %931 = vmatpush1.msra.mxu0 %v654
    %932 = vmatprep.subr.mxu0 %v659
    %933 = vmatpush1.msra.mxu0 %v658
    %934 = vmatprep.subr.mxu0 %v663
    %935 = vmatpush1.msra.mxu0 %v662
    %936 = vmatprep.subr.mxu0 %v667
    %937 = vmatpush1.msra.mxu0 %v666
    %938 = vmatprep.subr.mxu0 %v671
    %939 = vmatpush1.msra.mxu0 %v670
    %940 = vmatprep.subr.mxu0 %v675
    %941 = vmatpush1.msra.mxu0 %v674
    %942 = vmatprep.subr.mxu0 %v679
    %943 = vmatpush1.msra.mxu0 %v678
    %944 = vmatprep.subr.mxu0 %v683
    %945 = vmatpush1.msra.mxu0 %v682
    %946 = vmatprep.subr.mxu0 %v687
    %947 = vmatpush1.msra.mxu0 %v686
    %948 = vmatprep.subr.mxu0 %v691
    %949 = vmatpush1.msra.mxu0 %v690
    %950 = vmatprep.subr.mxu0 %v695
    %951 = vmatpush1.msra.mxu0 %v694
    %952 = vmatprep.subr.mxu0 %v699
    %953 = vmatpush1.msra.mxu0 %v698
    %954 = vmatprep.subr.mxu0 %v703
    %955 = vmatpush1.msra.mxu0 %v702
    %956 = vmatprep.subr.mxu0 %v707
    %957 = vmatpush1.msra.mxu0 %v706
    %958 = vmatprep.subr.mxu0 %v711
    %959 = vmatpush1.msra.mxu0 %v710
    %960 = vmatprep.subr.mxu0 %v715
    %961 = vmatpush1.msra.mxu0 %v714
    %962 = vmatprep.subr.mxu0 %v719
    %963 = vmatpush1.msra.mxu0 %v718
    %964 = vmatprep.subr.mxu0 %v723
    %965 = vmatpush1.msra.mxu0 %v722
    %966 = vmatprep.subr.mxu0 %v727
    %967 = vmatpush1.msra.mxu0 %v726
    %968 = vmatprep.subr.mxu0 %v731
    %969 = vmatpush1.msra.mxu0 %v730
    %970 = vmatprep.subr.mxu0 %v735
    %971 = vmatpush1.msra.mxu0 %v734
    %972 = vmatprep.subr.mxu0 %v739
    %973 = vmatpush1.msra.mxu0 %v738
    %974 = vmatprep.subr.mxu0 %v743
    %975 = vmatpush1.msra.mxu0 %v742
    %976 = vmatprep.subr.mxu0 %v747
    %977 = vmatpush1.msra.mxu0 %v746
    %978 = vmatprep.subr.mxu0 %v751
    %979 = vmatpush1.msra.mxu0 %v750
    %980 = vmatprep.subr.mxu0 %v755
    %981 = vmatpush1.msra.mxu0 %v754
    %982 = vmatprep.subr.mxu0 %v759
    %983 = vmatpush1.msra.mxu0 %v758
    %984 = vmatprep.subr.mxu0 %v763
    %985 = vmatpush1.msra.mxu0 %v762
    %986 = vmatprep.subr.mxu0 %v767
    %987 = vmatpush1.msra.mxu0 %v766
    %988 = vmatprep.subr.mxu0 %v771
    %989 = vmatpush1.msra.mxu0 %v770
    %990 = vmatprep.subr.mxu0 %v775
    %991 = vmatpush1.msra.mxu0 %v774
    %992 = vmatprep.mubr.f32.mxu0 %v647
    %993 = vmatmul.mubr.f32.gmra.mrb[0].mxu0 %v646
    %v994 = vpop.f32.mrb[0].mxu0
    %v995 = vadd.f32 %v911, %v994
    %v996 = vpop.f32.mrb[0].mxu0
    %v997 = vadd.f32 %v915, %v996
    %998 = vdwg.mxu0
    %999 = vmatprep.subr.mxu0 %v779
    %1000 = vmatpush1.msra.mxu0 %v778
    %1001 = vmatprep.subr.mxu0 %v783
    %1002 = vmatpush1.msra.mxu0 %v782
    %1003 = vmatprep.subr.mxu0 %v787
    %1004 = vmatpush1.msra.mxu0 %v786
    %1005 = vmatprep.subr.mxu0 %v791
    %1006 = vmatpush1.msra.mxu0 %v790
    %1007 = vmatprep.subr.mxu0 %v795
    %1008 = vmatpush1.msra.mxu0 %v794
    %1009 = vmatprep.subr.mxu0 %v799
    %1010 = vmatpush1.msra.mxu0 %v798
    %1011 = vmatprep.subr.mxu0 %v803
    %1012 = vmatpush1.msra.mxu0 %v802
    %1013 = vmatprep.subr.mxu0 %v807
    %1014 = vmatpush1.msra.mxu0 %v806
    %1015 = vmatprep.subr.mxu0 %v811
    %1016 = vmatpush1.msra.mxu0 %v810
    %1017 = vmatprep.subr.mxu0 %v815
    %1018 = vmatpush1.msra.mxu0 %v814
    %1019 = vmatprep.subr.mxu0 %v819
    %1020 = vmatpush1.msra.mxu0 %v818
    %1021 = vmatprep.subr.mxu0 %v823
    %1022 = vmatpush1.msra.mxu0 %v822
    %1023 = vmatprep.subr.mxu0 %v827
    %1024 = vmatpush1.msra.mxu0 %v826
    %1025 = vmatprep.subr.mxu0 %v831
    %1026 = vmatpush1.msra.mxu0 %v830
    %1027 = vmatprep.subr.mxu0 %v835
    %1028 = vmatpush1.msra.mxu0 %v834
    %1029 = vmatprep.subr.mxu0 %v839
    %1030 = vmatpush1.msra.mxu0 %v838
    %1031 = vmatprep.subr.mxu0 %v843
    %1032 = vmatpush1.msra.mxu0 %v842
    %1033 = vmatprep.subr.mxu0 %v847
    %1034 = vmatpush1.msra.mxu0 %v846
    %1035 = vmatprep.subr.mxu0 %v851
    %1036 = vmatpush1.msra.mxu0 %v850
    %1037 = vmatprep.subr.mxu0 %v855
    %1038 = vmatpush1.msra.mxu0 %v854
    %1039 = vmatprep.subr.mxu0 %v859
    %1040 = vmatpush1.msra.mxu0 %v858
    %1041 = vmatprep.subr.mxu0 %v863
    %1042 = vmatpush1.msra.mxu0 %v862
    %1043 = vmatprep.subr.mxu0 %v867
    %1044 = vmatpush1.msra.mxu0 %v866
    %1045 = vmatprep.subr.mxu0 %v871
    %1046 = vmatpush1.msra.mxu0 %v870
    %1047 = vmatprep.subr.mxu0 %v875
    %1048 = vmatpush1.msra.mxu0 %v874
    %1049 = vmatprep.subr.mxu0 %v879
    %1050 = vmatpush1.msra.mxu0 %v878
    %1051 = vmatprep.subr.mxu0 %v883
    %1052 = vmatpush1.msra.mxu0 %v882
    %1053 = vmatprep.subr.mxu0 %v887
    %1054 = vmatpush1.msra.mxu0 %v886
    %1055 = vmatprep.subr.mxu0 %v891
    %1056 = vmatpush1.msra.mxu0 %v890
    %1057 = vmatprep.subr.mxu0 %v895
    %1058 = vmatpush1.msra.mxu0 %v894
    %1059 = vmatprep.subr.mxu0 %v899
    %1060 = vmatpush1.msra.mxu0 %v898
    %1061 = vmatprep.subr.mxu0 %v903
    %1062 = vmatpush1.msra.mxu0 %v902
    %1063 = vmatprep.mubr.f32.mxu0 %v649
    %1064 = vmatmul.mubr.f32.gmra.mrb[0].mxu0 %v648
    %v1065 = vpop.f32.mrb[0].mxu0
    %v1066 = vadd.f32 %v995, %v1065
    %v1067 = vpop.f32.mrb[0].mxu0
    %v1068 = vadd.f32 %v997, %v1067
    %1069 = vdwg.mxu0
    %1070 = vmatprep.subr.mxu0 %v653
    %1071 = vmatpush1.msra.mxu0 %v652
    %1072 = vmatprep.subr.mxu0 %v657
    %1073 = vmatpush1.msra.mxu0 %v656
    %1074 = vmatprep.subr.mxu0 %v661
    %1075 = vmatpush1.msra.mxu0 %v660
    %1076 = vmatprep.subr.mxu0 %v665
    %1077 = vmatpush1.msra.mxu0 %v664
    %1078 = vmatprep.subr.mxu0 %v669
    %1079 = vmatpush1.msra.mxu0 %v668
    %1080 = vmatprep.subr.mxu0 %v673
    %1081 = vmatpush1.msra.mxu0 %v672
    %1082 = vmatprep.subr.mxu0 %v677
    %1083 = vmatpush1.msra.mxu0 %v676
    %1084 = vmatprep.subr.mxu0 %v681
    %1085 = vmatpush1.msra.mxu0 %v680
    %1086 = vmatprep.subr.mxu0 %v685
    %1087 = vmatpush1.msra.mxu0 %v684
    %1088 = vmatprep.subr.mxu0 %v689
    %1089 = vmatpush1.msra.mxu0 %v688
    %1090 = vmatprep.subr.mxu0 %v693
    %1091 = vmatpush1.msra.mxu0 %v692
    %1092 = vmatprep.subr.mxu0 %v697
    %1093 = vmatpush1.msra.mxu0 %v696
    %1094 = vmatprep.subr.mxu0 %v701
    %1095 = vmatpush1.msra.mxu0 %v700
    %1096 = vmatprep.subr.mxu0 %v705
    %1097 = vmatpush1.msra.mxu0 %v704
    %1098 = vmatprep.subr.mxu0 %v709
    %1099 = vmatpush1.msra.mxu0 %v708
    %1100 = vmatprep.subr.mxu0 %v713
    %1101 = vmatpush1.msra.mxu0 %v712
    %1102 = vmatprep.subr.mxu0 %v717
    %1103 = vmatpush1.msra.mxu0 %v716
    %1104 = vmatprep.subr.mxu0 %v721
    %1105 = vmatpush1.msra.mxu0 %v720
    %1106 = vmatprep.subr.mxu0 %v725
    %1107 = vmatpush1.msra.mxu0 %v724
    %1108 = vmatprep.subr.mxu0 %v729
    %1109 = vmatpush1.msra.mxu0 %v728
    %1110 = vmatprep.subr.mxu0 %v733
    %1111 = vmatpush1.msra.mxu0 %v732
    %1112 = vmatprep.subr.mxu0 %v737
    %1113 = vmatpush1.msra.mxu0 %v736
    %1114 = vmatprep.subr.mxu0 %v741
    %1115 = vmatpush1.msra.mxu0 %v740
    %1116 = vmatprep.subr.mxu0 %v745
    %1117 = vmatpush1.msra.mxu0 %v744
    %1118 = vmatprep.subr.mxu0 %v749
    %1119 = vmatpush1.msra.mxu0 %v748
    %1120 = vmatprep.subr.mxu0 %v753
    %1121 = vmatpush1.msra.mxu0 %v752
    %1122 = vmatprep.subr.mxu0 %v757
    %1123 = vmatpush1.msra.mxu0 %v756
    %1124 = vmatprep.subr.mxu0 %v761
    %1125 = vmatpush1.msra.mxu0 %v760
    %1126 = vmatprep.subr.mxu0 %v765
    %1127 = vmatpush1.msra.mxu0 %v764
    %1128 = vmatprep.subr.mxu0 %v769
    %1129 = vmatpush1.msra.mxu0 %v768
    %1130 = vmatprep.subr.mxu0 %v773
    %1131 = vmatpush1.msra.mxu0 %v772
    %1132 = vmatprep.subr.mxu0 %v777
    %1133 = vmatpush1.msra.mxu0 %v776
    %1134 = vmatprep.mubr.f32.mxu0 %v647
    %1135 = vmatmul.mubr.f32.gmra.mrb[0].mxu0 %v646
    %v1136 = vpop.f32.mrb[0].mxu0
    %v1137 = vadd.f32 %v919, %v1136
    %v1138 = vpop.f32.mrb[0].mxu0
    %v1139 = vadd.f32 %v923, %v1138
    %1140 = vdwg.mxu0
    %1141 = vmatprep.subr.mxu0 %v781
    %1142 = vmatpush1.msra.mxu0 %v780
    %1143 = vmatprep.subr.mxu0 %v785
    %1144 = vmatpush1.msra.mxu0 %v784
    %1145 = vmatprep.subr.mxu0 %v789
    %1146 = vmatpush1.msra.mxu0 %v788
    %1147 = vmatprep.subr.mxu0 %v793
    %1148 = vmatpush1.msra.mxu0 %v792
    %1149 = vmatprep.subr.mxu0 %v797
    %1150 = vmatpush1.msra.mxu0 %v796
    %1151 = vmatprep.subr.mxu0 %v801
    %1152 = vmatpush1.msra.mxu0 %v800
    %1153 = vmatprep.subr.mxu0 %v805
    %1154 = vmatpush1.msra.mxu0 %v804
    %1155 = vmatprep.subr.mxu0 %v809
    %1156 = vmatpush1.msra.mxu0 %v808
    %1157 = vmatprep.subr.mxu0 %v813
    %1158 = vmatpush1.msra.mxu0 %v812
    %1159 = vmatprep.subr.mxu0 %v817
    %1160 = vmatpush1.msra.mxu0 %v816
    %1161 = vmatprep.subr.mxu0 %v821
    %1162 = vmatpush1.msra.mxu0 %v820
    %1163 = vmatprep.subr.mxu0 %v825
    %1164 = vmatpush1.msra.mxu0 %v824
    %1165 = vmatprep.subr.mxu0 %v829
    %1166 = vmatpush1.msra.mxu0 %v828
    %1167 = vmatprep.subr.mxu0 %v833
    %1168 = vmatpush1.msra.mxu0 %v832
    %1169 = vmatprep.subr.mxu0 %v837
    %1170 = vmatpush1.msra.mxu0 %v836
    %1171 = vmatprep.subr.mxu0 %v841
    %1172 = vmatpush1.msra.mxu0 %v840
    %1173 = vmatprep.subr.mxu0 %v845
    %1174 = vmatpush1.msra.mxu0 %v844
    %1175 = vmatprep.subr.mxu0 %v849
    %1176 = vmatpush1.msra.mxu0 %v848
    %1177 = vmatprep.subr.mxu0 %v853
    %1178 = vmatpush1.msra.mxu0 %v852
    %1179 = vmatprep.subr.mxu0 %v857
    %1180 = vmatpush1.msra.mxu0 %v856
    %1181 = vmatprep.subr.mxu0 %v861
    %1182 = vmatpush1.msra.mxu0 %v860
    %1183 = vmatprep.subr.mxu0 %v865
    %1184 = vmatpush1.msra.mxu0 %v864
    %1185 = vmatprep.subr.mxu0 %v869
    %1186 = vmatpush1.msra.mxu0 %v868
    %1187 = vmatprep.subr.mxu0 %v873
    %1188 = vmatpush1.msra.mxu0 %v872
    %1189 = vmatprep.subr.mxu0 %v877
    %1190 = vmatpush1.msra.mxu0 %v876
    %1191 = vmatprep.subr.mxu0 %v881
    %1192 = vmatpush1.msra.mxu0 %v880
    %1193 = vmatprep.subr.mxu0 %v885
    %1194 = vmatpush1.msra.mxu0 %v884
    %1195 = vmatprep.subr.mxu0 %v889
    %1196 = vmatpush1.msra.mxu0 %v888
    %1197 = vmatprep.subr.mxu0 %v893
    %1198 = vmatpush1.msra.mxu0 %v892
    %1199 = vmatprep.subr.mxu0 %v897
    %1200 = vmatpush1.msra.mxu0 %v896
    %1201 = vmatprep.subr.mxu0 %v901
    %1202 = vmatpush1.msra.mxu0 %v900
    %1203 = vmatprep.subr.mxu0 %v905
    %1204 = vmatpush1.msra.mxu0 %v904
    %1205 = vmatprep.mubr.f32.mxu0 %v649
    %1206 = vmatmul.mubr.f32.gmra.mrb[0].mxu0 %v648
    %v1207 = vpop.f32.mrb[0].mxu0
    %v1208 = vadd.f32 %v1137, %v1207
    %v1209 = vpop.f32.mrb[0].mxu0
    %v1210 = vadd.f32 %v1139, %v1209
    %1211 = vdwg.mxu0
    %v1212 = vmax.f32 %v1066, 0.0
    %v1213 = vmax.f32 %v1068, 0.0
    %v1214 = vmax.f32 %v1208, 0.0
    %v1215 = vmax.f32 %v1210, 0.0
    %v1216 = vld [vmem:[#allocation8] sm:$0xff]
    %v1217 = vld [vmem:[#allocation8 + $0x8] sm:$0xff]
    %v1218 = vld [vmem:[#allocation8 + $0x10] sm:$0xff]
    %v1219 = vld [vmem:[#allocation8 + $0x18] sm:$0xff]
    %v1220 = vld [vmem:[#allocation8 + $0x20] sm:$0xff]
    %v1221 = vld [vmem:[#allocation8 + $0x28] sm:$0xff]
    %v1222 = vld [vmem:[#allocation8 + $0x30] sm:$0xff]
    %v1223 = vld [vmem:[#allocation8 + $0x38] sm:$0xff]
    %v1224 = vld [vmem:[#allocation8 + $0x40] sm:$0xff]
    %v1225 = vld [vmem:[#allocation8 + $0x48] sm:$0xff]
    %v1226 = vld [vmem:[#allocation8 + $0x50] sm:$0xff]
    %v1227 = vld [vmem:[#allocation8 + $0x58] sm:$0xff]
    %v1228 = vld [vmem:[#allocation8 + $0x60] sm:$0xff]
    %v1229 = vld [vmem:[#allocation8 + $0x68] sm:$0xff]
    %v1230 = vld [vmem:[#allocation8 + $0x70] sm:$0xff]
    %v1231 = vld [vmem:[#allocation8 + $0x78] sm:$0xff]
    %v1232 = vld [vmem:[#allocation8 + $0x80] sm:$0xff]
    %v1233 = vld [vmem:[#allocation8 + $0x88] sm:$0xff]
    %v1234 = vld [vmem:[#allocation8 + $0x90] sm:$0xff]
    %v1235 = vld [vmem:[#allocation8 + $0x98] sm:$0xff]
    %v1236 = vld [vmem:[#allocation8 + $0xa0] sm:$0xff]
    %v1237 = vld [vmem:[#allocation8 + $0xa8] sm:$0xff]
    %v1238 = vld [vmem:[#allocation8 + $0xb0] sm:$0xff]
    %v1239 = vld [vmem:[#allocation8 + $0xb8] sm:$0xff]
    %v1240 = vld [vmem:[#allocation8 + $0xc0] sm:$0xff]
    %v1241 = vld [vmem:[#allocation8 + $0xc8] sm:$0xff]
    %v1242 = vld [vmem:[#allocation8 + $0xd0] sm:$0xff]
    %v1243 = vld [vmem:[#allocation8 + $0xd8] sm:$0xff]
    %v1244 = vld [vmem:[#allocation8 + $0xe0] sm:$0xff]
    %v1245 = vld [vmem:[#allocation8 + $0xe8] sm:$0xff]
    %v1246 = vld [vmem:[#allocation8 + $0xf0] sm:$0xff]
    %v1247 = vld [vmem:[#allocation8 + $0xf8] sm:$0xff]
    %v1248 = vld [vmem:[#allocation8 + $0x100] sm:$0xff]
    %v1249 = vld [vmem:[#allocation8 + $0x108] sm:$0xff]
    %v1250 = vld [vmem:[#allocation8 + $0x110] sm:$0xff]
    %v1251 = vld [vmem:[#allocation8 + $0x118] sm:$0xff]
    %v1252 = vld [vmem:[#allocation8 + $0x120] sm:$0xff]
    %v1253 = vld [vmem:[#allocation8 + $0x128] sm:$0xff]
    %v1254 = vld [vmem:[#allocation8 + $0x130] sm:$0xff]
    %v1255 = vld [vmem:[#allocation8 + $0x138] sm:$0xff]
    %v1256 = vld [vmem:[#allocation8 + $0x140] sm:$0xff]
    %v1257 = vld [vmem:[#allocation8 + $0x148] sm:$0xff]
    %v1258 = vld [vmem:[#allocation8 + $0x150] sm:$0xff]
    %v1259 = vld [vmem:[#allocation8 + $0x158] sm:$0xff]
    %v1260 = vld [vmem:[#allocation8 + $0x160] sm:$0xff]
    %v1261 = vld [vmem:[#allocation8 + $0x168] sm:$0xff]
    %v1262 = vld [vmem:[#allocation8 + $0x170] sm:$0xff]
    %v1263 = vld [vmem:[#allocation8 + $0x178] sm:$0xff]
    %v1264 = vld [vmem:[#allocation8 + $0x180] sm:$0xff]
    %v1265 = vld [vmem:[#allocation8 + $0x188] sm:$0xff]
    %v1266 = vld [vmem:[#allocation8 + $0x190] sm:$0xff]
    %v1267 = vld [vmem:[#allocation8 + $0x198] sm:$0xff]
    %v1268 = vld [vmem:[#allocation8 + $0x1a0] sm:$0xff]
    %v1269 = vld [vmem:[#allocation8 + $0x1a8] sm:$0xff]
    %v1270 = vld [vmem:[#allocation8 + $0x1b0] sm:$0xff]
    %v1271 = vld [vmem:[#allocation8 + $0x1b8] sm:$0xff]
    %v1272 = vld [vmem:[#allocation8 + $0x1c0] sm:$0xff]
    %v1273 = vld [vmem:[#allocation8 + $0x1c8] sm:$0xff]
    %v1274 = vld [vmem:[#allocation8 + $0x1d0] sm:$0xff]
    %v1275 = vld [vmem:[#allocation8 + $0x1d8] sm:$0xff]
    %v1276 = vld [vmem:[#allocation8 + $0x1e0] sm:$0xff]
    %v1277 = vld [vmem:[#allocation8 + $0x1e8] sm:$0xff]
    %v1278 = vld [vmem:[#allocation8 + $0x1f0] sm:$0xff]
    %v1279 = vld [vmem:[#allocation8 + $0x1f8] sm:$0xff]
    %v1280 = vld [vmem:[%s6] sm:$0x1]
    %v1282 = vlaneseq
    %v1283 = vshrl.u32 %v1282, 7
    %v1284 = vsub.s32 0, %v1283
    %v1285 = vrot.slane %v1280, %v1284
    %1287 = vmatprep.subr.mxu0 0.0
    %1288 = vmatpush1.msra.mxu0 %v1216
    %1289 = vmatprep.subr.mxu0 0.0
    %1290 = vmatpush1.msra.mxu0 %v1217
    %1291 = vmatprep.subr.mxu0 0.0
    %1292 = vmatpush1.msra.mxu0 %v1218
    %1293 = vmatprep.subr.mxu0 0.0
    %1294 = vmatpush1.msra.mxu0 %v1219
    %1295 = vmatprep.subr.mxu0 0.0
    %1296 = vmatpush1.msra.mxu0 %v1220
    %1297 = vmatprep.subr.mxu0 0.0
    %1298 = vmatpush1.msra.mxu0 %v1221
    %1299 = vmatprep.subr.mxu0 0.0
    %1300 = vmatpush1.msra.mxu0 %v1222
    %1301 = vmatprep.subr.mxu0 0.0
    %1302 = vmatpush1.msra.mxu0 %v1223
    %1303 = vmatprep.subr.mxu0 0.0
    %1304 = vmatpush1.msra.mxu0 %v1224
    %1305 = vmatprep.subr.mxu0 0.0
    %1306 = vmatpush1.msra.mxu0 %v1225
    %1307 = vmatprep.subr.mxu0 0.0
    %1308 = vmatpush1.msra.mxu0 %v1226
    %1309 = vmatprep.subr.mxu0 0.0
    %1310 = vmatpush1.msra.mxu0 %v1227
    %1311 = vmatprep.subr.mxu0 0.0
    %1312 = vmatpush1.msra.mxu0 %v1228
    %1313 = vmatprep.subr.mxu0 0.0
    %1314 = vmatpush1.msra.mxu0 %v1229
    %1315 = vmatprep.subr.mxu0 0.0
    %1316 = vmatpush1.msra.mxu0 %v1230
    %1317 = vmatprep.subr.mxu0 0.0
    %1318 = vmatpush1.msra.mxu0 %v1231
    %1319 = vmatprep.subr.mxu0 0.0
    %1320 = vmatpush1.msra.mxu0 %v1232
    %1321 = vmatprep.subr.mxu0 0.0
    %1322 = vmatpush1.msra.mxu0 %v1233
    %1323 = vmatprep.subr.mxu0 0.0
    %1324 = vmatpush1.msra.mxu0 %v1234
    %1325 = vmatprep.subr.mxu0 0.0
    %1326 = vmatpush1.msra.mxu0 %v1235
    %1327 = vmatprep.subr.mxu0 0.0
    %1328 = vmatpush1.msra.mxu0 %v1236
    %1329 = vmatprep.subr.mxu0 0.0
    %1330 = vmatpush1.msra.mxu0 %v1237
    %1331 = vmatprep.subr.mxu0 0.0
    %1332 = vmatpush1.msra.mxu0 %v1238
    %1333 = vmatprep.subr.mxu0 0.0
    %1334 = vmatpush1.msra.mxu0 %v1239
    %1335 = vmatprep.subr.mxu0 0.0
    %1336 = vmatpush1.msra.mxu0 %v1240
    %1337 = vmatprep.subr.mxu0 0.0
    %1338 = vmatpush1.msra.mxu0 %v1241
    %1339 = vmatprep.subr.mxu0 0.0
    %1340 = vmatpush1.msra.mxu0 %v1242
    %1341 = vmatprep.subr.mxu0 0.0
    %1342 = vmatpush1.msra.mxu0 %v1243
    %1343 = vmatprep.subr.mxu0 0.0
    %1344 = vmatpush1.msra.mxu0 %v1244
    %1345 = vmatprep.subr.mxu0 0.0
    %1346 = vmatpush1.msra.mxu0 %v1245
    %1347 = vmatprep.subr.mxu0 0.0
    %1348 = vmatpush1.msra.mxu0 %v1246
    %1349 = vmatprep.subr.mxu0 0.0
    %1350 = vmatpush1.msra.mxu0 %v1247
    %1351 = vmatprep.mubr.f32.mxu0 %v1213
    %1352 = vmatmul.mubr.f32.gmra.mrb[0].mxu0 %v1212
    %v1353 = vpop.f32.mrb[0].mxu0
    %v1354 = vadd.f32 %v1285, %v1353
    %v1355 = vpop.f32.mrb[0].mxu0
    %1356 = vdwg.mxu0
    %1357 = vmatprep.subr.mxu0 0.0
    %1358 = vmatpush1.msra.mxu0 %v1248
    %1359 = vmatprep.subr.mxu0 0.0
    %1360 = vmatpush1.msra.mxu0 %v1249
    %1361 = vmatprep.subr.mxu0 0.0
    %1362 = vmatpush1.msra.mxu0 %v1250
    %1363 = vmatprep.subr.mxu0 0.0
    %1364 = vmatpush1.msra.mxu0 %v1251
    %1365 = vmatprep.subr.mxu0 0.0
    %1366 = vmatpush1.msra.mxu0 %v1252
    %1367 = vmatprep.subr.mxu0 0.0
    %1368 = vmatpush1.msra.mxu0 %v1253
    %1369 = vmatprep.subr.mxu0 0.0
    %1370 = vmatpush1.msra.mxu0 %v1254
    %1371 = vmatprep.subr.mxu0 0.0
    %1372 = vmatpush1.msra.mxu0 %v1255
    %1373 = vmatprep.subr.mxu0 0.0
    %1374 = vmatpush1.msra.mxu0 %v1256
    %1375 = vmatprep.subr.mxu0 0.0
    %1376 = vmatpush1.msra.mxu0 %v1257
    %1377 = vmatprep.subr.mxu0 0.0
    %1378 = vmatpush1.msra.mxu0 %v1258
    %1379 = vmatprep.subr.mxu0 0.0
    %1380 = vmatpush1.msra.mxu0 %v1259
    %1381 = vmatprep.subr.mxu0 0.0
    %1382 = vmatpush1.msra.mxu0 %v1260
    %1383 = vmatprep.subr.mxu0 0.0
    %1384 = vmatpush1.msra.mxu0 %v1261
    %1385 = vmatprep.subr.mxu0 0.0
    %1386 = vmatpush1.msra.mxu0 %v1262
    %1387 = vmatprep.subr.mxu0 0.0
    %1388 = vmatpush1.msra.mxu0 %v1263
    %1389 = vmatprep.subr.mxu0 0.0
    %1390 = vmatpush1.msra.mxu0 %v1264
    %1391 = vmatprep.subr.mxu0 0.0
    %1392 = vmatpush1.msra.mxu0 %v1265
    %1393 = vmatprep.subr.mxu0 0.0
    %1394 = vmatpush1.msra.mxu0 %v1266
    %1395 = vmatprep.subr.mxu0 0.0
    %1396 = vmatpush1.msra.mxu0 %v1267
    %1397 = vmatprep.subr.mxu0 0.0
    %1398 = vmatpush1.msra.mxu0 %v1268
    %1399 = vmatprep.subr.mxu0 0.0
    %1400 = vmatpush1.msra.mxu0 %v1269
    %1401 = vmatprep.subr.mxu0 0.0
    %1402 = vmatpush1.msra.mxu0 %v1270
    %1403 = vmatprep.subr.mxu0 0.0
    %1404 = vmatpush1.msra.mxu0 %v1271
    %1405 = vmatprep.subr.mxu0 0.0
    %1406 = vmatpush1.msra.mxu0 %v1272
    %1407 = vmatprep.subr.mxu0 0.0
    %1408 = vmatpush1.msra.mxu0 %v1273
    %1409 = vmatprep.subr.mxu0 0.0
    %1410 = vmatpush1.msra.mxu0 %v1274
    %1411 = vmatprep.subr.mxu0 0.0
    %1412 = vmatpush1.msra.mxu0 %v1275
    %1413 = vmatprep.subr.mxu0 0.0
    %1414 = vmatpush1.msra.mxu0 %v1276
    %1415 = vmatprep.subr.mxu0 0.0
    %1416 = vmatpush1.msra.mxu0 %v1277
    %1417 = vmatprep.subr.mxu0 0.0
    %1418 = vmatpush1.msra.mxu0 %v1278
    %1419 = vmatprep.subr.mxu0 0.0
    %1420 = vmatpush1.msra.mxu0 %v1279
    %1421 = vmatprep.mubr.f32.mxu0 %v1215
    %1422 = vmatmul.mubr.f32.gmra.mrb[0].mxu0 %v1214
    %v1423 = vpop.f32.mrb[0].mxu0
    %v1424 = vadd.f32 %v1354, %v1423
    %v1425 = vpop.f32.mrb[0].mxu0
    %1426 = vdwg.mxu0
    %1427 = vst [vmem:[#allocation10] sm:$0xff] %v1424
    // Predicated region
    $region46: #{tpu_custom_call.1} parent=1 // pred_check
      _
    $region47: #{tpu_custom_call.1} parent=1 // pred_check_branch
      %1429 = sbr.rel (0) target = $region49
    $region48: #{tpu_custom_call.1} parent=1 // pred_region
      %s1431 = ssub.s32 128, 128
      %1432 = vsyncadd [#allocation4], %s1431
      %s1434 = sshll.u32 [#allocation10], 4
      %s1435 = int_to_ptr.vmem [resolvable:$true] %s1434
      %1437 = dma.vmem_to_hbm [thread:$0]  %s1435, 128, %s7, [#allocation4]
    $region49: #{tpu_custom_call.1} parent=1 // pred_fallthru
      _
    // Predicated region
    $region50: #{tpu_custom_call.1} parent=1 // pred_check
      _
    $region51: #{tpu_custom_call.1} parent=1 // pred_check_branch
      %1439 = sbr.rel (0) target = $region53
    $region52: #{tpu_custom_call.1} parent=1 // pred_region
      %1440 = dma.done [#allocation4], 128
    $region53: #{tpu_custom_call.1} parent=1 // pred_fallthru
      _
    %1441 = vsyncpa [#allocation3], 1
    %1442 = vsyncpa [#allocation6], 1
    %1443 = vsyncpa [#allocation9], 1
    %1444 = vsyncpa [#allocation4], 1

// kernel: tpu_custom_call.1
$region0: #{tpu_custom_call.1}
  #allocation0 [shape = 'u32[]', space=smem, size = 0x4, offset = 0x4, fixed_abs, tag = 'smem constant byte address 0x4 - core index']
  #allocation1 [shape = 'u32[144,128]{1,0:T(1,128)}', space=vmem, size = 0x12000, scoped, tag = 'internal scratch']
  %s0 = inlined_call_operand.hbm [shape: f32[8,512], index: 0, kind: input, shape index: {}]
  %s1 = inlined_call_operand.hbm [shape: f32[512,512], index: 1, kind: input, shape index: {}]
  %s2 = inlined_call_operand.vmem [shape: f32[1,512], index: 2, kind: input, shape index: {}]
  %s3 = inlined_call_operand.hbm [shape: f32[512,512], index: 3, kind: input, shape index: {}]
  %s4 = inlined_call_operand.vmem [shape: f32[1,512], index: 4, kind: input, shape index: {}]
  %s5 = inlined_call_operand.hbm [shape: f32[512,128], index: 5, kind: input, shape index: {}]
  %s6 = inlined_call_operand.vmem [shape: f32[1,128], index: 6, kind: input, shape index: {}]
  %s7 = inlined_call_operand.hbm [shape: f32[8,128], index: 7, kind: output, shape index: {}]
  %s8 = sld [smem:[#allocation0]]
  $region54: #{tpu_custom_call.1} parent=0
    _
  %s10 = ssub.s32 1, %s8
  %s11 = scalar_select 0, %s10, %s8
  $region1: #{tpu_custom_call.1} parent=0
    #allocation2 [shape = 'u8[16384]{0}', space=vmem, size = 0x4000, scoped, tag = 'input window, operand 0, single buffered']
    #allocation3 [shape = 's32[1]{0}', space=sflag, size = 0x4, scoped, tag = 'scoped memory for tpu_custom_call.1']
    #allocation4 [shape = 's32[1]{0}', space=sflag, size = 0x4, scoped, tag = 'scoped memory for tpu_custom_call.1']
    #allocation5 [shape = 'u8[1048576]{0}', space=vmem, size = 0x100000, scoped, tag = 'input window, operand 1, single buffered']
    #allocation6 [shape = 's32[1]{0}', space=sflag, size = 0x4, scoped, tag = 'scoped memory for tpu_custom_call.1']
    #allocation7 [shape = 'u8[1048576]{0}', space=vmem, size = 0x100000, scoped, tag = 'input window, operand 3, single buffered']
    #allocation8 [shape = 'u8[262144]{0}', space=vmem, size = 0x40000, scoped, tag = 'input window, operand 5, single buffered']
    #allocation9 [shape = 's32[1]{0}', space=sflag, size = 0x4, scoped, tag = 'scoped memory for tpu_custom_call.1']
    #allocation10 [shape = 'u8[4096]{0}', space=vmem, size = 0x1000, scoped, tag = 'output window, operand 0, single buffered']
    %12 = vsyncpa [#allocation3], 0
    %13 = vsyncpa [#allocation6], 0
    %14 = vsyncpa [#allocation9], 0
    %15 = vsyncpa [#allocation4], 0
    // Predicated region
    $region2: #{tpu_custom_call.1} parent=1 // pred_check
      _
    $region3: #{tpu_custom_call.1} parent=1 // pred_check_branch
      %17 = sbr.rel (0) target = $region5
    $region4: #{tpu_custom_call.1} parent=1 // pred_region
      %s19 = ssub.s32 512, 512
      %20 = vsyncadd [#allocation3], %s19
      %s22 = sshll.u32 [#allocation2], 4
      %s23 = int_to_ptr.vmem [resolvable:$true] %s22
      %25 = dma.hbm_to_vmem [thread:$0]  %s0, 512, %s23, [#allocation3]
    $region5: #{tpu_custom_call.1} parent=1 // pred_fallthru
      _
    // Predicated region
    $region6: #{tpu_custom_call.1} parent=1 // pred_check
      _
    $region7: #{tpu_custom_call.1} parent=1 // pred_check_branch
      %27 = sbr.rel (0) target = $region9
    $region8: #{tpu_custom_call.1} parent=1 // pred_region
      %s29 = ssub.s32 32768, 32768
      %30 = vsyncadd [#allocation6], %s29
      %s31 = sshll.u32 [#allocation5], 4
      %s32 = int_to_ptr.vmem [resolvable:$true] %s31
      %37 = dma.hbm_to_vmem [thread:$0]  %s1, 32768, %s32, [#allocation6], 512, 512, 32
    $region9: #{tpu_custom_call.1} parent=1 // pred_fallthru
      _
    // Predicated region
    $region10: #{tpu_custom_call.1} parent=1 // pred_check
      _
    $region11: #{tpu_custom_call.1} parent=1 // pred_check_branch
      %39 = sbr.rel (0) target = $region13
    $region12: #{tpu_custom_call.1} parent=1 // pred_region
      _
    $region13: #{tpu_custom_call.1} parent=1 // pred_fallthru
      _
    // Predicated region
    $region14: #{tpu_custom_call.1} parent=1 // pred_check
      _
    $region15: #{tpu_custom_call.1} parent=1 // pred_check_branch
      %41 = sbr.rel (0) target = $region17
    $region16: #{tpu_custom_call.1} parent=1 // pred_region
      %s43 = ssub.s32 32768, 32768
      %44 = vsyncadd [#allocation6], %s43
      %s45 = sshll.u32 [#allocation7], 4
      %s46 = int_to_ptr.vmem [resolvable:$true] %s45
      %51 = dma.hbm_to_vmem [thread:$0]  %s3, 32768, %s46, [#allocation6], 512, 512, 32
    $region17: #{tpu_custom_call.1} parent=1 // pred_fallthru
      _
    // Predicated region
    $region18: #{tpu_custom_call.1} parent=1 // pred_check
      _
    $region19: #{tpu_custom_call.1} parent=1 // pred_check_branch
      %53 = sbr.rel (0) target = $region21
    $region20: #{tpu_custom_call.1} parent=1 // pred_region
      _
    $region21: #{tpu_custom_call.1} parent=1 // pred_fallthru
      _
    // Predicated region
    $region22: #{tpu_custom_call.1} parent=1 // pred_check
      _
    $region23: #{tpu_custom_call.1} parent=1 // pred_check_branch
      %55 = sbr.rel (0) target = $region25
    $region24: #{tpu_custom_call.1} parent=1 // pred_region
      %s57 = ssub.s32 8192, 8192
      %58 = vsyncadd [#allocation9], %s57
      %s59 = sshll.u32 [#allocation8], 4
      %s60 = int_to_ptr.vmem [resolvable:$true] %s59
      %65 = dma.hbm_to_vmem [thread:$0]  %s5, 8192, %s60, [#allocation9], 128, 128, 8
    $region25: #{tpu_custom_call.1} parent=1 // pred_fallthru
      _
    // Predicated region
    $region26: #{tpu_custom_call.1} parent=1 // pred_check
      _
    $region27: #{tpu_custom_call.1} parent=1 // pred_check_branch
      %67 = sbr.rel (0) target = $region29
    $region28: #{tpu_custom_call.1} parent=1 // pred_region
      _
    $region29: #{tpu_custom_call.1} parent=1 // pred_fallthru
      _
    // Predicated region
    $region30: #{tpu_custom_call.1} parent=1 // pred_check
      _
    $region31: #{tpu_custom_call.1} parent=1 // pred_check_branch
      %69 = sbr.rel (0) target = $region33
    $region32: #{tpu_custom_call.1} parent=1 // pred_region
      %70 = dma.done [#allocation3], 512
    $region33: #{tpu_custom_call.1} parent=1 // pred_fallthru
      _
    // Predicated region
    $region34: #{tpu_custom_call.1} parent=1 // pred_check
      _
    $region35: #{tpu_custom_call.1} parent=1 // pred_check_branch
      %72 = sbr.rel (0) target = $region37
    $region36: #{tpu_custom_call.1} parent=1 // pred_region
      %73 = dma.done [#allocation6], 32768
    $region37: #{tpu_custom_call.1} parent=1 // pred_fallthru
      _
    // Predicated region
    $region38: #{tpu_custom_call.1} parent=1 // pred_check
      _
    $region39: #{tpu_custom_call.1} parent=1 // pred_check_branch
      %75 = sbr.rel (0) target = $region41
    $region40: #{tpu_custom_call.1} parent=1 // pred_region
      %76 = dma.done [#allocation6], 32768
    $region41: #{tpu_custom_call.1} parent=1 // pred_fallthru
      _
    // Predicated region
    $region42: #{tpu_custom_call.1} parent=1 // pred_check
      _
    $region43: #{tpu_custom_call.1} parent=1 // pred_check_branch
      %78 = sbr.rel (0) target = $region45
    $region44: #{tpu_custom_call.1} parent=1 // pred_region
      %79 = dma.done [#allocation9], 8192
    $region45: #{tpu_custom_call.1} parent=1 // pred_fallthru
      _
    %v80 = vld [vmem:[#allocation2] sm:$0xff]
    %v81 = vld [vmem:[#allocation2 + $0x8] sm:$0xff]
    %v82 = vld [vmem:[#allocation2 + $0x10] sm:$0xff]
    %v83 = vld [vmem:[#allocation2 + $0x18] sm:$0xff]
    %v84 = vld [vmem:[#allocation5] sm:$0xff]
    %v85 = vld [vmem:[#allocation5 + $0x8] sm:$0xff]
    %v86 = vld [vmem:[#allocation5 + $0x10] sm:$0xff]
    %v87 = vld [vmem:[#allocation5 + $0x18] sm:$0xff]
    %v88 = vld [vmem:[#allocation5 + $0x20] sm:$0xff]
    %v89 = vld [vmem:[#allocation5 + $0x28] sm:$0xff]
    %v90 = vld [vmem:[#allocation5 + $0x30] sm:$0xff]
    %v91 = vld [vmem:[#allocation5 + $0x38] sm:$0xff]
    %v92 = vld [vmem:[#allocation5 + $0x40] sm:$0xff]
    %v93 = vld [vmem:[#allocation5 + $0x48] sm:$0xff]
    %v94 = vld [vmem:[#allocation5 + $0x50] sm:$0xff]
    %v95 = vld [vmem:[#allocation5 + $0x58] sm:$0xff]
    %v96 = vld [vmem:[#allocation5 + $0x60] sm:$0xff]
    %v97 = vld [vmem:[#allocation5 + $0x68] sm:$0xff]
    %v98 = vld [vmem:[#allocation5 + $0x70] sm:$0xff]
    %v99 = vld [vmem:[#allocation5 + $0x78] sm:$0xff]
    %v100 = vld [vmem:[#allocation5 + $0x80] sm:$0xff]
    %v101 = vld [vmem:[#allocation5 + $0x88] sm:$0xff]
    %v102 = vld [vmem:[#allocation5 + $0x90] sm:$0xff]
    %v103 = vld [vmem:[#allocation5 + $0x98] sm:$0xff]
    %v104 = vld [vmem:[#allocation5 + $0xa0] sm:$0xff]
    %v105 = vld [vmem:[#allocation5 + $0xa8] sm:$0xff]
    %v106 = vld [vmem:[#allocation5 + $0xb0] sm:$0xff]
    %v107 = vld [vmem:[#allocation5 + $0xb8] sm:$0xff]
    %v108 = vld [vmem:[#allocation5 + $0xc0] sm:$0xff]
    %v109 = vld [vmem:[#allocation5 + $0xc8] sm:$0xff]
    %v110 = vld [vmem:[#allocation5 + $0xd0] sm:$0xff]
    %v111 = vld [vmem:[#allocation5 + $0xd8] sm:$0xff]
    %v112 = vld [vmem:[#allocation5 + $0xe0] sm:$0xff]
    %v113 = vld [vmem:[#allocation5 + $0xe8] sm:$0xff]
    %v114 = vld [vmem:[#allocation5 + $0xf0] sm:$0xff]
    %v115 = vld [vmem:[#allocation5 + $0xf8] sm:$0xff]
    %v116 = vld [vmem:[#allocation5 + $0x100] sm:$0xff]
    %v117 = vld [vmem:[#allocation5 + $0x108] sm:$0xff]
    %v118 = vld [vmem:[#allocation5 + $0x110] sm:$0xff]
    %v119 = vld [vmem:[#allocation5 + $0x118] sm:$0xff]
    %v120 = vld [vmem:[#allocation5 + $0x120] sm:$0xff]
    %v121 = vld [vmem:[#allocation5 + $0x128] sm:$0xff]
    %v122 = vld [vmem:[#allocation5 + $0x130] sm:$0xff]
    %v123 = vld [vmem:[#allocation5 + $0x138] sm:$0xff]
    %v124 = vld [vmem:[#allocation5 + $0x140] sm:$0xff]
    %v125 = vld [vmem:[#allocation5 + $0x148] sm:$0xff]
    %v126 = vld [vmem:[#allocation5 + $0x150] sm:$0xff]
    %v127 = vld [vmem:[#allocation5 + $0x158] sm:$0xff]
    %v128 = vld [vmem:[#allocation5 + $0x160] sm:$0xff]
    %v129 = vld [vmem:[#allocation5 + $0x168] sm:$0xff]
    %v130 = vld [vmem:[#allocation5 + $0x170] sm:$0xff]
    %v131 = vld [vmem:[#allocation5 + $0x178] sm:$0xff]
    %v132 = vld [vmem:[#allocation5 + $0x180] sm:$0xff]
    %v133 = vld [vmem:[#allocation5 + $0x188] sm:$0xff]
    %v134 = vld [vmem:[#allocation5 + $0x190] sm:$0xff]
    %v135 = vld [vmem:[#allocation5 + $0x198] sm:$0xff]
    %v136 = vld [vmem:[#allocation5 + $0x1a0] sm:$0xff]
    %v137 = vld [vmem:[#allocation5 + $0x1a8] sm:$0xff]
    %v138 = vld [vmem:[#allocation5 + $0x1b0] sm:$0xff]
    %v139 = vld [vmem:[#allocation5 + $0x1b8] sm:$0xff]
    %v140 = vld [vmem:[#allocation5 + $0x1c0] sm:$0xff]
    %v141 = vld [vmem:[#allocation5 + $0x1c8] sm:$0xff]
    %v142 = vld [vmem:[#allocation5 + $0x1d0] sm:$0xff]
    %v143 = vld [vmem:[#allocation5 + $0x1d8] sm:$0xff]
    %v144 = vld [vmem:[#allocation5 + $0x1e0] sm:$0xff]
    %v145 = vld [vmem:[#allocation5 + $0x1e8] sm:$0xff]
    %v146 = vld [vmem:[#allocation5 + $0x1f0] sm:$0xff]
    %v147 = vld [vmem:[#allocation5 + $0x1f8] sm:$0xff]
    %v148 = vld [vmem:[#allocation5 + $0x200] sm:$0xff]
    %v149 = vld [vmem:[#allocation5 + $0x208] sm:$0xff]
    %v150 = vld [vmem:[#allocation5 + $0x210] sm:$0xff]
    %v151 = vld [vmem:[#allocation5 + $0x218] sm:$0xff]
    %v152 = vld [vmem:[#allocation5 + $0x220] sm:$0xff]
    %v153 = vld [vmem:[#allocation5 + $0x228] sm:$0xff]
    %v154 = vld [vmem:[#allocation5 + $0x230] sm:$0xff]
    %v155 = vld [vmem:[#allocation5 + $0x238] sm:$0xff]
    %v156 = vld [vmem:[#allocation5 + $0x240] sm:$0xff]
    %v157 = vld [vmem:[#allocation5 + $0x248] sm:$0xff]
    %v158 = vld [vmem:[#allocation5 + $0x250] sm:$0xff]
    %v159 = vld [vmem:[#allocation5 + $0x258] sm:$0xff]
    %v160 = vld [vmem:[#allocation5 + $0x260] sm:$0xff]
    %v161 = vld [vmem:[#allocation5 + $0x268] sm:$0xff]
    %v162 = vld [vmem:[#allocation5 + $0x270] sm:$0xff]
    %v163 = vld [vmem:[#allocation5 + $0x278] sm:$0xff]
    %v164 = vld [vmem:[#allocation5 + $0x280] sm:$0xff]
    %v165 = vld [vmem:[#allocation5 + $0x288] sm:$0xff]
    %v166 = vld [vmem:[#allocation5 + $0x290] sm:$0xff]
    %v167 = vld [vmem:[#allocation5 + $0x298] sm:$0xff]
    %v168 = vld [vmem:[#allocation5 + $0x2a0] sm:$0xff]
    %v169 = vld [vmem:[#allocation5 + $0x2a8] sm:$0xff]
    %v170 = vld [vmem:[#allocation5 + $0x2b0] sm:$0xff]
    %v171 = vld [vmem:[#allocation5 + $0x2b8] sm:$0xff]
    %v172 = vld [vmem:[#allocation5 + $0x2c0] sm:$0xff]
    %v173 = vld [vmem:[#allocation5 + $0x2c8] sm:$0xff]
    %v174 = vld [vmem:[#allocation5 + $0x2d0] sm:$0xff]
    %v175 = vld [vmem:[#allocation5 + $0x2d8] sm:$0xff]
    %v176 = vld [vmem:[#allocation5 + $0x2e0] sm:$0xff]
    %v177 = vld [vmem:[#allocation5 + $0x2e8] sm:$0xff]
    %v178 = vld [vmem:[#allocation5 + $0x2f0] sm:$0xff]
    %v179 = vld [vmem:[#allocation5 + $0x2f8] sm:$0xff]
    %v180 = vld [vmem:[#allocation5 + $0x300] sm:$0xff]
    %v181 = vld [vmem:[#allocation5 + $0x308] sm:$0xff]
    %v182 = vld [vmem:[#allocation5 + $0x310] sm:$0xff]
    %v183 = vld [vmem:[#allocation5 + $0x318] sm:$0xff]
    %v184 = vld [vmem:[#allocation5 + $0x320] sm:$0xff]
    %v185 = vld [vmem:[#allocation5 + $0x328] sm:$0xff]
    %v186 = vld [vmem:[#allocation5 + $0x330] sm:$0xff]
    %v187 = vld [vmem:[#allocation5 + $0x338] sm:$0xff]
    %v188 = vld [vmem:[#allocation5 + $0x340] sm:$0xff]
    %v189 = vld [vmem:[#allocation5 + $0x348] sm:$0xff]
    %v190 = vld [vmem:[#allocation5 + $0x350] sm:$0xff]
    %v191 = vld [vmem:[#allocation5 + $0x358] sm:$0xff]
    %v192 = vld [vmem:[#allocation5 + $0x360] sm:$0xff]
    %v193 = vld [vmem:[#allocation5 + $0x368] sm:$0xff]
    %v194 = vld [vmem:[#allocation5 + $0x370] sm:$0xff]
    %v195 = vld [vmem:[#allocation5 + $0x378] sm:$0xff]
    %v196 = vld [vmem:[#allocation5 + $0x380] sm:$0xff]
    %v197 = vld [vmem:[#allocation5 + $0x388] sm:$0xff]
    %v198 = vld [vmem:[#allocation5 + $0x390] sm:$0xff]
    %v199 = vld [vmem:[#allocation5 + $0x398] sm:$0xff]
    %v200 = vld [vmem:[#allocation5 + $0x3a0] sm:$0xff]
    %v201 = vld [vmem:[#allocation5 + $0x3a8] sm:$0xff]
    %v202 = vld [vmem:[#allocation5 + $0x3b0] sm:$0xff]
    %v203 = vld [vmem:[#allocation5 + $0x3b8] sm:$0xff]
    %v204 = vld [vmem:[#allocation5 + $0x3c0] sm:$0xff]
    %v205 = vld [vmem:[#allocation5 + $0x3c8] sm:$0xff]
    %v206 = vld [vmem:[#allocation5 + $0x3d0] sm:$0xff]
    %v207 = vld [vmem:[#allocation5 + $0x3d8] sm:$0xff]
    %v208 = vld [vmem:[#allocation5 + $0x3e0] sm:$0xff]
    %v209 = vld [vmem:[#allocation5 + $0x3e8] sm:$0xff]
    %v210 = vld [vmem:[#allocation5 + $0x3f0] sm:$0xff]
    %v211 = vld [vmem:[#allocation5 + $0x3f8] sm:$0xff]
    %v212 = vld [vmem:[#allocation5 + $0x400] sm:$0xff]
    %v213 = vld [vmem:[#allocation5 + $0x408] sm:$0xff]
    %v214 = vld [vmem:[#allocation5 + $0x410] sm:$0xff]
    %v215 = vld [vmem:[#allocation5 + $0x418] sm:$0xff]
    %v216 = vld [vmem:[#allocation5 + $0x420] sm:$0xff]
    %v217 = vld [vmem:[#allocation5 + $0x428] sm:$0xff]
    %v218 = vld [vmem:[#allocation5 + $0x430] sm:$0xff]
    %v219 = vld [vmem:[#allocation5 + $0x438] sm:$0xff]
    %v220 = vld [vmem:[#allocation5 + $0x440] sm:$0xff]
    %v221 = vld [vmem:[#allocation5 + $0x448] sm:$0xff]
    %v222 = vld [vmem:[#allocation5 + $0x450] sm:$0xff]
    %v223 = vld [vmem:[#allocation5 + $0x458] sm:$0xff]
    %v224 = vld [vmem:[#allocation5 + $0x460] sm:$0xff]
    %v225 = vld [vmem:[#allocation5 + $0x468] sm:$0xff]
    %v226 = vld [vmem:[#allocation5 + $0x470] sm:$0xff]
    %v227 = vld [vmem:[#allocation5 + $0x478] sm:$0xff]
    %v228 = vld [vmem:[#allocation5 + $0x480] sm:$0xff]
    %v229 = vld [vmem:[#allocation5 + $0x488] sm:$0xff]
    %v230 = vld [vmem:[#allocation5 + $0x490] sm:$0xff]
    %v231 = vld [vmem:[#allocation5 + $0x498] sm:$0xff]
    %v232 = vld [vmem:[#allocation5 + $0x4a0] sm:$0xff]
    %v233 = vld [vmem:[#allocation5 + $0x4a8] sm:$0xff]
    %v234 = vld [vmem:[#allocation5 + $0x4b0] sm:$0xff]
    %v235 = vld [vmem:[#allocation5 + $0x4b8] sm:$0xff]
    %v236 = vld [vmem:[#allocation5 + $0x4c0] sm:$0xff]
    %v237 = vld [vmem:[#allocation5 + $0x4c8] sm:$0xff]
    %v238 = vld [vmem:[#allocation5 + $0x4d0] sm:$0xff]
    %v239 = vld [vmem:[#allocation5 + $0x4d8] sm:$0xff]
    %v240 = vld [vmem:[#allocation5 + $0x4e0] sm:$0xff]
    %v241 = vld [vmem:[#allocation5 + $0x4e8] sm:$0xff]
    %v242 = vld [vmem:[#allocation5 + $0x4f0] sm:$0xff]
    %v243 = vld [vmem:[#allocation5 + $0x4f8] sm:$0xff]
    %v244 = vld [vmem:[#allocation5 + $0x500] sm:$0xff]
    %v245 = vld [vmem:[#allocation5 + $0x508] sm:$0xff]
    %v246 = vld [vmem:[#allocation5 + $0x510] sm:$0xff]
    %v247 = vld [vmem:[#allocation5 + $0x518] sm:$0xff]
    %v248 = vld [vmem:[#allocation5 + $0x520] sm:$0xff]
    %v249 = vld [vmem:[#allocation5 + $0x528] sm:$0xff]
    %v250 = vld [vmem:[#allocation5 + $0x530] sm:$0xff]
    %v251 = vld [vmem:[#allocation5 + $0x538] sm:$0xff]
    %v252 = vld [vmem:[#allocation5 + $0x540] sm:$0xff]
    %v253 = vld [vmem:[#allocation5 + $0x548] sm:$0xff]
    %v254 = vld [vmem:[#allocation5 + $0x550] sm:$0xff]
    %v255 = vld [vmem:[#allocation5 + $0x558] sm:$0xff]
    %v256 = vld [vmem:[#allocation5 + $0x560] sm:$0xff]
    %v257 = vld [vmem:[#allocation5 + $0x568] sm:$0xff]
    %v258 = vld [vmem:[#allocation5 + $0x570] sm:$0xff]
    %v259 = vld [vmem:[#allocation5 + $0x578] sm:$0xff]
    %v260 = vld [vmem:[#allocation5 + $0x580] sm:$0xff]
    %v261 = vld [vmem:[#allocation5 + $0x588] sm:$0xff]
    %v262 = vld [vmem:[#allocation5 + $0x590] sm:$0xff]
    %v263 = vld [vmem:[#allocation5 + $0x598] sm:$0xff]
    %v264 = vld [vmem:[#allocation5 + $0x5a0] sm:$0xff]
    %v265 = vld [vmem:[#allocation5 + $0x5a8] sm:$0xff]
    %v266 = vld [vmem:[#allocation5 + $0x5b0] sm:$0xff]
    %v267 = vld [vmem:[#allocation5 + $0x5b8] sm:$0xff]
    %v268 = vld [vmem:[#allocation5 + $0x5c0] sm:$0xff]
    %v269 = vld [vmem:[#allocation5 + $0x5c8] sm:$0xff]
    %v270 = vld [vmem:[#allocation5 + $0x5d0] sm:$0xff]
    %v271 = vld [vmem:[#allocation5 + $0x5d8] sm:$0xff]
    %v272 = vld [vmem:[#allocation5 + $0x5e0] sm:$0xff]
    %v273 = vld [vmem:[#allocation5 + $0x5e8] sm:$0xff]
    %v274 = vld [vmem:[#allocation5 + $0x5f0] sm:$0xff]
    %v275 = vld [vmem:[#allocation5 + $0x5f8] sm:$0xff]
    %v276 = vld [vmem:[#allocation5 + $0x600] sm:$0xff]
    %v277 = vld [vmem:[#allocation5 + $0x608] sm:$0xff]
    %v278 = vld [vmem:[#allocation5 + $0x610] sm:$0xff]
    %v279 = vld [vmem:[#allocation5 + $0x618] sm:$0xff]
    %v280 = vld [vmem:[#allocation5 + $0x620] sm:$0xff]
    %v281 = vld [vmem:[#allocation5 + $0x628] sm:$0xff]
    %v282 = vld [vmem:[#allocation5 + $0x630] sm:$0xff]
    %v283 = vld [vmem:[#allocation5 + $0x638] sm:$0xff]
    %v284 = vld [vmem:[#allocation5 + $0x640] sm:$0xff]
    %v285 = vld [vmem:[#allocation5 + $0x648] sm:$0xff]
    %v286 = vld [vmem:[#allocation5 + $0x650] sm:$0xff]
    %v287 = vld [vmem:[#allocation5 + $0x658] sm:$0xff]
    %v288 = vld [vmem:[#allocation5 + $0x660] sm:$0xff]
    %v289 = vld [vmem:[#allocation5 + $0x668] sm:$0xff]
    %v290 = vld [vmem:[#allocation5 + $0x670] sm:$0xff]
    %v291 = vld [vmem:[#allocation5 + $0x678] sm:$0xff]
    %v292 = vld [vmem:[#allocation5 + $0x680] sm:$0xff]
    %v293 = vld [vmem:[#allocation5 + $0x688] sm:$0xff]
    %v294 = vld [vmem:[#allocation5 + $0x690] sm:$0xff]
    %v295 = vld [vmem:[#allocation5 + $0x698] sm:$0xff]
    %v296 = vld [vmem:[#allocation5 + $0x6a0] sm:$0xff]
    %v297 = vld [vmem:[#allocation5 + $0x6a8] sm:$0xff]
    %v298 = vld [vmem:[#allocation5 + $0x6b0] sm:$0xff]
    %v299 = vld [vmem:[#allocation5 + $0x6b8] sm:$0xff]
    %v300 = vld [vmem:[#allocation5 + $0x6c0] sm:$0xff]
    %v301 = vld [vmem:[#allocation5 + $0x6c8] sm:$0xff]
    %v302 = vld [vmem:[#allocation5 + $0x6d0] sm:$0xff]
    %v303 = vld [vmem:[#allocation5 + $0x6d8] sm:$0xff]
    %v304 = vld [vmem:[#allocation5 + $0x6e0] sm:$0xff]
    %v305 = vld [vmem:[#allocation5 + $0x6e8] sm:$0xff]
    %v306 = vld [vmem:[#allocation5 + $0x6f0] sm:$0xff]
    %v307 = vld [vmem:[#allocation5 + $0x6f8] sm:$0xff]
    %v308 = vld [vmem:[#allocation5 + $0x700] sm:$0xff]
    %v309 = vld [vmem:[#allocation5 + $0x708] sm:$0xff]
    %v310 = vld [vmem:[#allocation5 + $0x710] sm:$0xff]
    %v311 = vld [vmem:[#allocation5 + $0x718] sm:$0xff]
    %v312 = vld [vmem:[#allocation5 + $0x720] sm:$0xff]
    %v313 = vld [vmem:[#allocation5 + $0x728] sm:$0xff]
    %v314 = vld [vmem:[#allocation5 + $0x730] sm:$0xff]
    %v315 = vld [vmem:[#allocation5 + $0x738] sm:$0xff]
    %v316 = vld [vmem:[#allocation5 + $0x740] sm:$0xff]
    %v317 = vld [vmem:[#allocation5 + $0x748] sm:$0xff]
    %v318 = vld [vmem:[#allocation5 + $0x750] sm:$0xff]
    %v319 = vld [vmem:[#allocation5 + $0x758] sm:$0xff]
    %v320 = vld [vmem:[#allocation5 + $0x760] sm:$0xff]
    %v321 = vld [vmem:[#allocation5 + $0x768] sm:$0xff]
    %v322 = vld [vmem:[#allocation5 + $0x770] sm:$0xff]
    %v323 = vld [vmem:[#allocation5 + $0x778] sm:$0xff]
    %v324 = vld [vmem:[#allocation5 + $0x780] sm:$0xff]
    %v325 = vld [vmem:[#allocation5 + $0x788] sm:$0xff]
    %v326 = vld [vmem:[#allocation5 + $0x790] sm:$0xff]
    %v327 = vld [vmem:[#allocation5 + $0x798] sm:$0xff]
    %v328 = vld [vmem:[#allocation5 + $0x7a0] sm:$0xff]
    %v329 = vld [vmem:[#allocation5 + $0x7a8] sm:$0xff]
    %v330 = vld [vmem:[#allocation5 + $0x7b0] sm:$0xff]
    %v331 = vld [vmem:[#allocation5 + $0x7b8] sm:$0xff]
    %v332 = vld [vmem:[#allocation5 + $0x7c0] sm:$0xff]
    %v333 = vld [vmem:[#allocation5 + $0x7c8] sm:$0xff]
    %v334 = vld [vmem:[#allocation5 + $0x7d0] sm:$0xff]
    %v335 = vld [vmem:[#allocation5 + $0x7d8] sm:$0xff]
    %v336 = vld [vmem:[#allocation5 + $0x7e0] sm:$0xff]
    %v337 = vld [vmem:[#allocation5 + $0x7e8] sm:$0xff]
    %v338 = vld [vmem:[#allocation5 + $0x7f0] sm:$0xff]
    %v339 = vld [vmem:[#allocation5 + $0x7f8] sm:$0xff]
    %v340 = vld [vmem:[%s2] sm:$0xf]
    %v342 = vlaneseq
    %v343 = vshrl.u32 %v342, 7
    %v344 = vsub.s32 0, %v343
    %v345 = vrot.slane %v340, %v344
    %v346 = vlaneseq
    %v347 = vshrl.u32 %v346, 7
    %v348 = vsub.s32 1, %v347
    %v349 = vrot.slane %v340, %v348
    %v350 = vlaneseq
    %v351 = vshrl.u32 %v350, 7
    %v352 = vsub.s32 2, %v351
    %v353 = vrot.slane %v340, %v352
    %v354 = vlaneseq
    %v355 = vshrl.u32 %v354, 7
    %v356 = vsub.s32 3, %v355
    %v357 = vrot.slane %v340, %v356
    %362 = vmatprep.subr.mxu0 %v85
    %363 = vmatpush1.msra.mxu0 %v84
    %364 = vmatprep.subr.mxu0 %v89
    %365 = vmatpush1.msra.mxu0 %v88
    %366 = vmatprep.subr.mxu0 %v93
    %367 = vmatpush1.msra.mxu0 %v92
    %368 = vmatprep.subr.mxu0 %v97
    %369 = vmatpush1.msra.mxu0 %v96
    %370 = vmatprep.subr.mxu0 %v101
    %371 = vmatpush1.msra.mxu0 %v100
    %372 = vmatprep.subr.mxu0 %v105
    %373 = vmatpush1.msra.mxu0 %v104
    %374 = vmatprep.subr.mxu0 %v109
    %375 = vmatpush1.msra.mxu0 %v108
    %376 = vmatprep.subr.mxu0 %v113
    %377 = vmatpush1.msra.mxu0 %v112
    %378 = vmatprep.subr.mxu0 %v117
    %379 = vmatpush1.msra.mxu0 %v116
    %380 = vmatprep.subr.mxu0 %v121
    %381 = vmatpush1.msra.mxu0 %v120
    %382 = vmatprep.subr.mxu0 %v125
    %383 = vmatpush1.msra.mxu0 %v124
    %384 = vmatprep.subr.mxu0 %v129
    %385 = vmatpush1.msra.mxu0 %v128
    %386 = vmatprep.subr.mxu0 %v133
    %387 = vmatpush1.msra.mxu0 %v132
    %388 = vmatprep.subr.mxu0 %v137
    %389 = vmatpush1.msra.mxu0 %v136
    %390 = vmatprep.subr.mxu0 %v141
    %391 = vmatpush1.msra.mxu0 %v140
    %392 = vmatprep.subr.mxu0 %v145
    %393 = vmatpush1.msra.mxu0 %v144
    %394 = vmatprep.subr.mxu0 %v149
    %395 = vmatpush1.msra.mxu0 %v148
    %396 = vmatprep.subr.mxu0 %v153
    %397 = vmatpush1.msra.mxu0 %v152
    %398 = vmatprep.subr.mxu0 %v157
    %399 = vmatpush1.msra.mxu0 %v156
    %400 = vmatprep.subr.mxu0 %v161
    %401 = vmatpush1.msra.mxu0 %v160
    %402 = vmatprep.subr.mxu0 %v165
    %403 = vmatpush1.msra.mxu0 %v164
    %404 = vmatprep.subr.mxu0 %v169
    %405 = vmatpush1.msra.mxu0 %v168
    %406 = vmatprep.subr.mxu0 %v173
    %407 = vmatpush1.msra.mxu0 %v172
    %408 = vmatprep.subr.mxu0 %v177
    %409 = vmatpush1.msra.mxu0 %v176
    %410 = vmatprep.subr.mxu0 %v181
    %411 = vmatpush1.msra.mxu0 %v180
    %412 = vmatprep.subr.mxu0 %v185
    %413 = vmatpush1.msra.mxu0 %v184
    %414 = vmatprep.subr.mxu0 %v189
    %415 = vmatpush1.msra.mxu0 %v188
    %416 = vmatprep.subr.mxu0 %v193
    %417 = vmatpush1.msra.mxu0 %v192
    %418 = vmatprep.subr.mxu0 %v197
    %419 = vmatpush1.msra.mxu0 %v196
    %420 = vmatprep.subr.mxu0 %v201
    %421 = vmatpush1.msra.mxu0 %v200
    %422 = vmatprep.subr.mxu0 %v205
    %423 = vmatpush1.msra.mxu0 %v204
    %424 = vmatprep.subr.mxu0 %v209
    %425 = vmatpush1.msra.mxu0 %v208
    %426 = vmatprep.mubr.f32.mxu0 %v81
    %427 = vmatmul.mubr.f32.gmra.mrb[0].mxu0 %v80
    %v428 = vpop.f32.mrb[0].mxu0
    %v429 = vadd.f32 %v345, %v428
    %v430 = vpop.f32.mrb[0].mxu0
    %v431 = vadd.f32 %v349, %v430
    %432 = vdwg.mxu0
    %433 = vmatprep.subr.mxu0 %v213
    %434 = vmatpush1.msra.mxu0 %v212
    %435 = vmatprep.subr.mxu0 %v217
    %436 = vmatpush1.msra.mxu0 %v216
    %437 = vmatprep.subr.mxu0 %v221
    %438 = vmatpush1.msra.mxu0 %v220
    %439 = vmatprep.subr.mxu0 %v225
    %440 = vmatpush1.msra.mxu0 %v224
    %441 = vmatprep.subr.mxu0 %v229
    %442 = vmatpush1.msra.mxu0 %v228
    %443 = vmatprep.subr.mxu0 %v233
    %444 = vmatpush1.msra.mxu0 %v232
    %445 = vmatprep.subr.mxu0 %v237
    %446 = vmatpush1.msra.mxu0 %v236
    %447 = vmatprep.subr.mxu0 %v241
    %448 = vmatpush1.msra.mxu0 %v240
    %449 = vmatprep.subr.mxu0 %v245
    %450 = vmatpush1.msra.mxu0 %v244
    %451 = vmatprep.subr.mxu0 %v249
    %452 = vmatpush1.msra.mxu0 %v248
    %453 = vmatprep.subr.mxu0 %v253
    %454 = vmatpush1.msra.mxu0 %v252
    %455 = vmatprep.subr.mxu0 %v257
    %456 = vmatpush1.msra.mxu0 %v256
    %457 = vmatprep.subr.mxu0 %v261
    %458 = vmatpush1.msra.mxu0 %v260
    %459 = vmatprep.subr.mxu0 %v265
    %460 = vmatpush1.msra.mxu0 %v264
    %461 = vmatprep.subr.mxu0 %v269
    %462 = vmatpush1.msra.mxu0 %v268
    %463 = vmatprep.subr.mxu0 %v273
    %464 = vmatpush1.msra.mxu0 %v272
    %465 = vmatprep.subr.mxu0 %v277
    %466 = vmatpush1.msra.mxu0 %v276
    %467 = vmatprep.subr.mxu0 %v281
    %468 = vmatpush1.msra.mxu0 %v280
    %469 = vmatprep.subr.mxu0 %v285
    %470 = vmatpush1.msra.mxu0 %v284
    %471 = vmatprep.subr.mxu0 %v289
    %472 = vmatpush1.msra.mxu0 %v288
    %473 = vmatprep.subr.mxu0 %v293
    %474 = vmatpush1.msra.mxu0 %v292
    %475 = vmatprep.subr.mxu0 %v297
    %476 = vmatpush1.msra.mxu0 %v296
    %477 = vmatprep.subr.mxu0 %v301
    %478 = vmatpush1.msra.mxu0 %v300
    %479 = vmatprep.subr.mxu0 %v305
    %480 = vmatpush1.msra.mxu0 %v304
    %481 = vmatprep.subr.mxu0 %v309
    %482 = vmatpush1.msra.mxu0 %v308
    %483 = vmatprep.subr.mxu0 %v313
    %484 = vmatpush1.msra.mxu0 %v312
    %485 = vmatprep.subr.mxu0 %v317
    %486 = vmatpush1.msra.mxu0 %v316
    %487 = vmatprep.subr.mxu0 %v321
    %488 = vmatpush1.msra.mxu0 %v320
    %489 = vmatprep.subr.mxu0 %v325
    %490 = vmatpush1.msra.mxu0 %v324
    %491 = vmatprep.subr.mxu0 %v329
    %492 = vmatpush1.msra.mxu0 %v328
    %493 = vmatprep.subr.mxu0 %v333
    %494 = vmatpush1.msra.mxu0 %v332
    %495 = vmatprep.subr.mxu0 %v337
    %496 = vmatpush1.msra.mxu0 %v336
    %497 = vmatprep.mubr.f32.mxu0 %v83
    %498 = vmatmul.mubr.f32.gmra.mrb[0].mxu0 %v82
    %v499 = vpop.f32.mrb[0].mxu0
    %v500 = vadd.f32 %v429, %v499
    %v501 = vpop.f32.mrb[0].mxu0
    %v502 = vadd.f32 %v431, %v501
    %503 = vdwg.mxu0
    %504 = vmatprep.subr.mxu0 %v87
    %505 = vmatpush1.msra.mxu0 %v86
    %506 = vmatprep.subr.mxu0 %v91
    %507 = vmatpush1.msra.mxu0 %v90
    %508 = vmatprep.subr.mxu0 %v95
    %509 = vmatpush1.msra.mxu0 %v94
    %510 = vmatprep.subr.mxu0 %v99
    %511 = vmatpush1.msra.mxu0 %v98
    %512 = vmatprep.subr.mxu0 %v103
    %513 = vmatpush1.msra.mxu0 %v102
    %514 = vmatprep.subr.mxu0 %v107
    %515 = vmatpush1.msra.mxu0 %v106
    %516 = vmatprep.subr.mxu0 %v111
    %517 = vmatpush1.msra.mxu0 %v110
    %518 = vmatprep.subr.mxu0 %v115
    %519 = vmatpush1.msra.mxu0 %v114
    %520 = vmatprep.subr.mxu0 %v119
    %521 = vmatpush1.msra.mxu0 %v118
    %522 = vmatprep.subr.mxu0 %v123
    %523 = vmatpush1.msra.mxu0 %v122
    %524 = vmatprep.subr.mxu0 %v127
    %525 = vmatpush1.msra.mxu0 %v126
    %526 = vmatprep.subr.mxu0 %v131
    %527 = vmatpush1.msra.mxu0 %v130
    %528 = vmatprep.subr.mxu0 %v135
    %529 = vmatpush1.msra.mxu0 %v134
    %530 = vmatprep.subr.mxu0 %v139
    %531 = vmatpush1.msra.mxu0 %v138
    %532 = vmatprep.subr.mxu0 %v143
    %533 = vmatpush1.msra.mxu0 %v142
    %534 = vmatprep.subr.mxu0 %v147
    %535 = vmatpush1.msra.mxu0 %v146
    %536 = vmatprep.subr.mxu0 %v151
    %537 = vmatpush1.msra.mxu0 %v150
    %538 = vmatprep.subr.mxu0 %v155
    %539 = vmatpush1.msra.mxu0 %v154
    %540 = vmatprep.subr.mxu0 %v159
    %541 = vmatpush1.msra.mxu0 %v158
    %542 = vmatprep.subr.mxu0 %v163
    %543 = vmatpush1.msra.mxu0 %v162
    %544 = vmatprep.subr.mxu0 %v167
    %545 = vmatpush1.msra.mxu0 %v166
    %546 = vmatprep.subr.mxu0 %v171
    %547 = vmatpush1.msra.mxu0 %v170
    %548 = vmatprep.subr.mxu0 %v175
    %549 = vmatpush1.msra.mxu0 %v174
    %550 = vmatprep.subr.mxu0 %v179
    %551 = vmatpush1.msra.mxu0 %v178
    %552 = vmatprep.subr.mxu0 %v183
    %553 = vmatpush1.msra.mxu0 %v182
    %554 = vmatprep.subr.mxu0 %v187
    %555 = vmatpush1.msra.mxu0 %v186
    %556 = vmatprep.subr.mxu0 %v191
    %557 = vmatpush1.msra.mxu0 %v190
    %558 = vmatprep.subr.mxu0 %v195
    %559 = vmatpush1.msra.mxu0 %v194
    %560 = vmatprep.subr.mxu0 %v199
    %561 = vmatpush1.msra.mxu0 %v198
    %562 = vmatprep.subr.mxu0 %v203
    %563 = vmatpush1.msra.mxu0 %v202
    %564 = vmatprep.subr.mxu0 %v207
    %565 = vmatpush1.msra.mxu0 %v206
    %566 = vmatprep.subr.mxu0 %v211
    %567 = vmatpush1.msra.mxu0 %v210
    %568 = vmatprep.mubr.f32.mxu0 %v81
    %569 = vmatmul.mubr.f32.gmra.mrb[0].mxu0 %v80
    %v570 = vpop.f32.mrb[0].mxu0
    %v571 = vadd.f32 %v353, %v570
    %v572 = vpop.f32.mrb[0].mxu0
    %v573 = vadd.f32 %v357, %v572
    %574 = vdwg.mxu0
    %575 = vmatprep.subr.mxu0 %v215
    %576 = vmatpush1.msra.mxu0 %v214
    %577 = vmatprep.subr.mxu0 %v219
    %578 = vmatpush1.msra.mxu0 %v218
    %579 = vmatprep.subr.mxu0 %v223
    %580 = vmatpush1.msra.mxu0 %v222
    %581 = vmatprep.subr.mxu0 %v227
    %582 = vmatpush1.msra.mxu0 %v226
    %583 = vmatprep.subr.mxu0 %v231
    %584 = vmatpush1.msra.mxu0 %v230
    %585 = vmatprep.subr.mxu0 %v235
    %586 = vmatpush1.msra.mxu0 %v234
    %587 = vmatprep.subr.mxu0 %v239
    %588 = vmatpush1.msra.mxu0 %v238
    %589 = vmatprep.subr.mxu0 %v243
    %590 = vmatpush1.msra.mxu0 %v242
    %591 = vmatprep.subr.mxu0 %v247
    %592 = vmatpush1.msra.mxu0 %v246
    %593 = vmatprep.subr.mxu0 %v251
    %594 = vmatpush1.msra.mxu0 %v250
    %595 = vmatprep.subr.mxu0 %v255
    %596 = vmatpush1.msra.mxu0 %v254
    %597 = vmatprep.subr.mxu0 %v259
    %598 = vmatpush1.msra.mxu0 %v258
    %599 = vmatprep.subr.mxu0 %v263
    %600 = vmatpush1.msra.mxu0 %v262
    %601 = vmatprep.subr.mxu0 %v267
    %602 = vmatpush1.msra.mxu0 %v266
    %603 = vmatprep.subr.mxu0 %v271
    %604 = vmatpush1.msra.mxu0 %v270
    %605 = vmatprep.subr.mxu0 %v275
    %606 = vmatpush1.msra.mxu0 %v274
    %607 = vmatprep.subr.mxu0 %v279
    %608 = vmatpush1.msra.mxu0 %v278
    %609 = vmatprep.subr.mxu0 %v283
    %610 = vmatpush1.msra.mxu0 %v282
    %611 = vmatprep.subr.mxu0 %v287
    %612 = vmatpush1.msra.mxu0 %v286
    %613 = vmatprep.subr.mxu0 %v291
    %614 = vmatpush1.msra.mxu0 %v290
    %615 = vmatprep.subr.mxu0 %v295
    %616 = vmatpush1.msra.mxu0 %v294
    %617 = vmatprep.subr.mxu0 %v299
    %618 = vmatpush1.msra.mxu0 %v298
    %619 = vmatprep.subr.mxu0 %v303
    %620 = vmatpush1.msra.mxu0 %v302
    %621 = vmatprep.subr.mxu0 %v307
    %622 = vmatpush1.msra.mxu0 %v306
    %623 = vmatprep.subr.mxu0 %v311
    %624 = vmatpush1.msra.mxu0 %v310
    %625 = vmatprep.subr.mxu0 %v315
    %626 = vmatpush1.msra.mxu0 %v314
    %627 = vmatprep.subr.mxu0 %v319
    %628 = vmatpush1.msra.mxu0 %v318
    %629 = vmatprep.subr.mxu0 %v323
    %630 = vmatpush1.msra.mxu0 %v322
    %631 = vmatprep.subr.mxu0 %v327
    %632 = vmatpush1.msra.mxu0 %v326
    %633 = vmatprep.subr.mxu0 %v331
    %634 = vmatpush1.msra.mxu0 %v330
    %635 = vmatprep.subr.mxu0 %v335
    %636 = vmatpush1.msra.mxu0 %v334
    %637 = vmatprep.subr.mxu0 %v339
    %638 = vmatpush1.msra.mxu0 %v338
    %639 = vmatprep.mubr.f32.mxu0 %v83
    %640 = vmatmul.mubr.f32.gmra.mrb[0].mxu0 %v82
    %v641 = vpop.f32.mrb[0].mxu0
    %v642 = vadd.f32 %v571, %v641
    %v643 = vpop.f32.mrb[0].mxu0
    %v644 = vadd.f32 %v573, %v643
    %645 = vdwg.mxu0
    %v646 = vmax.f32 %v500, 0.0
    %v647 = vmax.f32 %v502, 0.0
    %v648 = vmax.f32 %v642, 0.0
    %v649 = vmax.f32 %v644, 0.0
    %v650 = vld [vmem:[#allocation7] sm:$0xff]
    %v651 = vld [vmem:[#allocation7 + $0x8] sm:$0xff]
    %v652 = vld [vmem:[#allocation7 + $0x10] sm:$0xff]
    %v653 = vld [vmem:[#allocation7 + $0x18] sm:$0xff]
    %v654 = vld [vmem:[#allocation7 + $0x20] sm:$0xff]
    %v655 = vld [vmem:[#allocation7 + $0x28] sm:$0xff]
    %v656 = vld [vmem:[#allocation7 + $0x30] sm:$0xff]
    %v657 = vld [vmem:[#allocation7 + $0x38] sm:$0xff]
    %v658 = vld [vmem:[#allocation7 + $0x40] sm:$0xff]
    %v659 = vld [vmem:[#allocation7 + $0x48] sm:$0xff]
    %v660 = vld [vmem:[#allocation7 + $0x50] sm:$0xff]
    %v661 = vld [vmem:[#allocation7 + $0x58] sm:$0xff]
    %v662 = vld [vmem:[#allocation7 + $0x60] sm:$0xff]
    %v663 = vld [vmem:[#allocation7 + $0x68] sm:$0xff]
    %v664 = vld [vmem:[#allocation7 + $0x70] sm:$0xff]
    %v665 = vld [vmem:[#allocation7 + $0x78] sm:$0xff]
    %v666 = vld [vmem:[#allocation7 + $0x80] sm:$0xff]
    %v667 = vld [vmem:[#allocation7 + $0x88] sm:$0xff]
    %v668 = vld [vmem:[#allocation7 + $0x90] sm:$0xff]
    %v669 = vld [vmem:[#allocation7 + $0x98] sm:$0xff]
    %v670 = vld [vmem:[#allocation7 + $0xa0] sm:$0xff]
    %v671 = vld [vmem:[#allocation7 + $0xa8] sm:$0xff]
    %v672 = vld [vmem:[#allocation7 + $0xb0] sm:$0xff]
    %v673 = vld [vmem:[#allocation7 + $0xb8] sm:$0xff]
    %v674 = vld [vmem:[#allocation7 + $0xc0] sm:$0xff]
    %v675 = vld [vmem:[#allocation7 + $0xc8] sm:$0xff]
    %v676 = vld [vmem:[#allocation7 + $0xd0] sm:$0xff]
    %v677 = vld [vmem:[#allocation7 + $0xd8] sm:$0xff]
    %v678 = vld [vmem:[#allocation7 + $0xe0] sm:$0xff]
    %v679 = vld [vmem:[#allocation7 + $0xe8] sm:$0xff]
    %v680 = vld [vmem:[#allocation7 + $0xf0] sm:$0xff]
    %v681 = vld [vmem:[#allocation7 + $0xf8] sm:$0xff]
    %v682 = vld [vmem:[#allocation7 + $0x100] sm:$0xff]
    %v683 = vld [vmem:[#allocation7 + $0x108] sm:$0xff]
    %v684 = vld [vmem:[#allocation7 + $0x110] sm:$0xff]
    %v685 = vld [vmem:[#allocation7 + $0x118] sm:$0xff]
    %v686 = vld [vmem:[#allocation7 + $0x120] sm:$0xff]
    %v687 = vld [vmem:[#allocation7 + $0x128] sm:$0xff]
    %v688 = vld [vmem:[#allocation7 + $0x130] sm:$0xff]
    %v689 = vld [vmem:[#allocation7 + $0x138] sm:$0xff]
    %v690 = vld [vmem:[#allocation7 + $0x140] sm:$0xff]
    %v691 = vld [vmem:[#allocation7 + $0x148] sm:$0xff]
    %v692 = vld [vmem:[#allocation7 + $0x150] sm:$0xff]
    %v693 = vld [vmem:[#allocation7 + $0x158] sm:$0xff]
    %v694 = vld [vmem:[#allocation7 + $0x160] sm:$0xff]
    %v695 = vld [vmem:[#allocation7 + $0x168] sm:$0xff]
    %v696 = vld [vmem:[#allocation7 + $0x170] sm:$0xff]
    %v697 = vld [vmem:[#allocation7 + $0x178] sm:$0xff]
    %v698 = vld [vmem:[#allocation7 + $0x180] sm:$0xff]
    %v699 = vld [vmem:[#allocation7 + $0x188] sm:$0xff]
    %v700 = vld [vmem:[#allocation7 + $0x190] sm:$0xff]
    %v701 = vld [vmem:[#allocation7 + $0x198] sm:$0xff]
    %v702 = vld [vmem:[#allocation7 + $0x1a0] sm:$0xff]
    %v703 = vld [vmem:[#allocation7 + $0x1a8] sm:$0xff]
    %v704 = vld [vmem:[#allocation7 + $0x1b0] sm:$0xff]
    %v705 = vld [vmem:[#allocation7 + $0x1b8] sm:$0xff]
    %v706 = vld [vmem:[#allocation7 + $0x1c0] sm:$0xff]
    %v707 = vld [vmem:[#allocation7 + $0x1c8] sm:$0xff]
    %v708 = vld [vmem:[#allocation7 + $0x1d0] sm:$0xff]
    %v709 = vld [vmem:[#allocation7 + $0x1d8] sm:$0xff]
    %v710 = vld [vmem:[#allocation7 + $0x1e0] sm:$0xff]
    %v711 = vld [vmem:[#allocation7 + $0x1e8] sm:$0xff]
    %v712 = vld [vmem:[#allocation7 + $0x1f0] sm:$0xff]
    %v713 = vld [vmem:[#allocation7 + $0x1f8] sm:$0xff]
    %v714 = vld [vmem:[#allocation7 + $0x200] sm:$0xff]
    %v715 = vld [vmem:[#allocation7 + $0x208] sm:$0xff]
    %v716 = vld [vmem:[#allocation7 + $0x210] sm:$0xff]
    %v717 = vld [vmem:[#allocation7 + $0x218] sm:$0xff]
    %v718 = vld [vmem:[#allocation7 + $0x220] sm:$0xff]
    %v719 = vld [vmem:[#allocation7 + $0x228] sm:$0xff]
    %v720 = vld [vmem:[#allocation7 + $0x230] sm:$0xff]
    %v721 = vld [vmem:[#allocation7 + $0x238] sm:$0xff]
    %v722 = vld [vmem:[#allocation7 + $0x240] sm:$0xff]
    %v723 = vld [vmem:[#allocation7 + $0x248] sm:$0xff]
    %v724 = vld [vmem:[#allocation7 + $0x250] sm:$0xff]
    %v725 = vld [vmem:[#allocation7 + $0x258] sm:$0xff]
    %v726 = vld [vmem:[#allocation7 + $0x260] sm:$0xff]
    %v727 = vld [vmem:[#allocation7 + $0x268] sm:$0xff]
    %v728 = vld [vmem:[#allocation7 + $0x270] sm:$0xff]
    %v729 = vld [vmem:[#allocation7 + $0x278] sm:$0xff]
    %v730 = vld [vmem:[#allocation7 + $0x280] sm:$0xff]
    %v731 = vld [vmem:[#allocation7 + $0x288] sm:$0xff]
    %v732 = vld [vmem:[#allocation7 + $0x290] sm:$0xff]
    %v733 = vld [vmem:[#allocation7 + $0x298] sm:$0xff]
    %v734 = vld [vmem:[#allocation7 + $0x2a0] sm:$0xff]
    %v735 = vld [vmem:[#allocation7 + $0x2a8] sm:$0xff]
    %v736 = vld [vmem:[#allocation7 + $0x2b0] sm:$0xff]
    %v737 = vld [vmem:[#allocation7 + $0x2b8] sm:$0xff]
    %v738 = vld [vmem:[#allocation7 + $0x2c0] sm:$0xff]
    %v739 = vld [vmem:[#allocation7 + $0x2c8] sm:$0xff]
    %v740 = vld [vmem:[#allocation7 + $0x2d0] sm:$0xff]
    %v741 = vld [vmem:[#allocation7 + $0x2d8] sm:$0xff]
    %v742 = vld [vmem:[#allocation7 + $0x2e0] sm:$0xff]
    %v743 = vld [vmem:[#allocation7 + $0x2e8] sm:$0xff]
    %v744 = vld [vmem:[#allocation7 + $0x2f0] sm:$0xff]
    %v745 = vld [vmem:[#allocation7 + $0x2f8] sm:$0xff]
    %v746 = vld [vmem:[#allocation7 + $0x300] sm:$0xff]
    %v747 = vld [vmem:[#allocation7 + $0x308] sm:$0xff]
    %v748 = vld [vmem:[#allocation7 + $0x310] sm:$0xff]
    %v749 = vld [vmem:[#allocation7 + $0x318] sm:$0xff]
    %v750 = vld [vmem:[#allocation7 + $0x320] sm:$0xff]
    %v751 = vld [vmem:[#allocation7 + $0x328] sm:$0xff]
    %v752 = vld [vmem:[#allocation7 + $0x330] sm:$0xff]
    %v753 = vld [vmem:[#allocation7 + $0x338] sm:$0xff]
    %v754 = vld [vmem:[#allocation7 + $0x340] sm:$0xff]
    %v755 = vld [vmem:[#allocation7 + $0x348] sm:$0xff]
    %v756 = vld [vmem:[#allocation7 + $0x350] sm:$0xff]
    %v757 = vld [vmem:[#allocation7 + $0x358] sm:$0xff]
    %v758 = vld [vmem:[#allocation7 + $0x360] sm:$0xff]
    %v759 = vld [vmem:[#allocation7 + $0x368] sm:$0xff]
    %v760 = vld [vmem:[#allocation7 + $0x370] sm:$0xff]
    %v761 = vld [vmem:[#allocation7 + $0x378] sm:$0xff]
    %v762 = vld [vmem:[#allocation7 + $0x380] sm:$0xff]
    %v763 = vld [vmem:[#allocation7 + $0x388] sm:$0xff]
    %v764 = vld [vmem:[#allocation7 + $0x390] sm:$0xff]
    %v765 = vld [vmem:[#allocation7 + $0x398] sm:$0xff]
    %v766 = vld [vmem:[#allocation7 + $0x3a0] sm:$0xff]
    %v767 = vld [vmem:[#allocation7 + $0x3a8] sm:$0xff]
    %v768 = vld [vmem:[#allocation7 + $0x3b0] sm:$0xff]
    %v769 = vld [vmem:[#allocation7 + $0x3b8] sm:$0xff]
    %v770 = vld [vmem:[#allocation7 + $0x3c0] sm:$0xff]
    %v771 = vld [vmem:[#allocation7 + $0x3c8] sm:$0xff]
    %v772 = vld [vmem:[#allocation7 + $0x3d0] sm:$0xff]
    %v773 = vld [vmem:[#allocation7 + $0x3d8] sm:$0xff]
    %v774 = vld [vmem:[#allocation7 + $0x3e0] sm:$0xff]
    %v775 = vld [vmem:[#allocation7 + $0x3e8] sm:$0xff]
    %v776 = vld [vmem:[#allocation7 + $0x3f0] sm:$0xff]
    %v777 = vld [vmem:[#allocation7 + $0x3f8] sm:$0xff]
    %v778 = vld [vmem:[#allocation7 + $0x400] sm:$0xff]
    %v779 = vld [vmem:[#allocation7 + $0x408] sm:$0xff]
    %v780 = vld [vmem:[#allocation7 + $0x410] sm:$0xff]
    %v781 = vld [vmem:[#allocation7 + $0x418] sm:$0xff]
    %v782 = vld [vmem:[#allocation7 + $0x420] sm:$0xff]
    %v783 = vld [vmem:[#allocation7 + $0x428] sm:$0xff]
    %v784 = vld [vmem:[#allocation7 + $0x430] sm:$0xff]
    %v785 = vld [vmem:[#allocation7 + $0x438] sm:$0xff]
    %v786 = vld [vmem:[#allocation7 + $0x440] sm:$0xff]
    %v787 = vld [vmem:[#allocation7 + $0x448] sm:$0xff]
    %v788 = vld [vmem:[#allocation7 + $0x450] sm:$0xff]
    %v789 = vld [vmem:[#allocation7 + $0x458] sm:$0xff]
    %v790 = vld [vmem:[#allocation7 + $0x460] sm:$0xff]
    %v791 = vld [vmem:[#allocation7 + $0x468] sm:$0xff]
    %v792 = vld [vmem:[#allocation7 + $0x470] sm:$0xff]
    %v793 = vld [vmem:[#allocation7 + $0x478] sm:$0xff]
    %v794 = vld [vmem:[#allocation7 + $0x480] sm:$0xff]
    %v795 = vld [vmem:[#allocation7 + $0x488] sm:$0xff]
    %v796 = vld [vmem:[#allocation7 + $0x490] sm:$0xff]
    %v797 = vld [vmem:[#allocation7 + $0x498] sm:$0xff]
    %v798 = vld [vmem:[#allocation7 + $0x4a0] sm:$0xff]
    %v799 = vld [vmem:[#allocation7 + $0x4a8] sm:$0xff]
    %v800 = vld [vmem:[#allocation7 + $0x4b0] sm:$0xff]
    %v801 = vld [vmem:[#allocation7 + $0x4b8] sm:$0xff]
    %v802 = vld [vmem:[#allocation7 + $0x4c0] sm:$0xff]
    %v803 = vld [vmem:[#allocation7 + $0x4c8] sm:$0xff]
    %v804 = vld [vmem:[#allocation7 + $0x4d0] sm:$0xff]
    %v805 = vld [vmem:[#allocation7 + $0x4d8] sm:$0xff]
    %v806 = vld [vmem:[#allocation7 + $0x4e0] sm:$0xff]
    %v807 = vld [vmem:[#allocation7 + $0x4e8] sm:$0xff]
    %v808 = vld [vmem:[#allocation7 + $0x4f0] sm:$0xff]
    %v809 = vld [vmem:[#allocation7 + $0x4f8] sm:$0xff]
    %v810 = vld [vmem:[#allocation7 + $0x500] sm:$0xff]
    %v811 = vld [vmem:[#allocation7 + $0x508] sm:$0xff]
    %v812 = vld [vmem:[#allocation7 + $0x510] sm:$0xff]
    %v813 = vld [vmem:[#allocation7 + $0x518] sm:$0xff]
    %v814 = vld [vmem:[#allocation7 + $0x520] sm:$0xff]
    %v815 = vld [vmem:[#allocation7 + $0x528] sm:$0xff]
    %v816 = vld [vmem:[#allocation7 + $0x530] sm:$0xff]
    %v817 = vld [vmem:[#allocation7 + $0x538] sm:$0xff]
    %v818 = vld [vmem:[#allocation7 + $0x540] sm:$0xff]
    %v819 = vld [vmem:[#allocation7 + $0x548] sm:$0xff]
    %v820 = vld [vmem:[#allocation7 + $0x550] sm:$0xff]
    %v821 = vld [vmem:[#allocation7 + $0x558] sm:$0xff]
    %v822 = vld [vmem:[#allocation7 + $0x560] sm:$0xff]
    %v823 = vld [vmem:[#allocation7 + $0x568] sm:$0xff]
    %v824 = vld [vmem:[#allocation7 + $0x570] sm:$0xff]
    %v825 = vld [vmem:[#allocation7 + $0x578] sm:$0xff]
    %v826 = vld [vmem:[#allocation7 + $0x580] sm:$0xff]
    %v827 = vld [vmem:[#allocation7 + $0x588] sm:$0xff]
    %v828 = vld [vmem:[#allocation7 + $0x590] sm:$0xff]
    %v829 = vld [vmem:[#allocation7 + $0x598] sm:$0xff]
    %v830 = vld [vmem:[#allocation7 + $0x5a0] sm:$0xff]
    %v831 = vld [vmem:[#allocation7 + $0x5a8] sm:$0xff]
    %v832 = vld [vmem:[#allocation7 + $0x5b0] sm:$0xff]
    %v833 = vld [vmem:[#allocation7 + $0x5b8] sm:$0xff]
    %v834 = vld [vmem:[#allocation7 + $0x5c0] sm:$0xff]
    %v835 = vld [vmem:[#allocation7 + $0x5c8] sm:$0xff]
    %v836 = vld [vmem:[#allocation7 + $0x5d0] sm:$0xff]
    %v837 = vld [vmem:[#allocation7 + $0x5d8] sm:$0xff]
    %v838 = vld [vmem:[#allocation7 + $0x5e0] sm:$0xff]
    %v839 = vld [vmem:[#allocation7 + $0x5e8] sm:$0xff]
    %v840 = vld [vmem:[#allocation7 + $0x5f0] sm:$0xff]
    %v841 = vld [vmem:[#allocation7 + $0x5f8] sm:$0xff]
    %v842 = vld [vmem:[#allocation7 + $0x600] sm:$0xff]
    %v843 = vld [vmem:[#allocation7 + $0x608] sm:$0xff]
    %v844 = vld [vmem:[#allocation7 + $0x610] sm:$0xff]
    %v845 = vld [vmem:[#allocation7 + $0x618] sm:$0xff]
    %v846 = vld [vmem:[#allocation7 + $0x620] sm:$0xff]
    %v847 = vld [vmem:[#allocation7 + $0x628] sm:$0xff]
    %v848 = vld [vmem:[#allocation7 + $0x630] sm:$0xff]
    %v849 = vld [vmem:[#allocation7 + $0x638] sm:$0xff]
    %v850 = vld [vmem:[#allocation7 + $0x640] sm:$0xff]
    %v851 = vld [vmem:[#allocation7 + $0x648] sm:$0xff]
    %v852 = vld [vmem:[#allocation7 + $0x650] sm:$0xff]
    %v853 = vld [vmem:[#allocation7 + $0x658] sm:$0xff]
    %v854 = vld [vmem:[#allocation7 + $0x660] sm:$0xff]
    %v855 = vld [vmem:[#allocation7 + $0x668] sm:$0xff]
    %v856 = vld [vmem:[#allocation7 + $0x670] sm:$0xff]
    %v857 = vld [vmem:[#allocation7 + $0x678] sm:$0xff]
    %v858 = vld [vmem:[#allocation7 + $0x680] sm:$0xff]
    %v859 = vld [vmem:[#allocation7 + $0x688] sm:$0xff]
    %v860 = vld [vmem:[#allocation7 + $0x690] sm:$0xff]
    %v861 = vld [vmem:[#allocation7 + $0x698] sm:$0xff]
    %v862 = vld [vmem:[#allocation7 + $0x6a0] sm:$0xff]
    %v863 = vld [vmem:[#allocation7 + $0x6a8] sm:$0xff]
    %v864 = vld [vmem:[#allocation7 + $0x6b0] sm:$0xff]
    %v865 = vld [vmem:[#allocation7 + $0x6b8] sm:$0xff]
    %v866 = vld [vmem:[#allocation7 + $0x6c0] sm:$0xff]
    %v867 = vld [vmem:[#allocation7 + $0x6c8] sm:$0xff]
    %v868 = vld [vmem:[#allocation7 + $0x6d0] sm:$0xff]
    %v869 = vld [vmem:[#allocation7 + $0x6d8] sm:$0xff]
    %v870 = vld [vmem:[#allocation7 + $0x6e0] sm:$0xff]
    %v871 = vld [vmem:[#allocation7 + $0x6e8] sm:$0xff]
    %v872 = vld [vmem:[#allocation7 + $0x6f0] sm:$0xff]
    %v873 = vld [vmem:[#allocation7 + $0x6f8] sm:$0xff]
    %v874 = vld [vmem:[#allocation7 + $0x700] sm:$0xff]
    %v875 = vld [vmem:[#allocation7 + $0x708] sm:$0xff]
    %v876 = vld [vmem:[#allocation7 + $0x710] sm:$0xff]
    %v877 = vld [vmem:[#allocation7 + $0x718] sm:$0xff]
    %v878 = vld [vmem:[#allocation7 + $0x720] sm:$0xff]
    %v879 = vld [vmem:[#allocation7 + $0x728] sm:$0xff]
    %v880 = vld [vmem:[#allocation7 + $0x730] sm:$0xff]
    %v881 = vld [vmem:[#allocation7 + $0x738] sm:$0xff]
    %v882 = vld [vmem:[#allocation7 + $0x740] sm:$0xff]
    %v883 = vld [vmem:[#allocation7 + $0x748] sm:$0xff]
    %v884 = vld [vmem:[#allocation7 + $0x750] sm:$0xff]
    %v885 = vld [vmem:[#allocation7 + $0x758] sm:$0xff]
    %v886 = vld [vmem:[#allocation7 + $0x760] sm:$0xff]
    %v887 = vld [vmem:[#allocation7 + $0x768] sm:$0xff]
    %v888 = vld [vmem:[#allocation7 + $0x770] sm:$0xff]
    %v889 = vld [vmem:[#allocation7 + $0x778] sm:$0xff]
    %v890 = vld [vmem:[#allocation7 + $0x780] sm:$0xff]
    %v891 = vld [vmem:[#allocation7 + $0x788] sm:$0xff]
    %v892 = vld [vmem:[#allocation7 + $0x790] sm:$0xff]
    %v893 = vld [vmem:[#allocation7 + $0x798] sm:$0xff]
    %v894 = vld [vmem:[#allocation7 + $0x7a0] sm:$0xff]
    %v895 = vld [vmem:[#allocation7 + $0x7a8] sm:$0xff]
    %v896 = vld [vmem:[#allocation7 + $0x7b0] sm:$0xff]
    %v897 = vld [vmem:[#allocation7 + $0x7b8] sm:$0xff]
    %v898 = vld [vmem:[#allocation7 + $0x7c0] sm:$0xff]
    %v899 = vld [vmem:[#allocation7 + $0x7c8] sm:$0xff]
    %v900 = vld [vmem:[#allocation7 + $0x7d0] sm:$0xff]
    %v901 = vld [vmem:[#allocation7 + $0x7d8] sm:$0xff]
    %v902 = vld [vmem:[#allocation7 + $0x7e0] sm:$0xff]
    %v903 = vld [vmem:[#allocation7 + $0x7e8] sm:$0xff]
    %v904 = vld [vmem:[#allocation7 + $0x7f0] sm:$0xff]
    %v905 = vld [vmem:[#allocation7 + $0x7f8] sm:$0xff]
    %v906 = vld [vmem:[%s4] sm:$0xf]
    %v908 = vlaneseq
    %v909 = vshrl.u32 %v908, 7
    %v910 = vsub.s32 0, %v909
    %v911 = vrot.slane %v906, %v910
    %v912 = vlaneseq
    %v913 = vshrl.u32 %v912, 7
    %v914 = vsub.s32 1, %v913
    %v915 = vrot.slane %v906, %v914
    %v916 = vlaneseq
    %v917 = vshrl.u32 %v916, 7
    %v918 = vsub.s32 2, %v917
    %v919 = vrot.slane %v906, %v918
    %v920 = vlaneseq
    %v921 = vshrl.u32 %v920, 7
    %v922 = vsub.s32 3, %v921
    %v923 = vrot.slane %v906, %v922
    %928 = vmatprep.subr.mxu0 %v651
    %929 = vmatpush1.msra.mxu0 %v650
    %930 = vmatprep.subr.mxu0 %v655
    %931 = vmatpush1.msra.mxu0 %v654
    %932 = vmatprep.subr.mxu0 %v659
    %933 = vmatpush1.msra.mxu0 %v658
    %934 = vmatprep.subr.mxu0 %v663
    %935 = vmatpush1.msra.mxu0 %v662
    %936 = vmatprep.subr.mxu0 %v667
    %937 = vmatpush1.msra.mxu0 %v666
    %938 = vmatprep.subr.mxu0 %v671
    %939 = vmatpush1.msra.mxu0 %v670
    %940 = vmatprep.subr.mxu0 %v675
    %941 = vmatpush1.msra.mxu0 %v674
    %942 = vmatprep.subr.mxu0 %v679
    %943 = vmatpush1.msra.mxu0 %v678
    %944 = vmatprep.subr.mxu0 %v683
    %945 = vmatpush1.msra.mxu0 %v682
    %946 = vmatprep.subr.mxu0 %v687
    %947 = vmatpush1.msra.mxu0 %v686
    %948 = vmatprep.subr.mxu0 %v691
    %949 = vmatpush1.msra.mxu0 %v690
    %950 = vmatprep.subr.mxu0 %v695
    %951 = vmatpush1.msra.mxu0 %v694
    %952 = vmatprep.subr.mxu0 %v699
    %953 = vmatpush1.msra.mxu0 %v698
    %954 = vmatprep.subr.mxu0 %v703
    %955 = vmatpush1.msra.mxu0 %v702
    %956 = vmatprep.subr.mxu0 %v707
    %957 = vmatpush1.msra.mxu0 %v706
    %958 = vmatprep.subr.mxu0 %v711
    %959 = vmatpush1.msra.mxu0 %v710
    %960 = vmatprep.subr.mxu0 %v715
    %961 = vmatpush1.msra.mxu0 %v714
    %962 = vmatprep.subr.mxu0 %v719
    %963 = vmatpush1.msra.mxu0 %v718
    %964 = vmatprep.subr.mxu0 %v723
    %965 = vmatpush1.msra.mxu0 %v722
    %966 = vmatprep.subr.mxu0 %v727
    %967 = vmatpush1.msra.mxu0 %v726
    %968 = vmatprep.subr.mxu0 %v731
    %969 = vmatpush1.msra.mxu0 %v730
    %970 = vmatprep.subr.mxu0 %v735
    %971 = vmatpush1.msra.mxu0 %v734
    %972 = vmatprep.subr.mxu0 %v739
    %973 = vmatpush1.msra.mxu0 %v738
    %974 = vmatprep.subr.mxu0 %v743
    %975 = vmatpush1.msra.mxu0 %v742
    %976 = vmatprep.subr.mxu0 %v747
    %977 = vmatpush1.msra.mxu0 %v746
    %978 = vmatprep.subr.mxu0 %v751
    %979 = vmatpush1.msra.mxu0 %v750
    %980 = vmatprep.subr.mxu0 %v755
    %981 = vmatpush1.msra.mxu0 %v754
    %982 = vmatprep.subr.mxu0 %v759
    %983 = vmatpush1.msra.mxu0 %v758
    %984 = vmatprep.subr.mxu0 %v763
    %985 = vmatpush1.msra.mxu0 %v762
    %986 = vmatprep.subr.mxu0 %v767
    %987 = vmatpush1.msra.mxu0 %v766
    %988 = vmatprep.subr.mxu0 %v771
    %989 = vmatpush1.msra.mxu0 %v770
    %990 = vmatprep.subr.mxu0 %v775
    %991 = vmatpush1.msra.mxu0 %v774
    %992 = vmatprep.mubr.f32.mxu0 %v647
    %993 = vmatmul.mubr.f32.gmra.mrb[0].mxu0 %v646
    %v994 = vpop.f32.mrb[0].mxu0
    %v995 = vadd.f32 %v911, %v994
    %v996 = vpop.f32.mrb[0].mxu0
    %v997 = vadd.f32 %v915, %v996
    %998 = vdwg.mxu0
    %999 = vmatprep.subr.mxu0 %v779
    %1000 = vmatpush1.msra.mxu0 %v778
    %1001 = vmatprep.subr.mxu0 %v783
    %1002 = vmatpush1.msra.mxu0 %v782
    %1003 = vmatprep.subr.mxu0 %v787
    %1004 = vmatpush1.msra.mxu0 %v786
    %1005 = vmatprep.subr.mxu0 %v791
    %1006 = vmatpush1.msra.mxu0 %v790
    %1007 = vmatprep.subr.mxu0 %v795
    %1008 = vmatpush1.msra.mxu0 %v794
    %1009 = vmatprep.subr.mxu0 %v799
    %1010 = vmatpush1.msra.mxu0 %v798
    %1011 = vmatprep.subr.mxu0 %v803
    %1012 = vmatpush1.msra.mxu0 %v802
    %1013 = vmatprep.subr.mxu0 %v807
    %1014 = vmatpush1.msra.mxu0 %v806
    %1015 = vmatprep.subr.mxu0 %v811
    %1016 = vmatpush1.msra.mxu0 %v810
    %1017 = vmatprep.subr.mxu0 %v815
    %1018 = vmatpush1.msra.mxu0 %v814
    %1019 = vmatprep.subr.mxu0 %v819
    %1020 = vmatpush1.msra.mxu0 %v818
    %1021 = vmatprep.subr.mxu0 %v823
    %1022 = vmatpush1.msra.mxu0 %v822
    %1023 = vmatprep.subr.mxu0 %v827
    %1024 = vmatpush1.msra.mxu0 %v826
    %1025 = vmatprep.subr.mxu0 %v831
    %1026 = vmatpush1.msra.mxu0 %v830
    %1027 = vmatprep.subr.mxu0 %v835
    %1028 = vmatpush1.msra.mxu0 %v834
    %1029 = vmatprep.subr.mxu0 %v839
    %1030 = vmatpush1.msra.mxu0 %v838
    %1031 = vmatprep.subr.mxu0 %v843
    %1032 = vmatpush1.msra.mxu0 %v842
    %1033 = vmatprep.subr.mxu0 %v847
    %1034 = vmatpush1.msra.mxu0 %v846
    %1035 = vmatprep.subr.mxu0 %v851
    %1036 = vmatpush1.msra.mxu0 %v850
    %1037 = vmatprep.subr.mxu0 %v855
    %1038 = vmatpush1.msra.mxu0 %v854
    %1039 = vmatprep.subr.mxu0 %v859
    %1040 = vmatpush1.msra.mxu0 %v858
    %1041 = vmatprep.subr.mxu0 %v863
    %1042 = vmatpush1.msra.mxu0 %v862
    %1043 = vmatprep.subr.mxu0 %v867
    %1044 = vmatpush1.msra.mxu0 %v866
    %1045 = vmatprep.subr.mxu0 %v871
    %1046 = vmatpush1.msra.mxu0 %v870
    %1047 = vmatprep.subr.mxu0 %v875
    %1048 = vmatpush1.msra.mxu0 %v874
    %1049 = vmatprep.subr.mxu0 %v879
    %1050 = vmatpush1.msra.mxu0 %v878
    %1051 = vmatprep.subr.mxu0 %v883
    %1052 = vmatpush1.msra.mxu0 %v882
    %1053 = vmatprep.subr.mxu0 %v887
    %1054 = vmatpush1.msra.mxu0 %v886
    %1055 = vmatprep.subr.mxu0 %v891
    %1056 = vmatpush1.msra.mxu0 %v890
    %1057 = vmatprep.subr.mxu0 %v895
    %1058 = vmatpush1.msra.mxu0 %v894
    %1059 = vmatprep.subr.mxu0 %v899
    %1060 = vmatpush1.msra.mxu0 %v898
    %1061 = vmatprep.subr.mxu0 %v903
    %1062 = vmatpush1.msra.mxu0 %v902
    %1063 = vmatprep.mubr.f32.mxu0 %v649
    %1064 = vmatmul.mubr.f32.gmra.mrb[0].mxu0 %v648
    %v1065 = vpop.f32.mrb[0].mxu0
    %v1066 = vadd.f32 %v995, %v1065
    %v1067 = vpop.f32.mrb[0].mxu0
    %v1068 = vadd.f32 %v997, %v1067
    %1069 = vdwg.mxu0
    %1070 = vmatprep.subr.mxu0 %v653
    %1071 = vmatpush1.msra.mxu0 %v652
    %1072 = vmatprep.subr.mxu0 %v657
    %1073 = vmatpush1.msra.mxu0 %v656
    %1074 = vmatprep.subr.mxu0 %v661
    %1075 = vmatpush1.msra.mxu0 %v660
    %1076 = vmatprep.subr.mxu0 %v665
    %1077 = vmatpush1.msra.mxu0 %v664
    %1078 = vmatprep.subr.mxu0 %v669
    %1079 = vmatpush1.msra.mxu0 %v668
    %1080 = vmatprep.subr.mxu0 %v673
    %1081 = vmatpush1.msra.mxu0 %v672
    %1082 = vmatprep.subr.mxu0 %v677
    %1083 = vmatpush1.msra.mxu0 %v676
    %1084 = vmatprep.subr.mxu0 %v681
    %1085 = vmatpush1.msra.mxu0 %v680
    %1086 = vmatprep.subr.mxu0 %v685
    %1087 = vmatpush1.msra.mxu0 %v684
    %1088 = vmatprep.subr.mxu0 %v689
    %1089 = vmatpush1.msra.mxu0 %v688
    %1090 = vmatprep.subr.mxu0 %v693
    %1091 = vmatpush1.msra.mxu0 %v692
    %1092 = vmatprep.subr.mxu0 %v697
    %1093 = vmatpush1.msra.mxu0 %v696
    %1094 = vmatprep.subr.mxu0 %v701
    %1095 = vmatpush1.msra.mxu0 %v700
    %1096 = vmatprep.subr.mxu0 %v705
    %1097 = vmatpush1.msra.mxu0 %v704
    %1098 = vmatprep.subr.mxu0 %v709
    %1099 = vmatpush1.msra.mxu0 %v708
    %1100 = vmatprep.subr.mxu0 %v713
    %1101 = vmatpush1.msra.mxu0 %v712
    %1102 = vmatprep.subr.mxu0 %v717
    %1103 = vmatpush1.msra.mxu0 %v716
    %1104 = vmatprep.subr.mxu0 %v721
    %1105 = vmatpush1.msra.mxu0 %v720
    %1106 = vmatprep.subr.mxu0 %v725
    %1107 = vmatpush1.msra.mxu0 %v724
    %1108 = vmatprep.subr.mxu0 %v729
    %1109 = vmatpush1.msra.mxu0 %v728
    %1110 = vmatprep.subr.mxu0 %v733
    %1111 = vmatpush1.msra.mxu0 %v732
    %1112 = vmatprep.subr.mxu0 %v737
    %1113 = vmatpush1.msra.mxu0 %v736
    %1114 = vmatprep.subr.mxu0 %v741
    %1115 = vmatpush1.msra.mxu0 %v740
    %1116 = vmatprep.subr.mxu0 %v745
    %1117 = vmatpush1.msra.mxu0 %v744
    %1118 = vmatprep.subr.mxu0 %v749
    %1119 = vmatpush1.msra.mxu0 %v748
    %1120 = vmatprep.subr.mxu0 %v753
    %1121 = vmatpush1.msra.mxu0 %v752
    %1122 = vmatprep.subr.mxu0 %v757
    %1123 = vmatpush1.msra.mxu0 %v756
    %1124 = vmatprep.subr.mxu0 %v761
    %1125 = vmatpush1.msra.mxu0 %v760
    %1126 = vmatprep.subr.mxu0 %v765
    %1127 = vmatpush1.msra.mxu0 %v764
    %1128 = vmatprep.subr.mxu0 %v769
    %1129 = vmatpush1.msra.mxu0 %v768
    %1130 = vmatprep.subr.mxu0 %v773
    %1131 = vmatpush1.msra.mxu0 %v772
    %1132 = vmatprep.subr.mxu0 %v777
    %1133 = vmatpush1.msra.mxu0 %v776
    %1134 = vmatprep.mubr.f32.mxu0 %v647
    %1135 = vmatmul.mubr.f32.gmra.mrb[0].mxu0 %v646
    %v1136 = vpop.f32.mrb[0].mxu0
    %v1137 = vadd.f32 %v919, %v1136
    %v1138 = vpop.f32.mrb[0].mxu0
    %v1139 = vadd.f32 %v923, %v1138
    %1140 = vdwg.mxu0
    %1141 = vmatprep.subr.mxu0 %v781
    %1142 = vmatpush1.msra.mxu0 %v780
    %1143 = vmatprep.subr.mxu0 %v785
    %1144 = vmatpush1.msra.mxu0 %v784
    %1145 = vmatprep.subr.mxu0 %v789
    %1146 = vmatpush1.msra.mxu0 %v788
    %1147 = vmatprep.subr.mxu0 %v793
    %1148 = vmatpush1.msra.mxu0 %v792
    %1149 = vmatprep.subr.mxu0 %v797
    %1150 = vmatpush1.msra.mxu0 %v796
    %1151 = vmatprep.subr.mxu0 %v801
    %1152 = vmatpush1.msra.mxu0 %v800
    %1153 = vmatprep.subr.mxu0 %v805
    %1154 = vmatpush1.msra.mxu0 %v804
    %1155 = vmatprep.subr.mxu0 %v809
    %1156 = vmatpush1.msra.mxu0 %v808
    %1157 = vmatprep.subr.mxu0 %v813
    %1158 = vmatpush1.msra.mxu0 %v812
    %1159 = vmatprep.subr.mxu0 %v817
    %1160 = vmatpush1.msra.mxu0 %v816
    %1161 = vmatprep.subr.mxu0 %v821
    %1162 = vmatpush1.msra.mxu0 %v820
    %1163 = vmatprep.subr.mxu0 %v825
    %1164 = vmatpush1.msra.mxu0 %v824
    %1165 = vmatprep.subr.mxu0 %v829
    %1166 = vmatpush1.msra.mxu0 %v828
    %1167 = vmatprep.subr.mxu0 %v833
    %1168 = vmatpush1.msra.mxu0 %v832
    %1169 = vmatprep.subr.mxu0 %v837
    %1170 = vmatpush1.msra.mxu0 %v836
    %1171 = vmatprep.subr.mxu0 %v841
    %1172 = vmatpush1.msra.mxu0 %v840
    %1173 = vmatprep.subr.mxu0 %v845
    %1174 = vmatpush1.msra.mxu0 %v844
    %1175 = vmatprep.subr.mxu0 %v849
    %1176 = vmatpush1.msra.mxu0 %v848
    %1177 = vmatprep.subr.mxu0 %v853
    %1178 = vmatpush1.msra.mxu0 %v852
    %1179 = vmatprep.subr.mxu0 %v857
    %1180 = vmatpush1.msra.mxu0 %v856
    %1181 = vmatprep.subr.mxu0 %v861
    %1182 = vmatpush1.msra.mxu0 %v860
    %1183 = vmatprep.subr.mxu0 %v865
    %1184 = vmatpush1.msra.mxu0 %v864
    %1185 = vmatprep.subr.mxu0 %v869
    %1186 = vmatpush1.msra.mxu0 %v868
    %1187 = vmatprep.subr.mxu0 %v873
    %1188 = vmatpush1.msra.mxu0 %v872
    %1189 = vmatprep.subr.mxu0 %v877
    %1190 = vmatpush1.msra.mxu0 %v876
    %1191 = vmatprep.subr.mxu0 %v881
    %1192 = vmatpush1.msra.mxu0 %v880
    %1193 = vmatprep.subr.mxu0 %v885
    %1194 = vmatpush1.msra.mxu0 %v884
    %1195 = vmatprep.subr.mxu0 %v889
    %1196 = vmatpush1.msra.mxu0 %v888
    %1197 = vmatprep.subr.mxu0 %v893
    %1198 = vmatpush1.msra.mxu0 %v892
    %1199 = vmatprep.subr.mxu0 %v897
    %1200 = vmatpush1.msra.mxu0 %v896
    %1201 = vmatprep.subr.mxu0 %v901
    %1202 = vmatpush1.msra.mxu0 %v900
    %1203 = vmatprep.subr.mxu0 %v905
    %1204 = vmatpush1.msra.mxu0 %v904
    %1205 = vmatprep.mubr.f32.mxu0 %v649
    %1206 = vmatmul.mubr.f32.gmra.mrb[0].mxu0 %v648
    %v1207 = vpop.f32.mrb[0].mxu0
    %v1208 = vadd.f32 %v1137, %v1207
    %v1209 = vpop.f32.mrb[0].mxu0
    %v1210 = vadd.f32 %v1139, %v1209
    %1211 = vdwg.mxu0
    %v1212 = vmax.f32 %v1066, 0.0
    %v1213 = vmax.f32 %v1068, 0.0
    %v1214 = vmax.f32 %v1208, 0.0
    %v1215 = vmax.f32 %v1210, 0.0
    %v1216 = vld [vmem:[#allocation8] sm:$0xff]
    %v1217 = vld [vmem:[#allocation8 + $0x8] sm:$0xff]
    %v1218 = vld [vmem:[#allocation8 + $0x10] sm:$0xff]
    %v1219 = vld [vmem:[#allocation8 + $0x18] sm:$0xff]
    %v1220 = vld [vmem:[#allocation8 + $0x20] sm:$0xff]
    %v1221 = vld [vmem:[#allocation8 + $0x28] sm:$0xff]
    %v1222 = vld [vmem:[#allocation8 + $0x30] sm:$0xff]
    %v1223 = vld [vmem:[#allocation8 + $0x38] sm:$0xff]
    %v1224 = vld [vmem:[#allocation8 + $0x40] sm:$0xff]
    %v1225 = vld [vmem:[#allocation8 + $0x48] sm:$0xff]
    %v1226 = vld [vmem:[#allocation8 + $0x50] sm:$0xff]
    %v1227 = vld [vmem:[#allocation8 + $0x58] sm:$0xff]
    %v1228 = vld [vmem:[#allocation8 + $0x60] sm:$0xff]
    %v1229 = vld [vmem:[#allocation8 + $0x68] sm:$0xff]
    %v1230 = vld [vmem:[#allocation8 + $0x70] sm:$0xff]
    %v1231 = vld [vmem:[#allocation8 + $0x78] sm:$0xff]
    %v1232 = vld [vmem:[#allocation8 + $0x80] sm:$0xff]
    %v1233 = vld [vmem:[#allocation8 + $0x88] sm:$0xff]
    %v1234 = vld [vmem:[#allocation8 + $0x90] sm:$0xff]
    %v1235 = vld [vmem:[#allocation8 + $0x98] sm:$0xff]
    %v1236 = vld [vmem:[#allocation8 + $0xa0] sm:$0xff]
    %v1237 = vld [vmem:[#allocation8 + $0xa8] sm:$0xff]
    %v1238 = vld [vmem:[#allocation8 + $0xb0] sm:$0xff]
    %v1239 = vld [vmem:[#allocation8 + $0xb8] sm:$0xff]
    %v1240 = vld [vmem:[#allocation8 + $0xc0] sm:$0xff]
    %v1241 = vld [vmem:[#allocation8 + $0xc8] sm:$0xff]
    %v1242 = vld [vmem:[#allocation8 + $0xd0] sm:$0xff]
    %v1243 = vld [vmem:[#allocation8 + $0xd8] sm:$0xff]
    %v1244 = vld [vmem:[#allocation8 + $0xe0] sm:$0xff]
    %v1245 = vld [vmem:[#allocation8 + $0xe8] sm:$0xff]
    %v1246 = vld [vmem:[#allocation8 + $0xf0] sm:$0xff]
    %v1247 = vld [vmem:[#allocation8 + $0xf8] sm:$0xff]
    %v1248 = vld [vmem:[#allocation8 + $0x100] sm:$0xff]
    %v1249 = vld [vmem:[#allocation8 + $0x108] sm:$0xff]
    %v1250 = vld [vmem:[#allocation8 + $0x110] sm:$0xff]
    %v1251 = vld [vmem:[#allocation8 + $0x118] sm:$0xff]
    %v1252 = vld [vmem:[#allocation8 + $0x120] sm:$0xff]
    %v1253 = vld [vmem:[#allocation8 + $0x128] sm:$0xff]
    %v1254 = vld [vmem:[#allocation8 + $0x130] sm:$0xff]
    %v1255 = vld [vmem:[#allocation8 + $0x138] sm:$0xff]
    %v1256 = vld [vmem:[#allocation8 + $0x140] sm:$0xff]
    %v1257 = vld [vmem:[#allocation8 + $0x148] sm:$0xff]
    %v1258 = vld [vmem:[#allocation8 + $0x150] sm:$0xff]
    %v1259 = vld [vmem:[#allocation8 + $0x158] sm:$0xff]
    %v1260 = vld [vmem:[#allocation8 + $0x160] sm:$0xff]
    %v1261 = vld [vmem:[#allocation8 + $0x168] sm:$0xff]
    %v1262 = vld [vmem:[#allocation8 + $0x170] sm:$0xff]
    %v1263 = vld [vmem:[#allocation8 + $0x178] sm:$0xff]
    %v1264 = vld [vmem:[#allocation8 + $0x180] sm:$0xff]
    %v1265 = vld [vmem:[#allocation8 + $0x188] sm:$0xff]
    %v1266 = vld [vmem:[#allocation8 + $0x190] sm:$0xff]
    %v1267 = vld [vmem:[#allocation8 + $0x198] sm:$0xff]
    %v1268 = vld [vmem:[#allocation8 + $0x1a0] sm:$0xff]
    %v1269 = vld [vmem:[#allocation8 + $0x1a8] sm:$0xff]
    %v1270 = vld [vmem:[#allocation8 + $0x1b0] sm:$0xff]
    %v1271 = vld [vmem:[#allocation8 + $0x1b8] sm:$0xff]
    %v1272 = vld [vmem:[#allocation8 + $0x1c0] sm:$0xff]
    %v1273 = vld [vmem:[#allocation8 + $0x1c8] sm:$0xff]
    %v1274 = vld [vmem:[#allocation8 + $0x1d0] sm:$0xff]
    %v1275 = vld [vmem:[#allocation8 + $0x1d8] sm:$0xff]
    %v1276 = vld [vmem:[#allocation8 + $0x1e0] sm:$0xff]
    %v1277 = vld [vmem:[#allocation8 + $0x1e8] sm:$0xff]
    %v1278 = vld [vmem:[#allocation8 + $0x1f0] sm:$0xff]
    %v1279 = vld [vmem:[#allocation8 + $0x1f8] sm:$0xff]
    %v1280 = vld [vmem:[%s6] sm:$0x1]
    %v1282 = vlaneseq
    %v1283 = vshrl.u32 %v1282, 7
    %v1284 = vsub.s32 0, %v1283
    %v1285 = vrot.slane %v1280, %v1284
    %1287 = vmatprep.subr.mxu0 0.0
    %1288 = vmatpush1.msra.mxu0 %v1216
    %1289 = vmatprep.subr.mxu0 0.0
    %1290 = vmatpush1.msra.mxu0 %v1217
    %1291 = vmatprep.subr.mxu0 0.0
    %1292 = vmatpush1.msra.mxu0 %v1218
    %1293 = vmatprep.subr.mxu0 0.0
    %1294 = vmatpush1.msra.mxu0 %v1219
    %1295 = vmatprep.subr.mxu0 0.0
    %1296 = vmatpush1.msra.mxu0 %v1220
    %1297 = vmatprep.subr.mxu0 0.0
    %1298 = vmatpush1.msra.mxu0 %v1221
    %1299 = vmatprep.subr.mxu0 0.0
    %1300 = vmatpush1.msra.mxu0 %v1222
    %1301 = vmatprep.subr.mxu0 0.0
    %1302 = vmatpush1.msra.mxu0 %v1223
    %1303 = vmatprep.subr.mxu0 0.0
    %1304 = vmatpush1.msra.mxu0 %v1224
    %1305 = vmatprep.subr.mxu0 0.0
    %1306 = vmatpush1.msra.mxu0 %v1225
    %1307 = vmatprep.subr.mxu0 0.0
    %1308 = vmatpush1.msra.mxu0 %v1226
    %1309 = vmatprep.subr.mxu0 0.0
    %1310 = vmatpush1.msra.mxu0 %v1227
    %1311 = vmatprep.subr.mxu0 0.0
    %1312 = vmatpush1.msra.mxu0 %v1228
    %1313 = vmatprep.subr.mxu0 0.0
    %1314 = vmatpush1.msra.mxu0 %v1229
    %1315 = vmatprep.subr.mxu0 0.0
    %1316 = vmatpush1.msra.mxu0 %v1230
    %1317 = vmatprep.subr.mxu0 0.0
    %1318 = vmatpush1.msra.mxu0 %v1231
    %1319 = vmatprep.subr.mxu0 0.0
    %1320 = vmatpush1.msra.mxu0 %v1232
    %1321 = vmatprep.subr.mxu0 0.0
    %1322 = vmatpush1.msra.mxu0 %v1233
    %1323 = vmatprep.subr.mxu0 0.0
    %1324 = vmatpush1.msra.mxu0 %v1234
    %1325 = vmatprep.subr.mxu0 0.0
    %1326 = vmatpush1.msra.mxu0 %v1235
    %1327 = vmatprep.subr.mxu0 0.0
    %1328 = vmatpush1.msra.mxu0 %v1236
    %1329 = vmatprep.subr.mxu0 0.0
    %1330 = vmatpush1.msra.mxu0 %v1237
    %1331 = vmatprep.subr.mxu0 0.0
    %1332 = vmatpush1.msra.mxu0 %v1238
    %1333 = vmatprep.subr.mxu0 0.0
    %1334 = vmatpush1.msra.mxu0 %v1239
    %1335 = vmatprep.subr.mxu0 0.0
    %1336 = vmatpush1.msra.mxu0 %v1240
    %1337 = vmatprep.subr.mxu0 0.0
    %1338 = vmatpush1.msra.mxu0 %v1241
    %1339 = vmatprep.subr.mxu0 0.0
    %1340 = vmatpush1.msra.mxu0 %v1242
    %1341 = vmatprep.subr.mxu0 0.0
    %1342 = vmatpush1.msra.mxu0 %v1243
    %1343 = vmatprep.subr.mxu0 0.0
    %1344 = vmatpush1.msra.mxu0 %v1244
    %1345 = vmatprep.subr.mxu0 0.0
    %1346 = vmatpush1.msra.mxu0 %v1245
    %1347 = vmatprep.subr.mxu0 0.0
    %1348 = vmatpush1.msra.mxu0 %v1246
    %1349 = vmatprep.subr.mxu0 0.0
    %1350 = vmatpush1.msra.mxu0 %v1247
    %1351 = vmatprep.mubr.f32.mxu0 %v1213
    %1352 = vmatmul.mubr.f32.gmra.mrb[0].mxu0 %v1212
    %v1353 = vpop.f32.mrb[0].mxu0
    %v1354 = vadd.f32 %v1285, %v1353
    %v1355 = vpop.f32.mrb[0].mxu0
    %1356 = vdwg.mxu0
    %1357 = vmatprep.subr.mxu0 0.0
    %1358 = vmatpush1.msra.mxu0 %v1248
    %1359 = vmatprep.subr.mxu0 0.0
    %1360 = vmatpush1.msra.mxu0 %v1249
    %1361 = vmatprep.subr.mxu0 0.0
    %1362 = vmatpush1.msra.mxu0 %v1250
    %1363 = vmatprep.subr.mxu0 0.0
    %1364 = vmatpush1.msra.mxu0 %v1251
    %1365 = vmatprep.subr.mxu0 0.0
    %1366 = vmatpush1.msra.mxu0 %v1252
    %1367 = vmatprep.subr.mxu0 0.0
    %1368 = vmatpush1.msra.mxu0 %v1253
    %1369 = vmatprep.subr.mxu0 0.0
    %1370 = vmatpush1.msra.mxu0 %v1254
    %1371 = vmatprep.subr.mxu0 0.0
    %1372 = vmatpush1.msra.mxu0 %v1255
    %1373 = vmatprep.subr.mxu0 0.0
    %1374 = vmatpush1.msra.mxu0 %v1256
    %1375 = vmatprep.subr.mxu0 0.0
    %1376 = vmatpush1.msra.mxu0 %v1257
    %1377 = vmatprep.subr.mxu0 0.0
    %1378 = vmatpush1.msra.mxu0 %v1258
    %1379 = vmatprep.subr.mxu0 0.0
    %1380 = vmatpush1.msra.mxu0 %v1259
    %1381 = vmatprep.subr.mxu0 0.0
    %1382 = vmatpush1.msra.mxu0 %v1260
    %1383 = vmatprep.subr.mxu0 0.0
    %1384 = vmatpush1.msra.mxu0 %v1261
    %1385 = vmatprep.subr.mxu0 0.0
    %1386 = vmatpush1.msra.mxu0 %v1262
    %1387 = vmatprep.subr.mxu0 0.0
    %1388 = vmatpush1.msra.mxu0 %v1263
    %1389 = vmatprep.subr.mxu0 0.0
    %1390 = vmatpush1.msra.mxu0 %v1264
    %1391 = vmatprep.subr.mxu0 0.0
    %1392 = vmatpush1.msra.mxu0 %v1265
    %1393 = vmatprep.subr.mxu0 0.0
    %1394 = vmatpush1.msra.mxu0 %v1266
    %1395 = vmatprep.subr.mxu0 0.0
    %1396 = vmatpush1.msra.mxu0 %v1267
    %1397 = vmatprep.subr.mxu0 0.0
    %1398 = vmatpush1.msra.mxu0 %v1268
    %1399 = vmatprep.subr.mxu0 0.0
    %1400 = vmatpush1.msra.mxu0 %v1269
    %1401 = vmatprep.subr.mxu0 0.0
    %1402 = vmatpush1.msra.mxu0 %v1270
    %1403 = vmatprep.subr.mxu0 0.0
    %1404 = vmatpush1.msra.mxu0 %v1271
    %1405 = vmatprep.subr.mxu0 0.0
    %1406 = vmatpush1.msra.mxu0 %v1272
    %1407 = vmatprep.subr.mxu0 0.0
    %1408 = vmatpush1.msra.mxu0 %v1273
    %1409 = vmatprep.subr.mxu0 0.0
    %1410 = vmatpush1.msra.mxu0 %v1274
    %1411 = vmatprep.subr.mxu0 0.0
    %1412 = vmatpush1.msra.mxu0 %v1275
    %1413 = vmatprep.subr.mxu0 0.0
    %1414 = vmatpush1.msra.mxu0 %v1276
    %1415 = vmatprep.subr.mxu0 0.0
    %1416 = vmatpush1.msra.mxu0 %v1277
    %1417 = vmatprep.subr.mxu0 0.0
    %1418 = vmatpush1.msra.mxu0 %v1278
    %1419 = vmatprep.subr.mxu0 0.0
    %1420 = vmatpush1.msra.mxu0 %v1279
    %1421 = vmatprep.mubr.f32.mxu0 %v1215
    %1422 = vmatmul.mubr.f32.gmra.mrb[0].mxu0 %v1214
    %v1423 = vpop.f32.mrb[0].mxu0
    %v1424 = vadd.f32 %v1354, %v1423
    %v1425 = vpop.f32.mrb[0].mxu0
    %1426 = vdwg.mxu0
    %1427 = vst [vmem:[#allocation10] sm:$0xff] %v1424
    // Predicated region
    $region46: #{tpu_custom_call.1} parent=1 // pred_check
      _
    $region47: #{tpu_custom_call.1} parent=1 // pred_check_branch
      %1429 = sbr.rel (0) target = $region49
    $region48: #{tpu_custom_call.1} parent=1 // pred_region
      %s1431 = ssub.s32 128, 128
      %1432 = vsyncadd [#allocation4], %s1431
      %s1434 = sshll.u32 [#allocation10], 4
      %s1435 = int_to_ptr.vmem [resolvable:$true] %s1434
      %1437 = dma.vmem_to_hbm [thread:$0]  %s1435, 128, %s7, [#allocation4]
    $region49: #{tpu_custom_call.1} parent=1 // pred_fallthru
      _
    // Predicated region
    $region50: #{tpu_custom_call.1} parent=1 // pred_check
      _
    $region51: #{tpu_custom_call.1} parent=1 // pred_check_branch
      %1439 = sbr.rel (0) target = $region53
    $region52: #{tpu_custom_call.1} parent=1 // pred_region
      %1440 = dma.done [#allocation4], 128
    $region53: #{tpu_custom_call.1} parent=1 // pred_fallthru
      _
    %1441 = vsyncpa [#allocation3], 1
    %1442 = vsyncpa [#allocation6], 1
    %1443 = vsyncpa [#allocation9], 1
    %1444 = vsyncpa [#allocation4], 1

</llo_original>
